<compile_context>
chip_gen: v5e
topology: v5e:2x2
jax: 0.10.0
libtpu: 0.0.40
codegen_flags: <defaults>
</compile_context>

<pallas_src>
import functools
import math

import jax
import jax.numpy as jnp
from jax.experimental import pallas as pl
from jax.experimental.pallas import tpu as pltpu


# ----------------------------------------------------------------------------
# Pallas kernel: one full EncoderBlockWithRPR for a single batch element.
# ----------------------------------------------------------------------------
def encoder_block_kernel(
    vl_ref,                                  # SMEM (B,) int32 (scalar prefetch)
    x_ref,                                   # (1, S, D) bf16
    wqkv_ref,                                # (D, 3D)   bf16
    wo_ref,                                  # (D, D)    bf16
    embk_ref, embv_ref,                      # (2c+1, DH) bf16 each
    ln1g_ref, ln1b_ref,                      # (1, D) f32
    w1_ref, b1_ref,                          # (D, F) bf16, (1, F) f32
    w2_ref, b2_ref,                          # (F, D) bf16, (1, D) f32
    ln2g_ref, ln2b_ref,                      # (1, D) f32
    out_ref,                                 # (1, S, D) bf16
    *,
    num_heads,
    head_dim,
):
    f32, bf16 = jnp.float32, jnp.bfloat16
    b = pl.program_id(0)
    x = x_ref[0]                             # (S, D) bf16
    S, D = x.shape
    H, DH = num_heads, head_dim
    R = embk_ref.shape[0]                    # 2 * clip + 1
    c = (R - 1) // 2

    # --- fused QKV projection (single MXU matmul, bf16 in / f32 acc) --------
    qkv = jnp.dot(x, wqkv_ref[...], preferred_element_type=f32)     # (S, 3D)
    inv_sqrt_d = 1.0 / math.sqrt(DH)
    q = qkv[:, 0 * D:1 * D] * inv_sqrt_d      # fold 1/sqrt(DH) into q
    k = qkv[:, 1 * D:2 * D]
    v = qkv[:, 2 * D:3 * D]

    def split_heads(t):                       # (S, D) f32 -> (H, S, DH) bf16
        return jnp.stack(
            [t[:, h * DH:(h + 1) * DH] for h in range(H)], axis=0
        ).astype(bf16)

    qh, kh, vh = split_heads(q), split_heads(k), split_heads(v)

    # --- content scores: head-batched MXU matmul ----------------------------
    # (H,S,DH) x (H,S,DH) contracting DH, batching H -> (H, S, S); already
    # carries the 1/sqrt(DH) factor via q.
    sc = jax.lax.dot_general(qh, kh, (((2,), (2,)), ((0,), (0,))),
                             preferred_element_type=f32)

    # --- RPR scores from the small (R, DH) table (MXU) ----------------------
    # rq[h,i,r] = sum_d q[h,i,d] * emb_k[r,d]   (also pre-scaled via q)
    rq = jax.lax.dot_general(qh.reshape(H * S, DH), embk_ref[...],
                             (((1,), (1,)), ((), ())),
                             preferred_element_type=f32).reshape(H, S, R)

    row = jax.lax.broadcasted_iota(jnp.int32, (S, S), 0)
    col = jax.lax.broadcasted_iota(jnp.int32, (S, S), 1)
    delta = col - row                         # j - i

    def rel_mask(rho):                        # clip(j-i, -c, c) + c == rho
        if rho == 0:
            return delta <= -c
        if rho == R - 1:
            return delta >= c
        return delta == rho - c

    # Scatter rq onto the (i, j) grid with a nested-select chain: the rho
    # masks partition the plane, so start from bucket R-1 as the default and
    # override with R-1 vsel passes; accumulate straight onto the scores.
    g = rq[:, :, R - 1:R]                     # (H, S, 1) default (delta >= c)
    for rho in range(R - 2, -1, -1):
        g = jnp.where(rel_mask(rho)[None, :, :], rq[:, :, rho:rho + 1], g)
    sc = sc + g                               # (H, S, S)

    # key-length mask (columns beyond valid_len get -1e6 before softmax)
    vl = vl_ref[b]
    sc = jnp.where((col < vl)[None, :, :], sc, -1000000.0)

    # --- stabilized softmax with DEFERRED normalization ----------------------
    mmax = jnp.max(sc, axis=-1, keepdims=True)
    p = jnp.exp(sc - mmax)                    # unnormalized weights, f32
    denom = jnp.sum(p, axis=-1, keepdims=True)                     # (H, S, 1)
    p_bf = p.astype(bf16)

    # --- content output on UNNORMALIZED weights (MXU, head-batched) ---------
    o1 = jax.lax.dot_general(p_bf, vh, (((2,), (1,)), ((0,), (0,))),
                             preferred_element_type=f32)           # (H, S, DH)

    # --- RPR output term: bucket unnormalized weight mass per relative
    #     distance, then one (H*S, R) @ (R, DH) MXU matmul against emb_v.
    #     The center bucket is recovered from sum_rho bucket[rho] == denom.
    #     (bucket sums stay f32 for accuracy; v5e has no bf16 VALU anyway.)
    if R == 1:
        wbkt = denom                                                # (H, S, 1)
    else:
        parts = [None] * R
        acc_others = None
        for rho in range(R):
            if rho == c:
                continue
            m = rel_mask(rho)
            part = jnp.sum(jnp.where(m[None, :, :], p, 0.0),
                           axis=-1, keepdims=True)                  # (H, S, 1)
            parts[rho] = part
            acc_others = part if acc_others is None else acc_others + part
        parts[c] = denom - acc_others
        wbkt = jnp.concatenate(parts, axis=-1)                      # (H, S, R)

    o2 = jax.lax.dot_general(wbkt.astype(bf16).reshape(H * S, R), embv_ref[...],
                             (((1,), (0,)), ((), ())),
                             preferred_element_type=f32).reshape(H, S, DH)

    # Deferred softmax normalization: exact reciprocal on (H,S,1) + one
    # multiply on (H,S,DH) instead of a full (H,S,S) pass.
    o = (o1 + o2) * (1.0 / denom)                                   # (H, S, DH)

    # concat heads -> (S, D), single output projection on the MXU
    o_cat = jnp.concatenate([o[h] for h in range(H)], axis=-1)      # (S, D)
    attn_out = jnp.dot(o_cat.astype(bf16), wo_ref[...],
                       preferred_element_type=f32)                  # (S, D)

    # --- Add & Norm 1 (f32 statistics) ---------------------------------------
    def layer_norm(val, gg, bb):
        mu = jnp.mean(val, axis=-1, keepdims=True)
        var = jnp.mean((val - mu) ** 2, axis=-1, keepdims=True)
        return (val - mu) * jax.lax.rsqrt(var + 1e-5) * gg + bb

    x32 = x.astype(f32)
    y = layer_norm(x32 + attn_out, ln1g_ref[...], ln1b_ref[...])    # (S, D)

    # --- Position-wise FFN ----------------------------------------------------
    # TODO(synk): on v6e/v7x the exp / FFN elementwise math could run in bf16
    # (bf16 EUP/VALU); kept f32 so the same kernel is also correct-fast on v5e.
    h1 = jnp.dot(y.astype(bf16), w1_ref[...],
                 preferred_element_type=f32) + b1_ref[...]
    h1 = jnp.maximum(h1, 0.0)
    z = jnp.dot(h1.astype(bf16), w2_ref[...],
                preferred_element_type=f32) + b2_ref[...]

    # --- Add & Norm 2 ---------------------------------------------------------
    out_ref[0] = layer_norm(y + z, ln2g_ref[...], ln2b_ref[...]).astype(bf16)


# ----------------------------------------------------------------------------
# BlockSpec helpers / pallas_call builder
# ----------------------------------------------------------------------------
def _weight_spec(block_shape, index_map, single_buffer=True):
    """Grid-invariant operand: request a single (non-double-buffered) VMEM
    buffer.  Falls back to a plain BlockSpec if pipeline_mode/Buffered is not
    available in this JAX version."""
    buffered = getattr(pl, "Buffered", None)
    if single_buffer and buffered is not None:
        try:
            return pl.BlockSpec(block_shape, index_map,
                                pipeline_mode=buffered(1))
        except (TypeError, ValueError):
            pass
    return pl.BlockSpec(block_shape, index_map)


def build_block_call(B, S, D, H, F, R, *, vmem_limit_mb=48,
                     single_buffer_weights=True):
    DH = D // H
    x_map = lambda b, vl: (b, 0, 0)
    w_map = lambda b, vl: (0, 0)
    wspec = functools.partial(_weight_spec, single_buffer=single_buffer_weights)

    grid_spec = pltpu.PrefetchScalarGridSpec(
        num_scalar_prefetch=1,
        grid=(B,),
        in_specs=[
            pl.BlockSpec((1, S, D), x_map),     # x (bf16, varies with b)
            wspec((D, 3 * D), w_map),           # W_qkv (bf16)
            wspec((D, D), w_map),               # W_o   (bf16)
            wspec((R, DH), w_map),              # emb_k (bf16)
            wspec((R, DH), w_map),              # emb_v (bf16)
            wspec((1, D), w_map),               # ln1 gamma
            wspec((1, D), w_map),               # ln1 beta
            wspec((D, F), w_map),               # W_1   (bf16)
            wspec((1, F), w_map),               # b_1
            wspec((F, D), w_map),               # W_2   (bf16)
            wspec((1, D), w_map),               # b_2
            wspec((1, D), w_map),               # ln2 gamma
            wspec((1, D), w_map),               # ln2 beta
        ],
        out_specs=pl.BlockSpec((1, S, D), x_map),
    )
    return pl.pallas_call(
        functools.partial(encoder_block_kernel, num_heads=H, head_dim=DH),
        out_shape=jax.ShapeDtypeStruct((B, S, D), jnp.bfloat16),
        grid_spec=grid_spec,
        compiler_params=pltpu.CompilerParams(
            dimension_semantics=("parallel",),
            # 48 MiB fits v7x's 64 MiB physical VMEM; on v5e/v6e (128 MiB) this
            # can be raised (e.g. ~96 MiB) to keep whole sequences resident at
            # larger S before q-tiling becomes necessary.
            vmem_limit_bytes=vmem_limit_mb * 1024 * 1024,
        ),
    )


# ----------------------------------------------------------------------------
# Parameters (deterministic synthetic init; mirrors nn.Module shapes).
# Matmul weights are bf16-rounded at init so the kernel (bf16 MXU operands)
# and the f32 reference use identical effective weights.
# ----------------------------------------------------------------------------
def init_params(key, D, F, H, clip_dist, N):
    DH = D // H
    bf_round = lambda a: a.astype(jnp.bfloat16).astype(jnp.float32)
    params = []
    for l in range(N):
        k = jax.random.fold_in(key, l)
        ks = jax.random.split(k, 8)

        def lin(kk, fan_in, fan_out):
            bound = 1.0 / math.sqrt(fan_in)
            return bf_round(jax.random.uniform(kk, (fan_in, fan_out),
                                               jnp.float32, -bound, bound))

        params.append(dict(
            wq=lin(ks[0], D, D), wk=lin(ks[1], D, D),
            wv=lin(ks[2], D, D), wo=lin(ks[3], D, D),
            emb_k=bf_round(0.1 * jax.random.normal(ks[4], (2 * clip_dist + 1, DH),
                                                   jnp.float32)),
            emb_v=bf_round(0.1 * jax.random.normal(ks[5], (2 * clip_dist + 1, DH),
                                                   jnp.float32)),
            ln1g=jnp.ones((1, D), jnp.float32),
            ln1b=jnp.zeros((1, D), jnp.float32),
            w1=lin(ks[6], D, F), b1=jnp.zeros((1, F), jnp.float32),
            w2=lin(ks[7], F, D), b2=jnp.zeros((1, D), jnp.float32),
            ln2g=jnp.ones((1, D), jnp.float32),
            ln2b=jnp.zeros((1, D), jnp.float32),
        ))
    return params


# ----------------------------------------------------------------------------
# Encoder forward: activations cross layers as bf16; external interface f32.
# ----------------------------------------------------------------------------
def encoder_with_rpr_forward(x, valid_lens, params, clip_dist, num_heads, *,
                             single_buffer_weights=True):
    B, S, D = x.shape
    F = params[0]["w1"].shape[1]
    R = 2 * clip_dist + 1
    block_call = build_block_call(B, S, D, num_heads, F, R,
                                  single_buffer_weights=single_buffer_weights)
    bf16 = jnp.bfloat16
    h = x.astype(bf16)
    for p in params:
        wqkv = jnp.concatenate([p["wq"], p["wk"], p["wv"]], axis=1).astype(bf16)
        h = block_call(valid_lens, h,
                       wqkv, p["wo"].astype(bf16),
                       p["emb_k"].astype(bf16), p["emb_v"].astype(bf16),
                       p["ln1g"], p["ln1b"],
                       p["w1"].astype(bf16), p["b1"],
                       p["w2"].astype(bf16), p["b2"],
                       p["ln2g"], p["ln2b"])
    return h.astype(jnp.float32)


# ----------------------------------------------------------------------------
# Pure-JAX reference (same math, f32 everywhere, no Pallas)
# ----------------------------------------------------------------------------
def ref_encoder(x, valid_lens, params, clip_dist, num_heads):
    B, S, D = x.shape
    H = num_heads
    DH = D // H
    dist = jnp.clip(jnp.arange(S)[None, :] - jnp.arange(S)[:, None],
                    -clip_dist, clip_dist) + clip_dist

    def layer_norm(v, g, b):
        mu = jnp.mean(v, axis=-1, keepdims=True)
        var = jnp.mean((v - mu) ** 2, axis=-1, keepdims=True)
        return (v - mu) / jnp.sqrt(var + 1e-5) * g + b

    for p in params:
        q = x @ p["wq"]
        k = x @ p["wk"]
        v = x @ p["wv"]
        qh = q.reshape(B, S, H, DH).transpose(0, 2, 1, 3)
        kh = k.reshape(B, S, H, DH).transpose(0, 2, 1, 3)
        vh = v.reshape(B, S, H, DH).transpose(0, 2, 1, 3)
        pk = p["emb_k"][dist]
        pv = p["emb_v"][dist]
        s1 = jnp.einsum("bhid,bhjd->bhij", qh, kh)
        s2 = jnp.einsum("bhid,ijd->bhij", qh, pk)
        sc = (s1 + s2) / math.sqrt(DH)
        keep = jnp.arange(S)[None, None, None, :] < valid_lens[:, None, None, None]
        sc = jnp.where(keep, sc, -1000000.0)
        attn = jax.nn.softmax(sc, axis=-1)
        o1 = jnp.einsum("bhij,bhjd->bhid", attn, vh)
        o2 = jnp.einsum("bhij,ijd->bhid", attn, pv)
        o = (o1 + o2).transpose(0, 2, 1, 3).reshape(B, S, D)
        y = layer_norm(x + o @ p["wo"], p["ln1g"], p["ln1b"])
        z = jnp.maximum(y @ p["w1"] + p["b1"], 0.0) @ p["w2"] + p["b2"]
        x = layer_norm(y + z, p["ln2g"], p["ln2b"])
    return x


if __name__ == "__main__":
    # NOTE: these shapes are for correctness only (D=32 -> 32/128 lanes, S=8 ->
    # one sublane tile).  Benchmark/tune with D a multiple of 128 and S a
    # multiple of 8 (ideally >= 128) — at lane-sparse shapes the kernel is
    # dominated by masked stores and fixed per-step overhead.
    B, S, D, F, H, CLIP, N = 2, 8, 32, 64, 4, 4, 2

    key = jax.random.PRNGKey(0)
    kx, kp = jax.random.split(key)
    x = jax.random.normal(kx, (B, S, D), dtype=jnp.float32)
    valid_lens = jnp.array([8, 5], dtype=jnp.int32)   # valid_len >= 1 assumed
    params = init_params(kp, D, F, H, CLIP, N)

    try:
        out = jax.block_until_ready(
            encoder_with_rpr_forward(x, valid_lens, params, CLIP, H))
    except Exception:
        # Compatibility fallback: identical kernel without the single-buffer
        # (pl.Buffered(1)) hint on grid-invariant weight BlockSpecs.
        out = jax.block_until_ready(
            encoder_with_rpr_forward(x, valid_lens, params, CLIP, H,
                                     single_buffer_weights=False))

    ref = jax.block_until_ready(ref_encoder(x, valid_lens, params, CLIP, H))

    import numpy as np
    assert out.shape == (B, S, D)
    np.testing.assert_allclose(np.asarray(out), np.asarray(ref),
                               rtol=2e-2, atol=2e-2)
    print("KERNEL_OK")
</pallas_src>

<mosaic_0001>
module attributes {stable_mosaic.version = 11 : i64} {
  func.func @encoder_block_kernel(%arg0: i32, %arg1: memref<2xi32, #tpu.memory_space<smem>>, %arg2: memref<1x8x32xbf16, #tpu.memory_space<vmem>>, %arg3: memref<32x96xbf16, #tpu.memory_space<vmem>>, %arg4: memref<32x32xbf16, #tpu.memory_space<vmem>>, %arg5: memref<9x8xbf16, #tpu.memory_space<vmem>>, %arg6: memref<9x8xbf16, #tpu.memory_space<vmem>>, %arg7: memref<1x32xf32, #tpu.memory_space<vmem>>, %arg8: memref<1x32xf32, #tpu.memory_space<vmem>>, %arg9: memref<32x64xbf16, #tpu.memory_space<vmem>>, %arg10: memref<1x64xf32, #tpu.memory_space<vmem>>, %arg11: memref<64x32xbf16, #tpu.memory_space<vmem>>, %arg12: memref<1x32xf32, #tpu.memory_space<vmem>>, %arg13: memref<1x32xf32, #tpu.memory_space<vmem>>, %arg14: memref<1x32xf32, #tpu.memory_space<vmem>>, %arg15: memref<1x8x32xbf16, #tpu.memory_space<vmem>>) attributes {dimension_semantics = [#tpu.dimension_semantics<parallel>], iteration_bounds = array<i64: 2>, scalar_prefetch = 1 : i64, scratch_operands = 0 : i64, tpu.core_type = #tpu.core_type<tc>, window_params = [{transform_indices = @transform_0, window_bounds = array<i64: 1, 8, 32>}, {pipeline_mode = #tpu.pipeline_mode<synchronous>, transform_indices = @transform_1, window_bounds = array<i64: 32, 96>}, {pipeline_mode = #tpu.pipeline_mode<synchronous>, transform_indices = @transform_2, window_bounds = array<i64: 32, 32>}, {pipeline_mode = #tpu.pipeline_mode<synchronous>, transform_indices = @transform_3, window_bounds = array<i64: 9, 8>}, {pipeline_mode = #tpu.pipeline_mode<synchronous>, transform_indices = @transform_4, window_bounds = array<i64: 9, 8>}, {pipeline_mode = #tpu.pipeline_mode<synchronous>, transform_indices = @transform_5, window_bounds = array<i64: 1, 32>}, {pipeline_mode = #tpu.pipeline_mode<synchronous>, transform_indices = @transform_6, window_bounds = array<i64: 1, 32>}, {pipeline_mode = #tpu.pipeline_mode<synchronous>, transform_indices = @transform_7, window_bounds = array<i64: 32, 64>}, {pipeline_mode = #tpu.pipeline_mode<synchronous>, transform_indices = @transform_8, window_bounds = array<i64: 1, 64>}, {pipeline_mode = #tpu.pipeline_mode<synchronous>, transform_indices = @transform_9, window_bounds = array<i64: 64, 32>}, {pipeline_mode = #tpu.pipeline_mode<synchronous>, transform_indices = @transform_10, window_bounds = array<i64: 1, 32>}, {pipeline_mode = #tpu.pipeline_mode<synchronous>, transform_indices = @transform_11, window_bounds = array<i64: 1, 32>}, {pipeline_mode = #tpu.pipeline_mode<synchronous>, transform_indices = @transform_12, window_bounds = array<i64: 1, 32>}, {transform_indices = @transform_13, window_bounds = array<i64: 1, 8, 32>}]} {
    %c0 = arith.constant 0 : index
    %c0_0 = arith.constant 0 : index
    %c0_1 = arith.constant 0 : index
    %0 = vector.load %arg2[%c0, %c0_0, %c0_1] : memref<1x8x32xbf16, #tpu.memory_space<vmem>>, vector<1x8x32xbf16>
    %1 = vector.shape_cast %0 : vector<1x8x32xbf16> to vector<8x32xbf16>
    %c0_2 = arith.constant 0 : index
    %c0_3 = arith.constant 0 : index
    %2 = vector.load %arg3[%c0_2, %c0_3] : memref<32x96xbf16, #tpu.memory_space<vmem>>, vector<32x96xbf16>
    %cst = arith.constant dense<0.000000e+00> : vector<8x96xf32>
    %3 = tpu.matmul %1, %2, %cst {dimension_numbers = #tpu.dot_dimension_numbers<[1], [0], [0], [1], [0, 0, 1, 1], [], []>} : vector<8x32xbf16>, vector<32x96xbf16>, vector<8x96xf32> -> vector<8x96xf32>
    %4 = vector.extract_strided_slice %3 {offsets = [0, 0], sizes = [8, 32], strides = [1, 1]} : vector<8x96xf32> to vector<8x32xf32>
    %cst_4 = arith.constant 0.353553385 : f32
    %5 = vector.broadcast %cst_4 : f32 to vector<8x32xf32>
    %6 = arith.mulf %4, %5 : vector<8x32xf32>
    %7 = vector.extract_strided_slice %3 {offsets = [0, 32], sizes = [8, 32], strides = [1, 1]} : vector<8x96xf32> to vector<8x32xf32>
    %8 = vector.extract_strided_slice %3 {offsets = [0, 64], sizes = [8, 32], strides = [1, 1]} : vector<8x96xf32> to vector<8x32xf32>
    %9 = vector.extract_strided_slice %6 {offsets = [0, 0], sizes = [8, 8], strides = [1, 1]} : vector<8x32xf32> to vector<8x8xf32>
    %10 = vector.extract_strided_slice %6 {offsets = [0, 8], sizes = [8, 8], strides = [1, 1]} : vector<8x32xf32> to vector<8x8xf32>
    %11 = vector.extract_strided_slice %6 {offsets = [0, 16], sizes = [8, 8], strides = [1, 1]} : vector<8x32xf32> to vector<8x8xf32>
    %12 = vector.extract_strided_slice %6 {offsets = [0, 24], sizes = [8, 8], strides = [1, 1]} : vector<8x32xf32> to vector<8x8xf32>
    %13 = vector.shape_cast %9 : vector<8x8xf32> to vector<1x8x8xf32>
    %14 = vector.shape_cast %10 : vector<8x8xf32> to vector<1x8x8xf32>
    %15 = vector.shape_cast %11 : vector<8x8xf32> to vector<1x8x8xf32>
    %16 = vector.shape_cast %12 : vector<8x8xf32> to vector<1x8x8xf32>
    %17 = tpu.concatenate %13, %14, %15, %16 in 0 : vector<1x8x8xf32>, vector<1x8x8xf32>, vector<1x8x8xf32>, vector<1x8x8xf32> -> vector<4x8x8xf32>
    %18 = arith.truncf %17 : vector<4x8x8xf32> to vector<4x8x8xbf16>
    %19 = vector.extract_strided_slice %7 {offsets = [0, 0], sizes = [8, 8], strides = [1, 1]} : vector<8x32xf32> to vector<8x8xf32>
    %20 = vector.extract_strided_slice %7 {offsets = [0, 8], sizes = [8, 8], strides = [1, 1]} : vector<8x32xf32> to vector<8x8xf32>
    %21 = vector.extract_strided_slice %7 {offsets = [0, 16], sizes = [8, 8], strides = [1, 1]} : vector<8x32xf32> to vector<8x8xf32>
    %22 = vector.extract_strided_slice %7 {offsets = [0, 24], sizes = [8, 8], strides = [1, 1]} : vector<8x32xf32> to vector<8x8xf32>
    %23 = vector.shape_cast %19 : vector<8x8xf32> to vector<1x8x8xf32>
    %24 = vector.shape_cast %20 : vector<8x8xf32> to vector<1x8x8xf32>
    %25 = vector.shape_cast %21 : vector<8x8xf32> to vector<1x8x8xf32>
    %26 = vector.shape_cast %22 : vector<8x8xf32> to vector<1x8x8xf32>
    %27 = tpu.concatenate %23, %24, %25, %26 in 0 : vector<1x8x8xf32>, vector<1x8x8xf32>, vector<1x8x8xf32>, vector<1x8x8xf32> -> vector<4x8x8xf32>
    %28 = arith.truncf %27 : vector<4x8x8xf32> to vector<4x8x8xbf16>
    %29 = vector.extract_strided_slice %8 {offsets = [0, 0], sizes = [8, 8], strides = [1, 1]} : vector<8x32xf32> to vector<8x8xf32>
    %30 = vector.extract_strided_slice %8 {offsets = [0, 8], sizes = [8, 8], strides = [1, 1]} : vector<8x32xf32> to vector<8x8xf32>
    %31 = vector.extract_strided_slice %8 {offsets = [0, 16], sizes = [8, 8], strides = [1, 1]} : vector<8x32xf32> to vector<8x8xf32>
    %32 = vector.extract_strided_slice %8 {offsets = [0, 24], sizes = [8, 8], strides = [1, 1]} : vector<8x32xf32> to vector<8x8xf32>
    %33 = vector.shape_cast %29 : vector<8x8xf32> to vector<1x8x8xf32>
    %34 = vector.shape_cast %30 : vector<8x8xf32> to vector<1x8x8xf32>
    %35 = vector.shape_cast %31 : vector<8x8xf32> to vector<1x8x8xf32>
    %36 = vector.shape_cast %32 : vector<8x8xf32> to vector<1x8x8xf32>
    %37 = tpu.concatenate %33, %34, %35, %36 in 0 : vector<1x8x8xf32>, vector<1x8x8xf32>, vector<1x8x8xf32>, vector<1x8x8xf32> -> vector<4x8x8xf32>
    %38 = arith.truncf %37 : vector<4x8x8xf32> to vector<4x8x8xbf16>
    %cst_5 = arith.constant dense<0.000000e+00> : vector<4x8x8xf32>
    %39 = tpu.matmul %18, %28, %cst_5 {dimension_numbers = #tpu.dot_dimension_numbers<[2], [2], [1], [1], [0, 0, 0, 1, 1, 1], [0], [0]>} : vector<4x8x8xbf16>, vector<4x8x8xbf16>, vector<4x8x8xf32> -> vector<4x8x8xf32>
    %40 = vector.shape_cast %18 : vector<4x8x8xbf16> to vector<32x8xbf16>
    %c0_6 = arith.constant 0 : index
    %c0_7 = arith.constant 0 : index
    %41 = vector.load %arg5[%c0_6, %c0_7] : memref<9x8xbf16, #tpu.memory_space<vmem>>, vector<9x8xbf16>
    %cst_8 = arith.constant dense<0.000000e+00> : vector<32x9xf32>
    %42 = tpu.matmul %40, %41, %cst_8 {dimension_numbers = #tpu.dot_dimension_numbers<[1], [1], [0], [0], [0, 0, 1, 0], [], []>} : vector<32x8xbf16>, vector<9x8xbf16>, vector<32x9xf32> -> vector<32x9xf32>
    %43 = vector.shape_cast %42 : vector<32x9xf32> to vector<4x8x9xf32>
    %44 = tpu.iota {dimensions = array<i32: 0>} : vector<8x8xi32>
    %45 = tpu.iota {dimensions = array<i32: 1>} : vector<8x8xi32>
    %46 = arith.subi %45, %44 : vector<8x8xi32>
    %47 = vector.extract_strided_slice %43 {offsets = [0, 0, 8], sizes = [4, 8, 1], strides = [1, 1, 1]} : vector<4x8x9xf32> to vector<4x8x1xf32>
    %c3_i32 = arith.constant 3 : i32
    %48 = vector.broadcast %c3_i32 : i32 to vector<8x8xi32>
    %49 = arith.cmpi eq, %46, %48 : vector<8x8xi32>
    %50 = vector.shape_cast %49 : vector<8x8xi1> to vector<1x8x8xi1>
    %51 = vector.extract_strided_slice %43 {offsets = [0, 0, 7], sizes = [4, 8, 1], strides = [1, 1, 1]} : vector<4x8x9xf32> to vector<4x8x1xf32>
    %52 = vector.shape_cast %50 : vector<1x8x8xi1> to vector<1x8x8xi1>
    %53 = vector.broadcast %52 : vector<1x8x8xi1> to vector<4x8x8xi1>
    %54 = vector.shape_cast %51 : vector<4x8x1xf32> to vector<4x8x1xf32>
    %55 = vector.broadcast %54 : vector<4x8x1xf32> to vector<4x8x8xf32>
    %56 = vector.shape_cast %47 : vector<4x8x1xf32> to vector<4x8x1xf32>
    %57 = vector.broadcast %56 : vector<4x8x1xf32> to vector<4x8x8xf32>
    %58 = arith.select %53, %55, %57 : vector<4x8x8xi1>, vector<4x8x8xf32>
    %c2_i32 = arith.constant 2 : i32
    %59 = vector.broadcast %c2_i32 : i32 to vector<8x8xi32>
    %60 = arith.cmpi eq, %46, %59 : vector<8x8xi32>
    %61 = vector.shape_cast %60 : vector<8x8xi1> to vector<1x8x8xi1>
    %62 = vector.extract_strided_slice %43 {offsets = [0, 0, 6], sizes = [4, 8, 1], strides = [1, 1, 1]} : vector<4x8x9xf32> to vector<4x8x1xf32>
    %63 = vector.shape_cast %61 : vector<1x8x8xi1> to vector<1x8x8xi1>
    %64 = vector.broadcast %63 : vector<1x8x8xi1> to vector<4x8x8xi1>
    %65 = vector.shape_cast %62 : vector<4x8x1xf32> to vector<4x8x1xf32>
    %66 = vector.broadcast %65 : vector<4x8x1xf32> to vector<4x8x8xf32>
    %67 = arith.select %64, %66, %58 : vector<4x8x8xi1>, vector<4x8x8xf32>
    %c1_i32 = arith.constant 1 : i32
    %68 = vector.broadcast %c1_i32 : i32 to vector<8x8xi32>
    %69 = arith.cmpi eq, %46, %68 : vector<8x8xi32>
    %70 = vector.shape_cast %69 : vector<8x8xi1> to vector<1x8x8xi1>
    %71 = vector.extract_strided_slice %43 {offsets = [0, 0, 5], sizes = [4, 8, 1], strides = [1, 1, 1]} : vector<4x8x9xf32> to vector<4x8x1xf32>
    %72 = vector.shape_cast %70 : vector<1x8x8xi1> to vector<1x8x8xi1>
    %73 = vector.broadcast %72 : vector<1x8x8xi1> to vector<4x8x8xi1>
    %74 = vector.shape_cast %71 : vector<4x8x1xf32> to vector<4x8x1xf32>
    %75 = vector.broadcast %74 : vector<4x8x1xf32> to vector<4x8x8xf32>
    %76 = arith.select %73, %75, %67 : vector<4x8x8xi1>, vector<4x8x8xf32>
    %c0_i32 = arith.constant 0 : i32
    %77 = vector.broadcast %c0_i32 : i32 to vector<8x8xi32>
    %78 = arith.cmpi eq, %46, %77 : vector<8x8xi32>
    %79 = vector.shape_cast %78 : vector<8x8xi1> to vector<1x8x8xi1>
    %80 = vector.extract_strided_slice %43 {offsets = [0, 0, 4], sizes = [4, 8, 1], strides = [1, 1, 1]} : vector<4x8x9xf32> to vector<4x8x1xf32>
    %81 = vector.shape_cast %79 : vector<1x8x8xi1> to vector<1x8x8xi1>
    %82 = vector.broadcast %81 : vector<1x8x8xi1> to vector<4x8x8xi1>
    %83 = vector.shape_cast %80 : vector<4x8x1xf32> to vector<4x8x1xf32>
    %84 = vector.broadcast %83 : vector<4x8x1xf32> to vector<4x8x8xf32>
    %85 = arith.select %82, %84, %76 : vector<4x8x8xi1>, vector<4x8x8xf32>
    %c-1_i32 = arith.constant -1 : i32
    %86 = vector.broadcast %c-1_i32 : i32 to vector<8x8xi32>
    %87 = arith.cmpi eq, %46, %86 : vector<8x8xi32>
    %88 = vector.shape_cast %87 : vector<8x8xi1> to vector<1x8x8xi1>
    %89 = vector.extract_strided_slice %43 {offsets = [0, 0, 3], sizes = [4, 8, 1], strides = [1, 1, 1]} : vector<4x8x9xf32> to vector<4x8x1xf32>
    %90 = vector.shape_cast %88 : vector<1x8x8xi1> to vector<1x8x8xi1>
    %91 = vector.broadcast %90 : vector<1x8x8xi1> to vector<4x8x8xi1>
    %92 = vector.shape_cast %89 : vector<4x8x1xf32> to vector<4x8x1xf32>
    %93 = vector.broadcast %92 : vector<4x8x1xf32> to vector<4x8x8xf32>
    %94 = arith.select %91, %93, %85 : vector<4x8x8xi1>, vector<4x8x8xf32>
    %c-2_i32 = arith.constant -2 : i32
    %95 = vector.broadcast %c-2_i32 : i32 to vector<8x8xi32>
    %96 = arith.cmpi eq, %46, %95 : vector<8x8xi32>
    %97 = vector.shape_cast %96 : vector<8x8xi1> to vector<1x8x8xi1>
    %98 = vector.extract_strided_slice %43 {offsets = [0, 0, 2], sizes = [4, 8, 1], strides = [1, 1, 1]} : vector<4x8x9xf32> to vector<4x8x1xf32>
    %99 = vector.shape_cast %97 : vector<1x8x8xi1> to vector<1x8x8xi1>
    %100 = vector.broadcast %99 : vector<1x8x8xi1> to vector<4x8x8xi1>
    %101 = vector.shape_cast %98 : vector<4x8x1xf32> to vector<4x8x1xf32>
    %102 = vector.broadcast %101 : vector<4x8x1xf32> to vector<4x8x8xf32>
    %103 = arith.select %100, %102, %94 : vector<4x8x8xi1>, vector<4x8x8xf32>
    %c-3_i32 = arith.constant -3 : i32
    %104 = vector.broadcast %c-3_i32 : i32 to vector<8x8xi32>
    %105 = arith.cmpi eq, %46, %104 : vector<8x8xi32>
    %106 = vector.shape_cast %105 : vector<8x8xi1> to vector<1x8x8xi1>
    %107 = vector.extract_strided_slice %43 {offsets = [0, 0, 1], sizes = [4, 8, 1], strides = [1, 1, 1]} : vector<4x8x9xf32> to vector<4x8x1xf32>
    %108 = vector.shape_cast %106 : vector<1x8x8xi1> to vector<1x8x8xi1>
    %109 = vector.broadcast %108 : vector<1x8x8xi1> to vector<4x8x8xi1>
    %110 = vector.shape_cast %107 : vector<4x8x1xf32> to vector<4x8x1xf32>
    %111 = vector.broadcast %110 : vector<4x8x1xf32> to vector<4x8x8xf32>
    %112 = arith.select %109, %111, %103 : vector<4x8x8xi1>, vector<4x8x8xf32>
    %c-4_i32 = arith.constant -4 : i32
    %113 = vector.broadcast %c-4_i32 : i32 to vector<8x8xi32>
    %114 = arith.cmpi sle, %46, %113 : vector<8x8xi32>
    %115 = vector.shape_cast %114 : vector<8x8xi1> to vector<1x8x8xi1>
    %116 = vector.extract_strided_slice %43 {offsets = [0, 0, 0], sizes = [4, 8, 1], strides = [1, 1, 1]} : vector<4x8x9xf32> to vector<4x8x1xf32>
    %117 = vector.shape_cast %115 : vector<1x8x8xi1> to vector<1x8x8xi1>
    %118 = vector.broadcast %117 : vector<1x8x8xi1> to vector<4x8x8xi1>
    %119 = vector.shape_cast %116 : vector<4x8x1xf32> to vector<4x8x1xf32>
    %120 = vector.broadcast %119 : vector<4x8x1xf32> to vector<4x8x8xf32>
    %121 = arith.select %118, %120, %112 : vector<4x8x8xi1>, vector<4x8x8xf32>
    %122 = arith.addf %39, %121 : vector<4x8x8xf32>
    %123 = arith.index_cast %arg0 : i32 to index
    %124 = memref.load %arg1[%123] : memref<2xi32, #tpu.memory_space<smem>>
    %125 = vector.broadcast %124 : i32 to vector<8x8xi32>
    %126 = arith.cmpi slt, %45, %125 : vector<8x8xi32>
    %127 = vector.shape_cast %126 : vector<8x8xi1> to vector<1x8x8xi1>
    %cst_9 = arith.constant -1.000000e+06 : f32
    %128 = vector.shape_cast %127 : vector<1x8x8xi1> to vector<1x8x8xi1>
    %129 = vector.broadcast %128 : vector<1x8x8xi1> to vector<4x8x8xi1>
    %130 = vector.broadcast %cst_9 : f32 to vector<4x8x8xf32>
    %131 = arith.select %129, %122, %130 : vector<4x8x8xi1>, vector<4x8x8xf32>
    %cst_10 = arith.constant dense<0xFF800000> : vector<4x8xf32>
    %132 = vector.multi_reduction <maximumf>, %131, %cst_10 [2] : vector<4x8x8xf32> to vector<4x8xf32>
    %133 = vector.shape_cast %132 : vector<4x8xf32> to vector<4x8x1xf32>
    %134 = vector.broadcast %133 : vector<4x8x1xf32> to vector<4x8x8xf32>
    %135 = arith.subf %131, %134 : vector<4x8x8xf32>
    %136 = math.exp %135 : vector<4x8x8xf32>
    %cst_11 = arith.constant dense<0.000000e+00> : vector<4x8xf32>
    %137 = vector.multi_reduction <add>, %136, %cst_11 [2] : vector<4x8x8xf32> to vector<4x8xf32>
    %138 = vector.shape_cast %137 : vector<4x8xf32> to vector<4x8x1xf32>
    %139 = arith.truncf %136 : vector<4x8x8xf32> to vector<4x8x8xbf16>
    %cst_12 = arith.constant dense<0.000000e+00> : vector<4x8x8xf32>
    %140 = tpu.matmul %139, %38, %cst_12 {dimension_numbers = #tpu.dot_dimension_numbers<[2], [1], [1], [2], [0, 0, 0, 1, 1, 2], [0], [0]>} : vector<4x8x8xbf16>, vector<4x8x8xbf16>, vector<4x8x8xf32> -> vector<4x8x8xf32>
    %c-4_i32_13 = arith.constant -4 : i32
    %141 = vector.broadcast %c-4_i32_13 : i32 to vector<8x8xi32>
    %142 = arith.cmpi sle, %46, %141 : vector<8x8xi32>
    %143 = vector.shape_cast %142 : vector<8x8xi1> to vector<1x8x8xi1>
    %cst_14 = arith.constant 0.000000e+00 : f32
    %144 = vector.shape_cast %143 : vector<1x8x8xi1> to vector<1x8x8xi1>
    %145 = vector.broadcast %144 : vector<1x8x8xi1> to vector<4x8x8xi1>
    %146 = vector.broadcast %cst_14 : f32 to vector<4x8x8xf32>
    %147 = arith.select %145, %136, %146 : vector<4x8x8xi1>, vector<4x8x8xf32>
    %cst_15 = arith.constant dense<0.000000e+00> : vector<4x8xf32>
    %148 = vector.multi_reduction <add>, %147, %cst_15 [2] : vector<4x8x8xf32> to vector<4x8xf32>
    %149 = vector.shape_cast %148 : vector<4x8xf32> to vector<4x8x1xf32>
    %c-3_i32_16 = arith.constant -3 : i32
    %150 = vector.broadcast %c-3_i32_16 : i32 to vector<8x8xi32>
    %151 = arith.cmpi eq, %46, %150 : vector<8x8xi32>
    %152 = vector.shape_cast %151 : vector<8x8xi1> to vector<1x8x8xi1>
    %cst_17 = arith.constant 0.000000e+00 : f32
    %153 = vector.shape_cast %152 : vector<1x8x8xi1> to vector<1x8x8xi1>
    %154 = vector.broadcast %153 : vector<1x8x8xi1> to vector<4x8x8xi1>
    %155 = vector.broadcast %cst_17 : f32 to vector<4x8x8xf32>
    %156 = arith.select %154, %136, %155 : vector<4x8x8xi1>, vector<4x8x8xf32>
    %cst_18 = arith.constant dense<0.000000e+00> : vector<4x8xf32>
    %157 = vector.multi_reduction <add>, %156, %cst_18 [2] : vector<4x8x8xf32> to vector<4x8xf32>
    %158 = vector.shape_cast %157 : vector<4x8xf32> to vector<4x8x1xf32>
    %159 = arith.addf %149, %158 : vector<4x8x1xf32>
    %c-2_i32_19 = arith.constant -2 : i32
    %160 = vector.broadcast %c-2_i32_19 : i32 to vector<8x8xi32>
    %161 = arith.cmpi eq, %46, %160 : vector<8x8xi32>
    %162 = vector.shape_cast %161 : vector<8x8xi1> to vector<1x8x8xi1>
    %cst_20 = arith.constant 0.000000e+00 : f32
    %163 = vector.shape_cast %162 : vector<1x8x8xi1> to vector<1x8x8xi1>
    %164 = vector.broadcast %163 : vector<1x8x8xi1> to vector<4x8x8xi1>
    %165 = vector.broadcast %cst_20 : f32 to vector<4x8x8xf32>
    %166 = arith.select %164, %136, %165 : vector<4x8x8xi1>, vector<4x8x8xf32>
    %cst_21 = arith.constant dense<0.000000e+00> : vector<4x8xf32>
    %167 = vector.multi_reduction <add>, %166, %cst_21 [2] : vector<4x8x8xf32> to vector<4x8xf32>
    %168 = vector.shape_cast %167 : vector<4x8xf32> to vector<4x8x1xf32>
    %169 = arith.addf %159, %168 : vector<4x8x1xf32>
    %c-1_i32_22 = arith.constant -1 : i32
    %170 = vector.broadcast %c-1_i32_22 : i32 to vector<8x8xi32>
    %171 = arith.cmpi eq, %46, %170 : vector<8x8xi32>
    %172 = vector.shape_cast %171 : vector<8x8xi1> to vector<1x8x8xi1>
    %cst_23 = arith.constant 0.000000e+00 : f32
    %173 = vector.shape_cast %172 : vector<1x8x8xi1> to vector<1x8x8xi1>
    %174 = vector.broadcast %173 : vector<1x8x8xi1> to vector<4x8x8xi1>
    %175 = vector.broadcast %cst_23 : f32 to vector<4x8x8xf32>
    %176 = arith.select %174, %136, %175 : vector<4x8x8xi1>, vector<4x8x8xf32>
    %cst_24 = arith.constant dense<0.000000e+00> : vector<4x8xf32>
    %177 = vector.multi_reduction <add>, %176, %cst_24 [2] : vector<4x8x8xf32> to vector<4x8xf32>
    %178 = vector.shape_cast %177 : vector<4x8xf32> to vector<4x8x1xf32>
    %179 = arith.addf %169, %178 : vector<4x8x1xf32>
    %c1_i32_25 = arith.constant 1 : i32
    %180 = vector.broadcast %c1_i32_25 : i32 to vector<8x8xi32>
    %181 = arith.cmpi eq, %46, %180 : vector<8x8xi32>
    %182 = vector.shape_cast %181 : vector<8x8xi1> to vector<1x8x8xi1>
    %cst_26 = arith.constant 0.000000e+00 : f32
    %183 = vector.shape_cast %182 : vector<1x8x8xi1> to vector<1x8x8xi1>
    %184 = vector.broadcast %183 : vector<1x8x8xi1> to vector<4x8x8xi1>
    %185 = vector.broadcast %cst_26 : f32 to vector<4x8x8xf32>
    %186 = arith.select %184, %136, %185 : vector<4x8x8xi1>, vector<4x8x8xf32>
    %cst_27 = arith.constant dense<0.000000e+00> : vector<4x8xf32>
    %187 = vector.multi_reduction <add>, %186, %cst_27 [2] : vector<4x8x8xf32> to vector<4x8xf32>
    %188 = vector.shape_cast %187 : vector<4x8xf32> to vector<4x8x1xf32>
    %189 = arith.addf %179, %188 : vector<4x8x1xf32>
    %c2_i32_28 = arith.constant 2 : i32
    %190 = vector.broadcast %c2_i32_28 : i32 to vector<8x8xi32>
    %191 = arith.cmpi eq, %46, %190 : vector<8x8xi32>
    %192 = vector.shape_cast %191 : vector<8x8xi1> to vector<1x8x8xi1>
    %cst_29 = arith.constant 0.000000e+00 : f32
    %193 = vector.shape_cast %192 : vector<1x8x8xi1> to vector<1x8x8xi1>
    %194 = vector.broadcast %193 : vector<1x8x8xi1> to vector<4x8x8xi1>
    %195 = vector.broadcast %cst_29 : f32 to vector<4x8x8xf32>
    %196 = arith.select %194, %136, %195 : vector<4x8x8xi1>, vector<4x8x8xf32>
    %cst_30 = arith.constant dense<0.000000e+00> : vector<4x8xf32>
    %197 = vector.multi_reduction <add>, %196, %cst_30 [2] : vector<4x8x8xf32> to vector<4x8xf32>
    %198 = vector.shape_cast %197 : vector<4x8xf32> to vector<4x8x1xf32>
    %199 = arith.addf %189, %198 : vector<4x8x1xf32>
    %c3_i32_31 = arith.constant 3 : i32
    %200 = vector.broadcast %c3_i32_31 : i32 to vector<8x8xi32>
    %201 = arith.cmpi eq, %46, %200 : vector<8x8xi32>
    %202 = vector.shape_cast %201 : vector<8x8xi1> to vector<1x8x8xi1>
    %cst_32 = arith.constant 0.000000e+00 : f32
    %203 = vector.shape_cast %202 : vector<1x8x8xi1> to vector<1x8x8xi1>
    %204 = vector.broadcast %203 : vector<1x8x8xi1> to vector<4x8x8xi1>
    %205 = vector.broadcast %cst_32 : f32 to vector<4x8x8xf32>
    %206 = arith.select %204, %136, %205 : vector<4x8x8xi1>, vector<4x8x8xf32>
    %cst_33 = arith.constant dense<0.000000e+00> : vector<4x8xf32>
    %207 = vector.multi_reduction <add>, %206, %cst_33 [2] : vector<4x8x8xf32> to vector<4x8xf32>
    %208 = vector.shape_cast %207 : vector<4x8xf32> to vector<4x8x1xf32>
    %209 = arith.addf %199, %208 : vector<4x8x1xf32>
    %c4_i32 = arith.constant 4 : i32
    %210 = vector.broadcast %c4_i32 : i32 to vector<8x8xi32>
    %211 = arith.cmpi sge, %46, %210 : vector<8x8xi32>
    %212 = vector.shape_cast %211 : vector<8x8xi1> to vector<1x8x8xi1>
    %cst_34 = arith.constant 0.000000e+00 : f32
    %213 = vector.shape_cast %212 : vector<1x8x8xi1> to vector<1x8x8xi1>
    %214 = vector.broadcast %213 : vector<1x8x8xi1> to vector<4x8x8xi1>
    %215 = vector.broadcast %cst_34 : f32 to vector<4x8x8xf32>
    %216 = arith.select %214, %136, %215 : vector<4x8x8xi1>, vector<4x8x8xf32>
    %cst_35 = arith.constant dense<0.000000e+00> : vector<4x8xf32>
    %217 = vector.multi_reduction <add>, %216, %cst_35 [2] : vector<4x8x8xf32> to vector<4x8xf32>
    %218 = vector.shape_cast %217 : vector<4x8xf32> to vector<4x8x1xf32>
    %219 = arith.addf %209, %218 : vector<4x8x1xf32>
    %220 = arith.subf %138, %219 : vector<4x8x1xf32>
    %221 = tpu.concatenate %149, %158, %168, %178, %220, %188, %198, %208, %218 in 2 : vector<4x8x1xf32>, vector<4x8x1xf32>, vector<4x8x1xf32>, vector<4x8x1xf32>, vector<4x8x1xf32>, vector<4x8x1xf32>, vector<4x8x1xf32>, vector<4x8x1xf32>, vector<4x8x1xf32> -> vector<4x8x9xf32>
    %222 = arith.truncf %221 : vector<4x8x9xf32> to vector<4x8x9xbf16>
    %223 = vector.shape_cast %222 : vector<4x8x9xbf16> to vector<32x9xbf16>
    %c0_36 = arith.constant 0 : index
    %c0_37 = arith.constant 0 : index
    %224 = vector.load %arg6[%c0_36, %c0_37] : memref<9x8xbf16, #tpu.memory_space<vmem>>, vector<9x8xbf16>
    %cst_38 = arith.constant dense<0.000000e+00> : vector<32x8xf32>
    %225 = tpu.matmul %223, %224, %cst_38 {dimension_numbers = #tpu.dot_dimension_numbers<[1], [0], [0], [1], [0, 0, 1, 1], [], []>} : vector<32x9xbf16>, vector<9x8xbf16>, vector<32x8xf32> -> vector<32x8xf32>
    %226 = vector.shape_cast %225 : vector<32x8xf32> to vector<4x8x8xf32>
    %227 = arith.addf %140, %226 : vector<4x8x8xf32>
    %cst_39 = arith.constant 1.000000e+00 : f32
    %228 = vector.broadcast %cst_39 : f32 to vector<4x8x1xf32>
    %229 = arith.divf %228, %138 : vector<4x8x1xf32>
    %230 = vector.broadcast %229 : vector<4x8x1xf32> to vector<4x8x8xf32>
    %231 = arith.mulf %227, %230 : vector<4x8x8xf32>
    %232 = vector.extract_strided_slice %231 {offsets = [0, 0, 0], sizes = [1, 8, 8], strides = [1, 1, 1]} : vector<4x8x8xf32> to vector<1x8x8xf32>
    %233 = vector.shape_cast %232 : vector<1x8x8xf32> to vector<8x8xf32>
    %234 = vector.extract_strided_slice %231 {offsets = [1, 0, 0], sizes = [1, 8, 8], strides = [1, 1, 1]} : vector<4x8x8xf32> to vector<1x8x8xf32>
    %235 = vector.shape_cast %234 : vector<1x8x8xf32> to vector<8x8xf32>
    %236 = vector.extract_strided_slice %231 {offsets = [2, 0, 0], sizes = [1, 8, 8], strides = [1, 1, 1]} : vector<4x8x8xf32> to vector<1x8x8xf32>
    %237 = vector.shape_cast %236 : vector<1x8x8xf32> to vector<8x8xf32>
    %238 = vector.extract_strided_slice %231 {offsets = [3, 0, 0], sizes = [1, 8, 8], strides = [1, 1, 1]} : vector<4x8x8xf32> to vector<1x8x8xf32>
    %239 = vector.shape_cast %238 : vector<1x8x8xf32> to vector<8x8xf32>
    %240 = tpu.concatenate %233, %235, %237, %239 in 1 : vector<8x8xf32>, vector<8x8xf32>, vector<8x8xf32>, vector<8x8xf32> -> vector<8x32xf32>
    %241 = arith.truncf %240 : vector<8x32xf32> to vector<8x32xbf16>
    %c0_40 = arith.constant 0 : index
    %c0_41 = arith.constant 0 : index
    %242 = vector.load %arg4[%c0_40, %c0_41] : memref<32x32xbf16, #tpu.memory_space<vmem>>, vector<32x32xbf16>
    %cst_42 = arith.constant dense<0.000000e+00> : vector<8x32xf32>
    %243 = tpu.matmul %241, %242, %cst_42 {dimension_numbers = #tpu.dot_dimension_numbers<[1], [0], [0], [1], [0, 0, 1, 1], [], []>} : vector<8x32xbf16>, vector<32x32xbf16>, vector<8x32xf32> -> vector<8x32xf32>
    %244 = arith.extf %1 : vector<8x32xbf16> to vector<8x32xf32>
    %245 = arith.addf %244, %243 : vector<8x32xf32>
    %c0_43 = arith.constant 0 : index
    %c0_44 = arith.constant 0 : index
    %246 = vector.load %arg7[%c0_43, %c0_44] : memref<1x32xf32, #tpu.memory_space<vmem>>, vector<1x32xf32>
    %c0_45 = arith.constant 0 : index
    %c0_46 = arith.constant 0 : index
    %247 = vector.load %arg8[%c0_45, %c0_46] : memref<1x32xf32, #tpu.memory_space<vmem>>, vector<1x32xf32>
    %cst_47 = arith.constant dense<0.000000e+00> : vector<8xf32>
    %248 = vector.multi_reduction <add>, %245, %cst_47 [1] : vector<8x32xf32> to vector<8xf32>
    %249 = vector.shape_cast %248 : vector<8xf32> to vector<8x1xf32>
    %cst_48 = arith.constant 3.200000e+01 : f32
    %250 = vector.broadcast %cst_48 : f32 to vector<8x1xf32>
    %251 = arith.divf %249, %250 : vector<8x1xf32>
    %252 = vector.broadcast %251 : vector<8x1xf32> to vector<8x32xf32>
    %253 = arith.subf %245, %252 : vector<8x32xf32>
    %254 = arith.mulf %253, %253 : vector<8x32xf32>
    %cst_49 = arith.constant dense<0.000000e+00> : vector<8xf32>
    %255 = vector.multi_reduction <add>, %254, %cst_49 [1] : vector<8x32xf32> to vector<8xf32>
    %256 = vector.shape_cast %255 : vector<8xf32> to vector<8x1xf32>
    %cst_50 = arith.constant 3.200000e+01 : f32
    %257 = vector.broadcast %cst_50 : f32 to vector<8x1xf32>
    %258 = arith.divf %256, %257 : vector<8x1xf32>
    %259 = vector.broadcast %251 : vector<8x1xf32> to vector<8x32xf32>
    %260 = arith.subf %245, %259 : vector<8x32xf32>
    %cst_51 = arith.constant 9.99999974E-6 : f32
    %261 = vector.broadcast %cst_51 : f32 to vector<8x1xf32>
    %262 = arith.addf %258, %261 : vector<8x1xf32>
    %263 = math.rsqrt %262 : vector<8x1xf32>
    %264 = vector.broadcast %263 : vector<8x1xf32> to vector<8x32xf32>
    %265 = arith.mulf %260, %264 : vector<8x32xf32>
    %266 = vector.broadcast %246 : vector<1x32xf32> to vector<8x32xf32>
    %267 = arith.mulf %265, %266 : vector<8x32xf32>
    %268 = vector.broadcast %247 : vector<1x32xf32> to vector<8x32xf32>
    %269 = arith.addf %267, %268 : vector<8x32xf32>
    %270 = arith.truncf %269 : vector<8x32xf32> to vector<8x32xbf16>
    %c0_52 = arith.constant 0 : index
    %c0_53 = arith.constant 0 : index
    %271 = vector.load %arg9[%c0_52, %c0_53] : memref<32x64xbf16, #tpu.memory_space<vmem>>, vector<32x64xbf16>
    %cst_54 = arith.constant dense<0.000000e+00> : vector<8x64xf32>
    %272 = tpu.matmul %270, %271, %cst_54 {dimension_numbers = #tpu.dot_dimension_numbers<[1], [0], [0], [1], [0, 0, 1, 1], [], []>} : vector<8x32xbf16>, vector<32x64xbf16>, vector<8x64xf32> -> vector<8x64xf32>
    %c0_55 = arith.constant 0 : index
    %c0_56 = arith.constant 0 : index
    %273 = vector.load %arg10[%c0_55, %c0_56] : memref<1x64xf32, #tpu.memory_space<vmem>>, vector<1x64xf32>
    %274 = vector.broadcast %273 : vector<1x64xf32> to vector<8x64xf32>
    %275 = arith.addf %272, %274 : vector<8x64xf32>
    %cst_57 = arith.constant 0.000000e+00 : f32
    %276 = vector.broadcast %cst_57 : f32 to vector<8x64xf32>
    %277 = arith.maximumf %275, %276 : vector<8x64xf32>
    %278 = arith.truncf %277 : vector<8x64xf32> to vector<8x64xbf16>
    %c0_58 = arith.constant 0 : index
    %c0_59 = arith.constant 0 : index
    %279 = vector.load %arg11[%c0_58, %c0_59] : memref<64x32xbf16, #tpu.memory_space<vmem>>, vector<64x32xbf16>
    %cst_60 = arith.constant dense<0.000000e+00> : vector<8x32xf32>
    %280 = tpu.matmul %278, %279, %cst_60 {dimension_numbers = #tpu.dot_dimension_numbers<[1], [0], [0], [1], [0, 0, 1, 1], [], []>} : vector<8x64xbf16>, vector<64x32xbf16>, vector<8x32xf32> -> vector<8x32xf32>
    %c0_61 = arith.constant 0 : index
    %c0_62 = arith.constant 0 : index
    %281 = vector.load %arg12[%c0_61, %c0_62] : memref<1x32xf32, #tpu.memory_space<vmem>>, vector<1x32xf32>
    %282 = vector.broadcast %281 : vector<1x32xf32> to vector<8x32xf32>
    %283 = arith.addf %280, %282 : vector<8x32xf32>
    %284 = arith.addf %269, %283 : vector<8x32xf32>
    %c0_63 = arith.constant 0 : index
    %c0_64 = arith.constant 0 : index
    %285 = vector.load %arg13[%c0_63, %c0_64] : memref<1x32xf32, #tpu.memory_space<vmem>>, vector<1x32xf32>
    %c0_65 = arith.constant 0 : index
    %c0_66 = arith.constant 0 : index
    %286 = vector.load %arg14[%c0_65, %c0_66] : memref<1x32xf32, #tpu.memory_space<vmem>>, vector<1x32xf32>
    %cst_67 = arith.constant dense<0.000000e+00> : vector<8xf32>
    %287 = vector.multi_reduction <add>, %284, %cst_67 [1] : vector<8x32xf32> to vector<8xf32>
    %288 = vector.shape_cast %287 : vector<8xf32> to vector<8x1xf32>
    %cst_68 = arith.constant 3.200000e+01 : f32
    %289 = vector.broadcast %cst_68 : f32 to vector<8x1xf32>
    %290 = arith.divf %288, %289 : vector<8x1xf32>
    %291 = vector.broadcast %290 : vector<8x1xf32> to vector<8x32xf32>
    %292 = arith.subf %284, %291 : vector<8x32xf32>
    %293 = arith.mulf %292, %292 : vector<8x32xf32>
    %cst_69 = arith.constant dense<0.000000e+00> : vector<8xf32>
    %294 = vector.multi_reduction <add>, %293, %cst_69 [1] : vector<8x32xf32> to vector<8xf32>
    %295 = vector.shape_cast %294 : vector<8xf32> to vector<8x1xf32>
    %cst_70 = arith.constant 3.200000e+01 : f32
    %296 = vector.broadcast %cst_70 : f32 to vector<8x1xf32>
    %297 = arith.divf %295, %296 : vector<8x1xf32>
    %298 = vector.broadcast %290 : vector<8x1xf32> to vector<8x32xf32>
    %299 = arith.subf %284, %298 : vector<8x32xf32>
    %cst_71 = arith.constant 9.99999974E-6 : f32
    %300 = vector.broadcast %cst_71 : f32 to vector<8x1xf32>
    %301 = arith.addf %297, %300 : vector<8x1xf32>
    %302 = math.rsqrt %301 : vector<8x1xf32>
    %303 = vector.broadcast %302 : vector<8x1xf32> to vector<8x32xf32>
    %304 = arith.mulf %299, %303 : vector<8x32xf32>
    %305 = vector.broadcast %285 : vector<1x32xf32> to vector<8x32xf32>
    %306 = arith.mulf %304, %305 : vector<8x32xf32>
    %307 = vector.broadcast %286 : vector<1x32xf32> to vector<8x32xf32>
    %308 = arith.addf %306, %307 : vector<8x32xf32>
    %309 = arith.truncf %308 : vector<8x32xf32> to vector<8x32xbf16>
    %c0_72 = arith.constant 0 : index
    %c0_73 = arith.constant 0 : index
    %c0_74 = arith.constant 0 : index
    %310 = vector.load %arg15[%c0_72, %c0_73, %c0_74] : memref<1x8x32xbf16, #tpu.memory_space<vmem>>, vector<1x8x32xbf16>
    %311 = vector.shape_cast %310 : vector<1x8x32xbf16> to vector<8x32xbf16>
    %312 = vector.shape_cast %309 : vector<8x32xbf16> to vector<1x8x32xbf16>
    tpu.vector_store %arg15[%c0_72, %c0_73, %c0_74], %312 {strides = array<i32>} : memref<1x8x32xbf16, #tpu.memory_space<vmem>>, vector<1x8x32xbf16>,
    return
  }
  func.func @transform_0(%arg0: i32, %arg1: memref<2xi32, #tpu.memory_space<smem>>) -> (i32, i32, i32) {
    %c0_i32 = arith.constant 0 : i32
    %c0_i32_0 = arith.constant 0 : i32
    %c0_i32_1 = arith.constant 0 : i32
    return %arg0, %c0_i32, %c0_i32_0 : i32, i32, i32
  }
  func.func @transform_1(%arg0: i32, %arg1: memref<2xi32, #tpu.memory_space<smem>>) -> (i32, i32) {
    %c0_i32 = arith.constant 0 : i32
    %c0_i32_0 = arith.constant 0 : i32
    %c0_i32_1 = arith.constant 0 : i32
    return %c0_i32, %c0_i32_0 : i32, i32
  }
  func.func @transform_2(%arg0: i32, %arg1: memref<2xi32, #tpu.memory_space<smem>>) -> (i32, i32) {
    %c0_i32 = arith.constant 0 : i32
    %c0_i32_0 = arith.constant 0 : i32
    %c0_i32_1 = arith.constant 0 : i32
    return %c0_i32, %c0_i32_0 : i32, i32
  }
  func.func @transform_3(%arg0: i32, %arg1: memref<2xi32, #tpu.memory_space<smem>>) -> (i32, i32) {
    %c0_i32 = arith.constant 0 : i32
    %c0_i32_0 = arith.constant 0 : i32
    %c0_i32_1 = arith.constant 0 : i32
    return %c0_i32, %c0_i32_0 : i32, i32
  }
  func.func @transform_4(%arg0: i32, %arg1: memref<2xi32, #tpu.memory_space<smem>>) -> (i32, i32) {
    %c0_i32 = arith.constant 0 : i32
    %c0_i32_0 = arith.constant 0 : i32
    %c0_i32_1 = arith.constant 0 : i32
    return %c0_i32, %c0_i32_0 : i32, i32
  }
  func.func @transform_5(%arg0: i32, %arg1: memref<2xi32, #tpu.memory_space<smem>>) -> (i32, i32) {
    %c0_i32 = arith.constant 0 : i32
    %c0_i32_0 = arith.constant 0 : i32
    %c0_i32_1 = arith.constant 0 : i32
    return %c0_i32, %c0_i32_0 : i32, i32
  }
  func.func @transform_6(%arg0: i32, %arg1: memref<2xi32, #tpu.memory_space<smem>>) -> (i32, i32) {
    %c0_i32 = arith.constant 0 : i32
    %c0_i32_0 = arith.constant 0 : i32
    %c0_i32_1 = arith.constant 0 : i32
    return %c0_i32, %c0_i32_0 : i32, i32
  }
  func.func @transform_7(%arg0: i32, %arg1: memref<2xi32, #tpu.memory_space<smem>>) -> (i32, i32) {
    %c0_i32 = arith.constant 0 : i32
    %c0_i32_0 = arith.constant 0 : i32
    %c0_i32_1 = arith.constant 0 : i32
    return %c0_i32, %c0_i32_0 : i32, i32
  }
  func.func @transform_8(%arg0: i32, %arg1: memref<2xi32, #tpu.memory_space<smem>>) -> (i32, i32) {
    %c0_i32 = arith.constant 0 : i32
    %c0_i32_0 = arith.constant 0 : i32
    %c0_i32_1 = arith.constant 0 : i32
    return %c0_i32, %c0_i32_0 : i32, i32
  }
  func.func @transform_9(%arg0: i32, %arg1: memref<2xi32, #tpu.memory_space<smem>>) -> (i32, i32) {
    %c0_i32 = arith.constant 0 : i32
    %c0_i32_0 = arith.constant 0 : i32
    %c0_i32_1 = arith.constant 0 : i32
    return %c0_i32, %c0_i32_0 : i32, i32
  }
  func.func @transform_10(%arg0: i32, %arg1: memref<2xi32, #tpu.memory_space<smem>>) -> (i32, i32) {
    %c0_i32 = arith.constant 0 : i32
    %c0_i32_0 = arith.constant 0 : i32
    %c0_i32_1 = arith.constant 0 : i32
    return %c0_i32, %c0_i32_0 : i32, i32
  }
  func.func @transform_11(%arg0: i32, %arg1: memref<2xi32, #tpu.memory_space<smem>>) -> (i32, i32) {
    %c0_i32 = arith.constant 0 : i32
    %c0_i32_0 = arith.constant 0 : i32
    %c0_i32_1 = arith.constant 0 : i32
    return %c0_i32, %c0_i32_0 : i32, i32
  }
  func.func @transform_12(%arg0: i32, %arg1: memref<2xi32, #tpu.memory_space<smem>>) -> (i32, i32) {
    %c0_i32 = arith.constant 0 : i32
    %c0_i32_0 = arith.constant 0 : i32
    %c0_i32_1 = arith.constant 0 : i32
    return %c0_i32, %c0_i32_0 : i32, i32
  }
  func.func @transform_13(%arg0: i32, %arg1: memref<2xi32, #tpu.memory_space<smem>>) -> (i32, i32, i32) {
    %c0_i32 = arith.constant 0 : i32
    %c0_i32_0 = arith.constant 0 : i32
    %c0_i32_1 = arith.constant 0 : i32
    return %arg0, %c0_i32, %c0_i32_0 : i32, i32, i32
  }
}

module attributes {stable_mosaic.version = 11 : i64} {
  func.func @encoder_block_kernel(%arg0: i32, %arg1: memref<2xi32, #tpu.memory_space<smem>>, %arg2: memref<1x8x32xbf16, #tpu.memory_space<vmem>>, %arg3: memref<32x96xbf16, #tpu.memory_space<vmem>>, %arg4: memref<32x32xbf16, #tpu.memory_space<vmem>>, %arg5: memref<9x8xbf16, #tpu.memory_space<vmem>>, %arg6: memref<9x8xbf16, #tpu.memory_space<vmem>>, %arg7: memref<1x32xf32, #tpu.memory_space<vmem>>, %arg8: memref<1x32xf32, #tpu.memory_space<vmem>>, %arg9: memref<32x64xbf16, #tpu.memory_space<vmem>>, %arg10: memref<1x64xf32, #tpu.memory_space<vmem>>, %arg11: memref<64x32xbf16, #tpu.memory_space<vmem>>, %arg12: memref<1x32xf32, #tpu.memory_space<vmem>>, %arg13: memref<1x32xf32, #tpu.memory_space<vmem>>, %arg14: memref<1x32xf32, #tpu.memory_space<vmem>>, %arg15: memref<1x8x32xbf16, #tpu.memory_space<vmem>>) attributes {dimension_semantics = [#tpu.dimension_semantics<parallel>], iteration_bounds = array<i64: 2>, scalar_prefetch = 1 : i64, scratch_operands = 0 : i64, tpu.core_type = #tpu.core_type<tc>, window_params = [{transform_indices = @transform_0, window_bounds = array<i64: 1, 8, 32>}, {pipeline_mode = #tpu.pipeline_mode<synchronous>, transform_indices = @transform_1, window_bounds = array<i64: 32, 96>}, {pipeline_mode = #tpu.pipeline_mode<synchronous>, transform_indices = @transform_2, window_bounds = array<i64: 32, 32>}, {pipeline_mode = #tpu.pipeline_mode<synchronous>, transform_indices = @transform_3, window_bounds = array<i64: 9, 8>}, {pipeline_mode = #tpu.pipeline_mode<synchronous>, transform_indices = @transform_4, window_bounds = array<i64: 9, 8>}, {pipeline_mode = #tpu.pipeline_mode<synchronous>, transform_indices = @transform_5, window_bounds = array<i64: 1, 32>}, {pipeline_mode = #tpu.pipeline_mode<synchronous>, transform_indices = @transform_6, window_bounds = array<i64: 1, 32>}, {pipeline_mode = #tpu.pipeline_mode<synchronous>, transform_indices = @transform_7, window_bounds = array<i64: 32, 64>}, {pipeline_mode = #tpu.pipeline_mode<synchronous>, transform_indices = @transform_8, window_bounds = array<i64: 1, 64>}, {pipeline_mode = #tpu.pipeline_mode<synchronous>, transform_indices = @transform_9, window_bounds = array<i64: 64, 32>}, {pipeline_mode = #tpu.pipeline_mode<synchronous>, transform_indices = @transform_10, window_bounds = array<i64: 1, 32>}, {pipeline_mode = #tpu.pipeline_mode<synchronous>, transform_indices = @transform_11, window_bounds = array<i64: 1, 32>}, {pipeline_mode = #tpu.pipeline_mode<synchronous>, transform_indices = @transform_12, window_bounds = array<i64: 1, 32>}, {transform_indices = @transform_13, window_bounds = array<i64: 1, 8, 32>}]} {
    %c0 = arith.constant 0 : index
    %c0_0 = arith.constant 0 : index
    %c0_1 = arith.constant 0 : index
    %0 = vector.load %arg2[%c0, %c0_0, %c0_1] : memref<1x8x32xbf16, #tpu.memory_space<vmem>>, vector<1x8x32xbf16>
    %1 = vector.shape_cast %0 : vector<1x8x32xbf16> to vector<8x32xbf16>
    %c0_2 = arith.constant 0 : index
    %c0_3 = arith.constant 0 : index
    %2 = vector.load %arg3[%c0_2, %c0_3] : memref<32x96xbf16, #tpu.memory_space<vmem>>, vector<32x96xbf16>
    %cst = arith.constant dense<0.000000e+00> : vector<8x96xf32>
    %3 = tpu.matmul %1, %2, %cst {dimension_numbers = #tpu.dot_dimension_numbers<[1], [0], [0], [1], [0, 0, 1, 1], [], []>} : vector<8x32xbf16>, vector<32x96xbf16>, vector<8x96xf32> -> vector<8x96xf32>
    %4 = vector.extract_strided_slice %3 {offsets = [0, 0], sizes = [8, 32], strides = [1, 1]} : vector<8x96xf32> to vector<8x32xf32>
    %cst_4 = arith.constant 0.353553385 : f32
    %5 = vector.broadcast %cst_4 : f32 to vector<8x32xf32>
    %6 = arith.mulf %4, %5 : vector<8x32xf32>
    %7 = vector.extract_strided_slice %3 {offsets = [0, 32], sizes = [8, 32], strides = [1, 1]} : vector<8x96xf32> to vector<8x32xf32>
    %8 = vector.extract_strided_slice %3 {offsets = [0, 64], sizes = [8, 32], strides = [1, 1]} : vector<8x96xf32> to vector<8x32xf32>
    %9 = vector.extract_strided_slice %6 {offsets = [0, 0], sizes = [8, 8], strides = [1, 1]} : vector<8x32xf32> to vector<8x8xf32>
    %10 = vector.extract_strided_slice %6 {offsets = [0, 8], sizes = [8, 8], strides = [1, 1]} : vector<8x32xf32> to vector<8x8xf32>
    %11 = vector.extract_strided_slice %6 {offsets = [0, 16], sizes = [8, 8], strides = [1, 1]} : vector<8x32xf32> to vector<8x8xf32>
    %12 = vector.extract_strided_slice %6 {offsets = [0, 24], sizes = [8, 8], strides = [1, 1]} : vector<8x32xf32> to vector<8x8xf32>
    %13 = vector.shape_cast %9 : vector<8x8xf32> to vector<1x8x8xf32>
    %14 = vector.shape_cast %10 : vector<8x8xf32> to vector<1x8x8xf32>
    %15 = vector.shape_cast %11 : vector<8x8xf32> to vector<1x8x8xf32>
    %16 = vector.shape_cast %12 : vector<8x8xf32> to vector<1x8x8xf32>
    %17 = tpu.concatenate %13, %14, %15, %16 in 0 : vector<1x8x8xf32>, vector<1x8x8xf32>, vector<1x8x8xf32>, vector<1x8x8xf32> -> vector<4x8x8xf32>
    %18 = arith.truncf %17 : vector<4x8x8xf32> to vector<4x8x8xbf16>
    %19 = vector.extract_strided_slice %7 {offsets = [0, 0], sizes = [8, 8], strides = [1, 1]} : vector<8x32xf32> to vector<8x8xf32>
    %20 = vector.extract_strided_slice %7 {offsets = [0, 8], sizes = [8, 8], strides = [1, 1]} : vector<8x32xf32> to vector<8x8xf32>
    %21 = vector.extract_strided_slice %7 {offsets = [0, 16], sizes = [8, 8], strides = [1, 1]} : vector<8x32xf32> to vector<8x8xf32>
    %22 = vector.extract_strided_slice %7 {offsets = [0, 24], sizes = [8, 8], strides = [1, 1]} : vector<8x32xf32> to vector<8x8xf32>
    %23 = vector.shape_cast %19 : vector<8x8xf32> to vector<1x8x8xf32>
    %24 = vector.shape_cast %20 : vector<8x8xf32> to vector<1x8x8xf32>
    %25 = vector.shape_cast %21 : vector<8x8xf32> to vector<1x8x8xf32>
    %26 = vector.shape_cast %22 : vector<8x8xf32> to vector<1x8x8xf32>
    %27 = tpu.concatenate %23, %24, %25, %26 in 0 : vector<1x8x8xf32>, vector<1x8x8xf32>, vector<1x8x8xf32>, vector<1x8x8xf32> -> vector<4x8x8xf32>
    %28 = arith.truncf %27 : vector<4x8x8xf32> to vector<4x8x8xbf16>
    %29 = vector.extract_strided_slice %8 {offsets = [0, 0], sizes = [8, 8], strides = [1, 1]} : vector<8x32xf32> to vector<8x8xf32>
    %30 = vector.extract_strided_slice %8 {offsets = [0, 8], sizes = [8, 8], strides = [1, 1]} : vector<8x32xf32> to vector<8x8xf32>
    %31 = vector.extract_strided_slice %8 {offsets = [0, 16], sizes = [8, 8], strides = [1, 1]} : vector<8x32xf32> to vector<8x8xf32>
    %32 = vector.extract_strided_slice %8 {offsets = [0, 24], sizes = [8, 8], strides = [1, 1]} : vector<8x32xf32> to vector<8x8xf32>
    %33 = vector.shape_cast %29 : vector<8x8xf32> to vector<1x8x8xf32>
    %34 = vector.shape_cast %30 : vector<8x8xf32> to vector<1x8x8xf32>
    %35 = vector.shape_cast %31 : vector<8x8xf32> to vector<1x8x8xf32>
    %36 = vector.shape_cast %32 : vector<8x8xf32> to vector<1x8x8xf32>
    %37 = tpu.concatenate %33, %34, %35, %36 in 0 : vector<1x8x8xf32>, vector<1x8x8xf32>, vector<1x8x8xf32>, vector<1x8x8xf32> -> vector<4x8x8xf32>
    %38 = arith.truncf %37 : vector<4x8x8xf32> to vector<4x8x8xbf16>
    %cst_5 = arith.constant dense<0.000000e+00> : vector<4x8x8xf32>
    %39 = tpu.matmul %18, %28, %cst_5 {dimension_numbers = #tpu.dot_dimension_numbers<[2], [2], [1], [1], [0, 0, 0, 1, 1, 1], [0], [0]>} : vector<4x8x8xbf16>, vector<4x8x8xbf16>, vector<4x8x8xf32> -> vector<4x8x8xf32>
    %40 = vector.shape_cast %18 : vector<4x8x8xbf16> to vector<32x8xbf16>
    %c0_6 = arith.constant 0 : index
    %c0_7 = arith.constant 0 : index
    %41 = vector.load %arg5[%c0_6, %c0_7] : memref<9x8xbf16, #tpu.memory_space<vmem>>, vector<9x8xbf16>
    %cst_8 = arith.constant dense<0.000000e+00> : vector<32x9xf32>
    %42 = tpu.matmul %40, %41, %cst_8 {dimension_numbers = #tpu.dot_dimension_numbers<[1], [1], [0], [0], [0, 0, 1, 0], [], []>} : vector<32x8xbf16>, vector<9x8xbf16>, vector<32x9xf32> -> vector<32x9xf32>
    %43 = vector.shape_cast %42 : vector<32x9xf32> to vector<4x8x9xf32>
    %44 = tpu.iota {dimensions = array<i32: 0>} : vector<8x8xi32>
    %45 = tpu.iota {dimensions = array<i32: 1>} : vector<8x8xi32>
    %46 = arith.subi %45, %44 : vector<8x8xi32>
    %47 = vector.extract_strided_slice %43 {offsets = [0, 0, 8], sizes = [4, 8, 1], strides = [1, 1, 1]} : vector<4x8x9xf32> to vector<4x8x1xf32>
    %c3_i32 = arith.constant 3 : i32
    %48 = vector.broadcast %c3_i32 : i32 to vector<8x8xi32>
    %49 = arith.cmpi eq, %46, %48 : vector<8x8xi32>
    %50 = vector.shape_cast %49 : vector<8x8xi1> to vector<1x8x8xi1>
    %51 = vector.extract_strided_slice %43 {offsets = [0, 0, 7], sizes = [4, 8, 1], strides = [1, 1, 1]} : vector<4x8x9xf32> to vector<4x8x1xf32>
    %52 = vector.shape_cast %50 : vector<1x8x8xi1> to vector<1x8x8xi1>
    %53 = vector.broadcast %52 : vector<1x8x8xi1> to vector<4x8x8xi1>
    %54 = vector.shape_cast %51 : vector<4x8x1xf32> to vector<4x8x1xf32>
    %55 = vector.broadcast %54 : vector<4x8x1xf32> to vector<4x8x8xf32>
    %56 = vector.shape_cast %47 : vector<4x8x1xf32> to vector<4x8x1xf32>
    %57 = vector.broadcast %56 : vector<4x8x1xf32> to vector<4x8x8xf32>
    %58 = arith.select %53, %55, %57 : vector<4x8x8xi1>, vector<4x8x8xf32>
    %c2_i32 = arith.constant 2 : i32
    %59 = vector.broadcast %c2_i32 : i32 to vector<8x8xi32>
    %60 = arith.cmpi eq, %46, %59 : vector<8x8xi32>
    %61 = vector.shape_cast %60 : vector<8x8xi1> to vector<1x8x8xi1>
    %62 = vector.extract_strided_slice %43 {offsets = [0, 0, 6], sizes = [4, 8, 1], strides = [1, 1, 1]} : vector<4x8x9xf32> to vector<4x8x1xf32>
    %63 = vector.shape_cast %61 : vector<1x8x8xi1> to vector<1x8x8xi1>
    %64 = vector.broadcast %63 : vector<1x8x8xi1> to vector<4x8x8xi1>
    %65 = vector.shape_cast %62 : vector<4x8x1xf32> to vector<4x8x1xf32>
    %66 = vector.broadcast %65 : vector<4x8x1xf32> to vector<4x8x8xf32>
    %67 = arith.select %64, %66, %58 : vector<4x8x8xi1>, vector<4x8x8xf32>
    %c1_i32 = arith.constant 1 : i32
    %68 = vector.broadcast %c1_i32 : i32 to vector<8x8xi32>
    %69 = arith.cmpi eq, %46, %68 : vector<8x8xi32>
    %70 = vector.shape_cast %69 : vector<8x8xi1> to vector<1x8x8xi1>
    %71 = vector.extract_strided_slice %43 {offsets = [0, 0, 5], sizes = [4, 8, 1], strides = [1, 1, 1]} : vector<4x8x9xf32> to vector<4x8x1xf32>
    %72 = vector.shape_cast %70 : vector<1x8x8xi1> to vector<1x8x8xi1>
    %73 = vector.broadcast %72 : vector<1x8x8xi1> to vector<4x8x8xi1>
    %74 = vector.shape_cast %71 : vector<4x8x1xf32> to vector<4x8x1xf32>
    %75 = vector.broadcast %74 : vector<4x8x1xf32> to vector<4x8x8xf32>
    %76 = arith.select %73, %75, %67 : vector<4x8x8xi1>, vector<4x8x8xf32>
    %c0_i32 = arith.constant 0 : i32
    %77 = vector.broadcast %c0_i32 : i32 to vector<8x8xi32>
    %78 = arith.cmpi eq, %46, %77 : vector<8x8xi32>
    %79 = vector.shape_cast %78 : vector<8x8xi1> to vector<1x8x8xi1>
    %80 = vector.extract_strided_slice %43 {offsets = [0, 0, 4], sizes = [4, 8, 1], strides = [1, 1, 1]} : vector<4x8x9xf32> to vector<4x8x1xf32>
    %81 = vector.shape_cast %79 : vector<1x8x8xi1> to vector<1x8x8xi1>
    %82 = vector.broadcast %81 : vector<1x8x8xi1> to vector<4x8x8xi1>
    %83 = vector.shape_cast %80 : vector<4x8x1xf32> to vector<4x8x1xf32>
    %84 = vector.broadcast %83 : vector<4x8x1xf32> to vector<4x8x8xf32>
    %85 = arith.select %82, %84, %76 : vector<4x8x8xi1>, vector<4x8x8xf32>
    %c-1_i32 = arith.constant -1 : i32
    %86 = vector.broadcast %c-1_i32 : i32 to vector<8x8xi32>
    %87 = arith.cmpi eq, %46, %86 : vector<8x8xi32>
    %88 = vector.shape_cast %87 : vector<8x8xi1> to vector<1x8x8xi1>
    %89 = vector.extract_strided_slice %43 {offsets = [0, 0, 3], sizes = [4, 8, 1], strides = [1, 1, 1]} : vector<4x8x9xf32> to vector<4x8x1xf32>
    %90 = vector.shape_cast %88 : vector<1x8x8xi1> to vector<1x8x8xi1>
    %91 = vector.broadcast %90 : vector<1x8x8xi1> to vector<4x8x8xi1>
    %92 = vector.shape_cast %89 : vector<4x8x1xf32> to vector<4x8x1xf32>
    %93 = vector.broadcast %92 : vector<4x8x1xf32> to vector<4x8x8xf32>
    %94 = arith.select %91, %93, %85 : vector<4x8x8xi1>, vector<4x8x8xf32>
    %c-2_i32 = arith.constant -2 : i32
    %95 = vector.broadcast %c-2_i32 : i32 to vector<8x8xi32>
    %96 = arith.cmpi eq, %46, %95 : vector<8x8xi32>
    %97 = vector.shape_cast %96 : vector<8x8xi1> to vector<1x8x8xi1>
    %98 = vector.extract_strided_slice %43 {offsets = [0, 0, 2], sizes = [4, 8, 1], strides = [1, 1, 1]} : vector<4x8x9xf32> to vector<4x8x1xf32>
    %99 = vector.shape_cast %97 : vector<1x8x8xi1> to vector<1x8x8xi1>
    %100 = vector.broadcast %99 : vector<1x8x8xi1> to vector<4x8x8xi1>
    %101 = vector.shape_cast %98 : vector<4x8x1xf32> to vector<4x8x1xf32>
    %102 = vector.broadcast %101 : vector<4x8x1xf32> to vector<4x8x8xf32>
    %103 = arith.select %100, %102, %94 : vector<4x8x8xi1>, vector<4x8x8xf32>
    %c-3_i32 = arith.constant -3 : i32
    %104 = vector.broadcast %c-3_i32 : i32 to vector<8x8xi32>
    %105 = arith.cmpi eq, %46, %104 : vector<8x8xi32>
    %106 = vector.shape_cast %105 : vector<8x8xi1> to vector<1x8x8xi1>
    %107 = vector.extract_strided_slice %43 {offsets = [0, 0, 1], sizes = [4, 8, 1], strides = [1, 1, 1]} : vector<4x8x9xf32> to vector<4x8x1xf32>
    %108 = vector.shape_cast %106 : vector<1x8x8xi1> to vector<1x8x8xi1>
    %109 = vector.broadcast %108 : vector<1x8x8xi1> to vector<4x8x8xi1>
    %110 = vector.shape_cast %107 : vector<4x8x1xf32> to vector<4x8x1xf32>
    %111 = vector.broadcast %110 : vector<4x8x1xf32> to vector<4x8x8xf32>
    %112 = arith.select %109, %111, %103 : vector<4x8x8xi1>, vector<4x8x8xf32>
    %c-4_i32 = arith.constant -4 : i32
    %113 = vector.broadcast %c-4_i32 : i32 to vector<8x8xi32>
    %114 = arith.cmpi sle, %46, %113 : vector<8x8xi32>
    %115 = vector.shape_cast %114 : vector<8x8xi1> to vector<1x8x8xi1>
    %116 = vector.extract_strided_slice %43 {offsets = [0, 0, 0], sizes = [4, 8, 1], strides = [1, 1, 1]} : vector<4x8x9xf32> to vector<4x8x1xf32>
    %117 = vector.shape_cast %115 : vector<1x8x8xi1> to vector<1x8x8xi1>
    %118 = vector.broadcast %117 : vector<1x8x8xi1> to vector<4x8x8xi1>
    %119 = vector.shape_cast %116 : vector<4x8x1xf32> to vector<4x8x1xf32>
    %120 = vector.broadcast %119 : vector<4x8x1xf32> to vector<4x8x8xf32>
    %121 = arith.select %118, %120, %112 : vector<4x8x8xi1>, vector<4x8x8xf32>
    %122 = arith.addf %39, %121 : vector<4x8x8xf32>
    %123 = arith.index_cast %arg0 : i32 to index
    %124 = memref.load %arg1[%123] : memref<2xi32, #tpu.memory_space<smem>>
    %125 = vector.broadcast %124 : i32 to vector<8x8xi32>
    %126 = arith.cmpi slt, %45, %125 : vector<8x8xi32>
    %127 = vector.shape_cast %126 : vector<8x8xi1> to vector<1x8x8xi1>
    %cst_9 = arith.constant -1.000000e+06 : f32
    %128 = vector.shape_cast %127 : vector<1x8x8xi1> to vector<1x8x8xi1>
    %129 = vector.broadcast %128 : vector<1x8x8xi1> to vector<4x8x8xi1>
    %130 = vector.broadcast %cst_9 : f32 to vector<4x8x8xf32>
    %131 = arith.select %129, %122, %130 : vector<4x8x8xi1>, vector<4x8x8xf32>
    %cst_10 = arith.constant dense<0xFF800000> : vector<4x8xf32>
    %132 = vector.multi_reduction <maximumf>, %131, %cst_10 [2] : vector<4x8x8xf32> to vector<4x8xf32>
    %133 = vector.shape_cast %132 : vector<4x8xf32> to vector<4x8x1xf32>
    %134 = vector.broadcast %133 : vector<4x8x1xf32> to vector<4x8x8xf32>
    %135 = arith.subf %131, %134 : vector<4x8x8xf32>
    %136 = math.exp %135 : vector<4x8x8xf32>
    %cst_11 = arith.constant dense<0.000000e+00> : vector<4x8xf32>
    %137 = vector.multi_reduction <add>, %136, %cst_11 [2] : vector<4x8x8xf32> to vector<4x8xf32>
    %138 = vector.shape_cast %137 : vector<4x8xf32> to vector<4x8x1xf32>
    %139 = arith.truncf %136 : vector<4x8x8xf32> to vector<4x8x8xbf16>
    %cst_12 = arith.constant dense<0.000000e+00> : vector<4x8x8xf32>
    %140 = tpu.matmul %139, %38, %cst_12 {dimension_numbers = #tpu.dot_dimension_numbers<[2], [1], [1], [2], [0, 0, 0, 1, 1, 2], [0], [0]>} : vector<4x8x8xbf16>, vector<4x8x8xbf16>, vector<4x8x8xf32> -> vector<4x8x8xf32>
    %c-4_i32_13 = arith.constant -4 : i32
    %141 = vector.broadcast %c-4_i32_13 : i32 to vector<8x8xi32>
    %142 = arith.cmpi sle, %46, %141 : vector<8x8xi32>
    %143 = vector.shape_cast %142 : vector<8x8xi1> to vector<1x8x8xi1>
    %cst_14 = arith.constant 0.000000e+00 : f32
    %144 = vector.shape_cast %143 : vector<1x8x8xi1> to vector<1x8x8xi1>
    %145 = vector.broadcast %144 : vector<1x8x8xi1> to vector<4x8x8xi1>
    %146 = vector.broadcast %cst_14 : f32 to vector<4x8x8xf32>
    %147 = arith.select %145, %136, %146 : vector<4x8x8xi1>, vector<4x8x8xf32>
    %cst_15 = arith.constant dense<0.000000e+00> : vector<4x8xf32>
    %148 = vector.multi_reduction <add>, %147, %cst_15 [2] : vector<4x8x8xf32> to vector<4x8xf32>
    %149 = vector.shape_cast %148 : vector<4x8xf32> to vector<4x8x1xf32>
    %c-3_i32_16 = arith.constant -3 : i32
    %150 = vector.broadcast %c-3_i32_16 : i32 to vector<8x8xi32>
    %151 = arith.cmpi eq, %46, %150 : vector<8x8xi32>
    %152 = vector.shape_cast %151 : vector<8x8xi1> to vector<1x8x8xi1>
    %cst_17 = arith.constant 0.000000e+00 : f32
    %153 = vector.shape_cast %152 : vector<1x8x8xi1> to vector<1x8x8xi1>
    %154 = vector.broadcast %153 : vector<1x8x8xi1> to vector<4x8x8xi1>
    %155 = vector.broadcast %cst_17 : f32 to vector<4x8x8xf32>
    %156 = arith.select %154, %136, %155 : vector<4x8x8xi1>, vector<4x8x8xf32>
    %cst_18 = arith.constant dense<0.000000e+00> : vector<4x8xf32>
    %157 = vector.multi_reduction <add>, %156, %cst_18 [2] : vector<4x8x8xf32> to vector<4x8xf32>
    %158 = vector.shape_cast %157 : vector<4x8xf32> to vector<4x8x1xf32>
    %159 = arith.addf %149, %158 : vector<4x8x1xf32>
    %c-2_i32_19 = arith.constant -2 : i32
    %160 = vector.broadcast %c-2_i32_19 : i32 to vector<8x8xi32>
    %161 = arith.cmpi eq, %46, %160 : vector<8x8xi32>
    %162 = vector.shape_cast %161 : vector<8x8xi1> to vector<1x8x8xi1>
    %cst_20 = arith.constant 0.000000e+00 : f32
    %163 = vector.shape_cast %162 : vector<1x8x8xi1> to vector<1x8x8xi1>
    %164 = vector.broadcast %163 : vector<1x8x8xi1> to vector<4x8x8xi1>
    %165 = vector.broadcast %cst_20 : f32 to vector<4x8x8xf32>
    %166 = arith.select %164, %136, %165 : vector<4x8x8xi1>, vector<4x8x8xf32>
    %cst_21 = arith.constant dense<0.000000e+00> : vector<4x8xf32>
    %167 = vector.multi_reduction <add>, %166, %cst_21 [2] : vector<4x8x8xf32> to vector<4x8xf32>
    %168 = vector.shape_cast %167 : vector<4x8xf32> to vector<4x8x1xf32>
    %169 = arith.addf %159, %168 : vector<4x8x1xf32>
    %c-1_i32_22 = arith.constant -1 : i32
    %170 = vector.broadcast %c-1_i32_22 : i32 to vector<8x8xi32>
    %171 = arith.cmpi eq, %46, %170 : vector<8x8xi32>
    %172 = vector.shape_cast %171 : vector<8x8xi1> to vector<1x8x8xi1>
    %cst_23 = arith.constant 0.000000e+00 : f32
    %173 = vector.shape_cast %172 : vector<1x8x8xi1> to vector<1x8x8xi1>
    %174 = vector.broadcast %173 : vector<1x8x8xi1> to vector<4x8x8xi1>
    %175 = vector.broadcast %cst_23 : f32 to vector<4x8x8xf32>
    %176 = arith.select %174, %136, %175 : vector<4x8x8xi1>, vector<4x8x8xf32>
    %cst_24 = arith.constant dense<0.000000e+00> : vector<4x8xf32>
    %177 = vector.multi_reduction <add>, %176, %cst_24 [2] : vector<4x8x8xf32> to vector<4x8xf32>
    %178 = vector.shape_cast %177 : vector<4x8xf32> to vector<4x8x1xf32>
    %179 = arith.addf %169, %178 : vector<4x8x1xf32>
    %c1_i32_25 = arith.constant 1 : i32
    %180 = vector.broadcast %c1_i32_25 : i32 to vector<8x8xi32>
    %181 = arith.cmpi eq, %46, %180 : vector<8x8xi32>
    %182 = vector.shape_cast %181 : vector<8x8xi1> to vector<1x8x8xi1>
    %cst_26 = arith.constant 0.000000e+00 : f32
    %183 = vector.shape_cast %182 : vector<1x8x8xi1> to vector<1x8x8xi1>
    %184 = vector.broadcast %183 : vector<1x8x8xi1> to vector<4x8x8xi1>
    %185 = vector.broadcast %cst_26 : f32 to vector<4x8x8xf32>
    %186 = arith.select %184, %136, %185 : vector<4x8x8xi1>, vector<4x8x8xf32>
    %cst_27 = arith.constant dense<0.000000e+00> : vector<4x8xf32>
    %187 = vector.multi_reduction <add>, %186, %cst_27 [2] : vector<4x8x8xf32> to vector<4x8xf32>
    %188 = vector.shape_cast %187 : vector<4x8xf32> to vector<4x8x1xf32>
    %189 = arith.addf %179, %188 : vector<4x8x1xf32>
    %c2_i32_28 = arith.constant 2 : i32
    %190 = vector.broadcast %c2_i32_28 : i32 to vector<8x8xi32>
    %191 = arith.cmpi eq, %46, %190 : vector<8x8xi32>
    %192 = vector.shape_cast %191 : vector<8x8xi1> to vector<1x8x8xi1>
    %cst_29 = arith.constant 0.000000e+00 : f32
    %193 = vector.shape_cast %192 : vector<1x8x8xi1> to vector<1x8x8xi1>
    %194 = vector.broadcast %193 : vector<1x8x8xi1> to vector<4x8x8xi1>
    %195 = vector.broadcast %cst_29 : f32 to vector<4x8x8xf32>
    %196 = arith.select %194, %136, %195 : vector<4x8x8xi1>, vector<4x8x8xf32>
    %cst_30 = arith.constant dense<0.000000e+00> : vector<4x8xf32>
    %197 = vector.multi_reduction <add>, %196, %cst_30 [2] : vector<4x8x8xf32> to vector<4x8xf32>
    %198 = vector.shape_cast %197 : vector<4x8xf32> to vector<4x8x1xf32>
    %199 = arith.addf %189, %198 : vector<4x8x1xf32>
    %c3_i32_31 = arith.constant 3 : i32
    %200 = vector.broadcast %c3_i32_31 : i32 to vector<8x8xi32>
    %201 = arith.cmpi eq, %46, %200 : vector<8x8xi32>
    %202 = vector.shape_cast %201 : vector<8x8xi1> to vector<1x8x8xi1>
    %cst_32 = arith.constant 0.000000e+00 : f32
    %203 = vector.shape_cast %202 : vector<1x8x8xi1> to vector<1x8x8xi1>
    %204 = vector.broadcast %203 : vector<1x8x8xi1> to vector<4x8x8xi1>
    %205 = vector.broadcast %cst_32 : f32 to vector<4x8x8xf32>
    %206 = arith.select %204, %136, %205 : vector<4x8x8xi1>, vector<4x8x8xf32>
    %cst_33 = arith.constant dense<0.000000e+00> : vector<4x8xf32>
    %207 = vector.multi_reduction <add>, %206, %cst_33 [2] : vector<4x8x8xf32> to vector<4x8xf32>
    %208 = vector.shape_cast %207 : vector<4x8xf32> to vector<4x8x1xf32>
    %209 = arith.addf %199, %208 : vector<4x8x1xf32>
    %c4_i32 = arith.constant 4 : i32
    %210 = vector.broadcast %c4_i32 : i32 to vector<8x8xi32>
    %211 = arith.cmpi sge, %46, %210 : vector<8x8xi32>
    %212 = vector.shape_cast %211 : vector<8x8xi1> to vector<1x8x8xi1>
    %cst_34 = arith.constant 0.000000e+00 : f32
    %213 = vector.shape_cast %212 : vector<1x8x8xi1> to vector<1x8x8xi1>
    %214 = vector.broadcast %213 : vector<1x8x8xi1> to vector<4x8x8xi1>
    %215 = vector.broadcast %cst_34 : f32 to vector<4x8x8xf32>
    %216 = arith.select %214, %136, %215 : vector<4x8x8xi1>, vector<4x8x8xf32>
    %cst_35 = arith.constant dense<0.000000e+00> : vector<4x8xf32>
    %217 = vector.multi_reduction <add>, %216, %cst_35 [2] : vector<4x8x8xf32> to vector<4x8xf32>
    %218 = vector.shape_cast %217 : vector<4x8xf32> to vector<4x8x1xf32>
    %219 = arith.addf %209, %218 : vector<4x8x1xf32>
    %220 = arith.subf %138, %219 : vector<4x8x1xf32>
    %221 = tpu.concatenate %149, %158, %168, %178, %220, %188, %198, %208, %218 in 2 : vector<4x8x1xf32>, vector<4x8x1xf32>, vector<4x8x1xf32>, vector<4x8x1xf32>, vector<4x8x1xf32>, vector<4x8x1xf32>, vector<4x8x1xf32>, vector<4x8x1xf32>, vector<4x8x1xf32> -> vector<4x8x9xf32>
    %222 = arith.truncf %221 : vector<4x8x9xf32> to vector<4x8x9xbf16>
    %223 = vector.shape_cast %222 : vector<4x8x9xbf16> to vector<32x9xbf16>
    %c0_36 = arith.constant 0 : index
    %c0_37 = arith.constant 0 : index
    %224 = vector.load %arg6[%c0_36, %c0_37] : memref<9x8xbf16, #tpu.memory_space<vmem>>, vector<9x8xbf16>
    %cst_38 = arith.constant dense<0.000000e+00> : vector<32x8xf32>
    %225 = tpu.matmul %223, %224, %cst_38 {dimension_numbers = #tpu.dot_dimension_numbers<[1], [0], [0], [1], [0, 0, 1, 1], [], []>} : vector<32x9xbf16>, vector<9x8xbf16>, vector<32x8xf32> -> vector<32x8xf32>
    %226 = vector.shape_cast %225 : vector<32x8xf32> to vector<4x8x8xf32>
    %227 = arith.addf %140, %226 : vector<4x8x8xf32>
    %cst_39 = arith.constant 1.000000e+00 : f32
    %228 = vector.broadcast %cst_39 : f32 to vector<4x8x1xf32>
    %229 = arith.divf %228, %138 : vector<4x8x1xf32>
    %230 = vector.broadcast %229 : vector<4x8x1xf32> to vector<4x8x8xf32>
    %231 = arith.mulf %227, %230 : vector<4x8x8xf32>
    %232 = vector.extract_strided_slice %231 {offsets = [0, 0, 0], sizes = [1, 8, 8], strides = [1, 1, 1]} : vector<4x8x8xf32> to vector<1x8x8xf32>
    %233 = vector.shape_cast %232 : vector<1x8x8xf32> to vector<8x8xf32>
    %234 = vector.extract_strided_slice %231 {offsets = [1, 0, 0], sizes = [1, 8, 8], strides = [1, 1, 1]} : vector<4x8x8xf32> to vector<1x8x8xf32>
    %235 = vector.shape_cast %234 : vector<1x8x8xf32> to vector<8x8xf32>
    %236 = vector.extract_strided_slice %231 {offsets = [2, 0, 0], sizes = [1, 8, 8], strides = [1, 1, 1]} : vector<4x8x8xf32> to vector<1x8x8xf32>
    %237 = vector.shape_cast %236 : vector<1x8x8xf32> to vector<8x8xf32>
    %238 = vector.extract_strided_slice %231 {offsets = [3, 0, 0], sizes = [1, 8, 8], strides = [1, 1, 1]} : vector<4x8x8xf32> to vector<1x8x8xf32>
    %239 = vector.shape_cast %238 : vector<1x8x8xf32> to vector<8x8xf32>
    %240 = tpu.concatenate %233, %235, %237, %239 in 1 : vector<8x8xf32>, vector<8x8xf32>, vector<8x8xf32>, vector<8x8xf32> -> vector<8x32xf32>
    %241 = arith.truncf %240 : vector<8x32xf32> to vector<8x32xbf16>
    %c0_40 = arith.constant 0 : index
    %c0_41 = arith.constant 0 : index
    %242 = vector.load %arg4[%c0_40, %c0_41] : memref<32x32xbf16, #tpu.memory_space<vmem>>, vector<32x32xbf16>
    %cst_42 = arith.constant dense<0.000000e+00> : vector<8x32xf32>
    %243 = tpu.matmul %241, %242, %cst_42 {dimension_numbers = #tpu.dot_dimension_numbers<[1], [0], [0], [1], [0, 0, 1, 1], [], []>} : vector<8x32xbf16>, vector<32x32xbf16>, vector<8x32xf32> -> vector<8x32xf32>
    %244 = arith.extf %1 : vector<8x32xbf16> to vector<8x32xf32>
    %245 = arith.addf %244, %243 : vector<8x32xf32>
    %c0_43 = arith.constant 0 : index
    %c0_44 = arith.constant 0 : index
    %246 = vector.load %arg7[%c0_43, %c0_44] : memref<1x32xf32, #tpu.memory_space<vmem>>, vector<1x32xf32>
    %c0_45 = arith.constant 0 : index
    %c0_46 = arith.constant 0 : index
    %247 = vector.load %arg8[%c0_45, %c0_46] : memref<1x32xf32, #tpu.memory_space<vmem>>, vector<1x32xf32>
    %cst_47 = arith.constant dense<0.000000e+00> : vector<8xf32>
    %248 = vector.multi_reduction <add>, %245, %cst_47 [1] : vector<8x32xf32> to vector<8xf32>
    %249 = vector.shape_cast %248 : vector<8xf32> to vector<8x1xf32>
    %cst_48 = arith.constant 3.200000e+01 : f32
    %250 = vector.broadcast %cst_48 : f32 to vector<8x1xf32>
    %251 = arith.divf %249, %250 : vector<8x1xf32>
    %252 = vector.broadcast %251 : vector<8x1xf32> to vector<8x32xf32>
    %253 = arith.subf %245, %252 : vector<8x32xf32>
    %254 = arith.mulf %253, %253 : vector<8x32xf32>
    %cst_49 = arith.constant dense<0.000000e+00> : vector<8xf32>
    %255 = vector.multi_reduction <add>, %254, %cst_49 [1] : vector<8x32xf32> to vector<8xf32>
    %256 = vector.shape_cast %255 : vector<8xf32> to vector<8x1xf32>
    %cst_50 = arith.constant 3.200000e+01 : f32
    %257 = vector.broadcast %cst_50 : f32 to vector<8x1xf32>
    %258 = arith.divf %256, %257 : vector<8x1xf32>
    %259 = vector.broadcast %251 : vector<8x1xf32> to vector<8x32xf32>
    %260 = arith.subf %245, %259 : vector<8x32xf32>
    %cst_51 = arith.constant 9.99999974E-6 : f32
    %261 = vector.broadcast %cst_51 : f32 to vector<8x1xf32>
    %262 = arith.addf %258, %261 : vector<8x1xf32>
    %263 = math.rsqrt %262 : vector<8x1xf32>
    %264 = vector.broadcast %263 : vector<8x1xf32> to vector<8x32xf32>
    %265 = arith.mulf %260, %264 : vector<8x32xf32>
    %266 = vector.broadcast %246 : vector<1x32xf32> to vector<8x32xf32>
    %267 = arith.mulf %265, %266 : vector<8x32xf32>
    %268 = vector.broadcast %247 : vector<1x32xf32> to vector<8x32xf32>
    %269 = arith.addf %267, %268 : vector<8x32xf32>
    %270 = arith.truncf %269 : vector<8x32xf32> to vector<8x32xbf16>
    %c0_52 = arith.constant 0 : index
    %c0_53 = arith.constant 0 : index
    %271 = vector.load %arg9[%c0_52, %c0_53] : memref<32x64xbf16, #tpu.memory_space<vmem>>, vector<32x64xbf16>
    %cst_54 = arith.constant dense<0.000000e+00> : vector<8x64xf32>
    %272 = tpu.matmul %270, %271, %cst_54 {dimension_numbers = #tpu.dot_dimension_numbers<[1], [0], [0], [1], [0, 0, 1, 1], [], []>} : vector<8x32xbf16>, vector<32x64xbf16>, vector<8x64xf32> -> vector<8x64xf32>
    %c0_55 = arith.constant 0 : index
    %c0_56 = arith.constant 0 : index
    %273 = vector.load %arg10[%c0_55, %c0_56] : memref<1x64xf32, #tpu.memory_space<vmem>>, vector<1x64xf32>
    %274 = vector.broadcast %273 : vector<1x64xf32> to vector<8x64xf32>
    %275 = arith.addf %272, %274 : vector<8x64xf32>
    %cst_57 = arith.constant 0.000000e+00 : f32
    %276 = vector.broadcast %cst_57 : f32 to vector<8x64xf32>
    %277 = arith.maximumf %275, %276 : vector<8x64xf32>
    %278 = arith.truncf %277 : vector<8x64xf32> to vector<8x64xbf16>
    %c0_58 = arith.constant 0 : index
    %c0_59 = arith.constant 0 : index
    %279 = vector.load %arg11[%c0_58, %c0_59] : memref<64x32xbf16, #tpu.memory_space<vmem>>, vector<64x32xbf16>
    %cst_60 = arith.constant dense<0.000000e+00> : vector<8x32xf32>
    %280 = tpu.matmul %278, %279, %cst_60 {dimension_numbers = #tpu.dot_dimension_numbers<[1], [0], [0], [1], [0, 0, 1, 1], [], []>} : vector<8x64xbf16>, vector<64x32xbf16>, vector<8x32xf32> -> vector<8x32xf32>
    %c0_61 = arith.constant 0 : index
    %c0_62 = arith.constant 0 : index
    %281 = vector.load %arg12[%c0_61, %c0_62] : memref<1x32xf32, #tpu.memory_space<vmem>>, vector<1x32xf32>
    %282 = vector.broadcast %281 : vector<1x32xf32> to vector<8x32xf32>
    %283 = arith.addf %280, %282 : vector<8x32xf32>
    %284 = arith.addf %269, %283 : vector<8x32xf32>
    %c0_63 = arith.constant 0 : index
    %c0_64 = arith.constant 0 : index
    %285 = vector.load %arg13[%c0_63, %c0_64] : memref<1x32xf32, #tpu.memory_space<vmem>>, vector<1x32xf32>
    %c0_65 = arith.constant 0 : index
    %c0_66 = arith.constant 0 : index
    %286 = vector.load %arg14[%c0_65, %c0_66] : memref<1x32xf32, #tpu.memory_space<vmem>>, vector<1x32xf32>
    %cst_67 = arith.constant dense<0.000000e+00> : vector<8xf32>
    %287 = vector.multi_reduction <add>, %284, %cst_67 [1] : vector<8x32xf32> to vector<8xf32>
    %288 = vector.shape_cast %287 : vector<8xf32> to vector<8x1xf32>
    %cst_68 = arith.constant 3.200000e+01 : f32
    %289 = vector.broadcast %cst_68 : f32 to vector<8x1xf32>
    %290 = arith.divf %288, %289 : vector<8x1xf32>
    %291 = vector.broadcast %290 : vector<8x1xf32> to vector<8x32xf32>
    %292 = arith.subf %284, %291 : vector<8x32xf32>
    %293 = arith.mulf %292, %292 : vector<8x32xf32>
    %cst_69 = arith.constant dense<0.000000e+00> : vector<8xf32>
    %294 = vector.multi_reduction <add>, %293, %cst_69 [1] : vector<8x32xf32> to vector<8xf32>
    %295 = vector.shape_cast %294 : vector<8xf32> to vector<8x1xf32>
    %cst_70 = arith.constant 3.200000e+01 : f32
    %296 = vector.broadcast %cst_70 : f32 to vector<8x1xf32>
    %297 = arith.divf %295, %296 : vector<8x1xf32>
    %298 = vector.broadcast %290 : vector<8x1xf32> to vector<8x32xf32>
    %299 = arith.subf %284, %298 : vector<8x32xf32>
    %cst_71 = arith.constant 9.99999974E-6 : f32
    %300 = vector.broadcast %cst_71 : f32 to vector<8x1xf32>
    %301 = arith.addf %297, %300 : vector<8x1xf32>
    %302 = math.rsqrt %301 : vector<8x1xf32>
    %303 = vector.broadcast %302 : vector<8x1xf32> to vector<8x32xf32>
    %304 = arith.mulf %299, %303 : vector<8x32xf32>
    %305 = vector.broadcast %285 : vector<1x32xf32> to vector<8x32xf32>
    %306 = arith.mulf %304, %305 : vector<8x32xf32>
    %307 = vector.broadcast %286 : vector<1x32xf32> to vector<8x32xf32>
    %308 = arith.addf %306, %307 : vector<8x32xf32>
    %309 = arith.truncf %308 : vector<8x32xf32> to vector<8x32xbf16>
    %c0_72 = arith.constant 0 : index
    %c0_73 = arith.constant 0 : index
    %c0_74 = arith.constant 0 : index
    %310 = vector.load %arg15[%c0_72, %c0_73, %c0_74] : memref<1x8x32xbf16, #tpu.memory_space<vmem>>, vector<1x8x32xbf16>
    %311 = vector.shape_cast %310 : vector<1x8x32xbf16> to vector<8x32xbf16>
    %312 = vector.shape_cast %309 : vector<8x32xbf16> to vector<1x8x32xbf16>
    tpu.vector_store %arg15[%c0_72, %c0_73, %c0_74], %312 {strides = array<i32>} : memref<1x8x32xbf16, #tpu.memory_space<vmem>>, vector<1x8x32xbf16>,
    return
  }
  func.func @transform_0(%arg0: i32, %arg1: memref<2xi32, #tpu.memory_space<smem>>) -> (i32, i32, i32) {
    %c0_i32 = arith.constant 0 : i32
    %c0_i32_0 = arith.constant 0 : i32
    %c0_i32_1 = arith.constant 0 : i32
    return %arg0, %c0_i32, %c0_i32_0 : i32, i32, i32
  }
  func.func @transform_1(%arg0: i32, %arg1: memref<2xi32, #tpu.memory_space<smem>>) -> (i32, i32) {
    %c0_i32 = arith.constant 0 : i32
    %c0_i32_0 = arith.constant 0 : i32
    %c0_i32_1 = arith.constant 0 : i32
    return %c0_i32, %c0_i32_0 : i32, i32
  }
  func.func @transform_2(%arg0: i32, %arg1: memref<2xi32, #tpu.memory_space<smem>>) -> (i32, i32) {
    %c0_i32 = arith.constant 0 : i32
    %c0_i32_0 = arith.constant 0 : i32
    %c0_i32_1 = arith.constant 0 : i32
    return %c0_i32, %c0_i32_0 : i32, i32
  }
  func.func @transform_3(%arg0: i32, %arg1: memref<2xi32, #tpu.memory_space<smem>>) -> (i32, i32) {
    %c0_i32 = arith.constant 0 : i32
    %c0_i32_0 = arith.constant 0 : i32
    %c0_i32_1 = arith.constant 0 : i32
    return %c0_i32, %c0_i32_0 : i32, i32
  }
  func.func @transform_4(%arg0: i32, %arg1: memref<2xi32, #tpu.memory_space<smem>>) -> (i32, i32) {
    %c0_i32 = arith.constant 0 : i32
    %c0_i32_0 = arith.constant 0 : i32
    %c0_i32_1 = arith.constant 0 : i32
    return %c0_i32, %c0_i32_0 : i32, i32
  }
  func.func @transform_5(%arg0: i32, %arg1: memref<2xi32, #tpu.memory_space<smem>>) -> (i32, i32) {
    %c0_i32 = arith.constant 0 : i32
    %c0_i32_0 = arith.constant 0 : i32
    %c0_i32_1 = arith.constant 0 : i32
    return %c0_i32, %c0_i32_0 : i32, i32
  }
  func.func @transform_6(%arg0: i32, %arg1: memref<2xi32, #tpu.memory_space<smem>>) -> (i32, i32) {
    %c0_i32 = arith.constant 0 : i32
    %c0_i32_0 = arith.constant 0 : i32
    %c0_i32_1 = arith.constant 0 : i32
    return %c0_i32, %c0_i32_0 : i32, i32
  }
  func.func @transform_7(%arg0: i32, %arg1: memref<2xi32, #tpu.memory_space<smem>>) -> (i32, i32) {
    %c0_i32 = arith.constant 0 : i32
    %c0_i32_0 = arith.constant 0 : i32
    %c0_i32_1 = arith.constant 0 : i32
    return %c0_i32, %c0_i32_0 : i32, i32
  }
  func.func @transform_8(%arg0: i32, %arg1: memref<2xi32, #tpu.memory_space<smem>>) -> (i32, i32) {
    %c0_i32 = arith.constant 0 : i32
    %c0_i32_0 = arith.constant 0 : i32
    %c0_i32_1 = arith.constant 0 : i32
    return %c0_i32, %c0_i32_0 : i32, i32
  }
  func.func @transform_9(%arg0: i32, %arg1: memref<2xi32, #tpu.memory_space<smem>>) -> (i32, i32) {
    %c0_i32 = arith.constant 0 : i32
    %c0_i32_0 = arith.constant 0 : i32
    %c0_i32_1 = arith.constant 0 : i32
    return %c0_i32, %c0_i32_0 : i32, i32
  }
  func.func @transform_10(%arg0: i32, %arg1: memref<2xi32, #tpu.memory_space<smem>>) -> (i32, i32) {
    %c0_i32 = arith.constant 0 : i32
    %c0_i32_0 = arith.constant 0 : i32
    %c0_i32_1 = arith.constant 0 : i32
    return %c0_i32, %c0_i32_0 : i32, i32
  }
  func.func @transform_11(%arg0: i32, %arg1: memref<2xi32, #tpu.memory_space<smem>>) -> (i32, i32) {
    %c0_i32 = arith.constant 0 : i32
    %c0_i32_0 = arith.constant 0 : i32
    %c0_i32_1 = arith.constant 0 : i32
    return %c0_i32, %c0_i32_0 : i32, i32
  }
  func.func @transform_12(%arg0: i32, %arg1: memref<2xi32, #tpu.memory_space<smem>>) -> (i32, i32) {
    %c0_i32 = arith.constant 0 : i32
    %c0_i32_0 = arith.constant 0 : i32
    %c0_i32_1 = arith.constant 0 : i32
    return %c0_i32, %c0_i32_0 : i32, i32
  }
  func.func @transform_13(%arg0: i32, %arg1: memref<2xi32, #tpu.memory_space<smem>>) -> (i32, i32, i32) {
    %c0_i32 = arith.constant 0 : i32
    %c0_i32_0 = arith.constant 0 : i32
    %c0_i32_1 = arith.constant 0 : i32
    return %arg0, %c0_i32, %c0_i32_0 : i32, i32, i32
  }
}

</mosaic_0001>

<llo_original>
// kernel: tpu_custom_call.1
$region0: #{tpu_custom_call.1}
  #allocation0 [shape = 'u32[]', space=smem, size = 0x4, offset = 0x4, fixed_abs, tag = 'smem constant byte address 0x4 - core index']
  #allocation1 [shape = 'u32[72,128]{1,0:T(1,128)}', space=vmem, size = 0x9000, scoped, tag = 'internal scratch']
  #allocation2 [shape = 's32[1]{0}', space=sflag, size = 0x4, scoped, tag = 'scoped memory for tpu_custom_call.1']
  #allocation3 [shape = 'u8[512]{0}', space=smem, size = 0x200, scoped, tag = 'prefetched SMEM operand 0']
  %s0 = inlined_call_operand.vmem [shape: s32[2], index: 0, kind: input, shape index: {}]
  %s1 = inlined_call_operand.vmem [shape: bf16[2,8,32], index: 1, kind: input, shape index: {}]
  %s2 = inlined_call_operand.vmem [shape: bf16[32,96], index: 2, kind: input, shape index: {}]
  %s3 = inlined_call_operand.vmem [shape: bf16[32,32], index: 3, kind: input, shape index: {}]
  %s4 = inlined_call_operand.vmem [shape: bf16[9,8], index: 4, kind: input, shape index: {}]
  %s5 = inlined_call_operand.vmem [shape: bf16[9,8], index: 5, kind: input, shape index: {}]
  %s6 = inlined_call_operand.vmem [shape: f32[1,32], index: 6, kind: input, shape index: {}]
  %s7 = inlined_call_operand.vmem [shape: f32[1,32], index: 7, kind: input, shape index: {}]
  %s8 = inlined_call_operand.vmem [shape: bf16[32,64], index: 8, kind: input, shape index: {}]
  %s9 = inlined_call_operand.vmem [shape: f32[1,64], index: 9, kind: input, shape index: {}]
  %s10 = inlined_call_operand.vmem [shape: bf16[64,32], index: 10, kind: input, shape index: {}]
  %s11 = inlined_call_operand.vmem [shape: f32[1,32], index: 11, kind: input, shape index: {}]
  %s12 = inlined_call_operand.vmem [shape: f32[1,32], index: 12, kind: input, shape index: {}]
  %s13 = inlined_call_operand.vmem [shape: f32[1,32], index: 13, kind: input, shape index: {}]
  %s14 = inlined_call_operand.hbm [shape: bf16[2,8,32], index: 14, kind: output, shape index: {}]
  %s15 = sld [smem:[#allocation0]]
  $region85: #{tpu_custom_call.1} parent=0
    _
  %s17 = ssub.s32 1, %s15
  %s18 = scalar_select 0, %s17, %s15
  %s20 = sshll.u32 %s0, 4
  %s21 = int_to_ptr.vmem [resolvable:$true] %s20
  %23 = dma.vmem_to_smem %s21, 16, [#allocation3], [#allocation2]
  %25 = dma.done [#allocation2], 16
  %26 = sfence
  $region1: #{tpu_custom_call.1} parent=0
    #allocation4 [shape = 'u8[4096]{0}', space=vmem, size = 0x1000, scoped, tag = 'output window, operand 0']
    #allocation5 [shape = 's32[2]{0}', space=sflag, size = 0x8, scoped, tag = 'scoped memory for tpu_custom_call.1']
    %27 = vsyncpa [#allocation5], 0
    %s28 = scalar_lea.sflag [#allocation5], 1
    %29 = vsyncpa %s28, 0
    loop: start=0, step=1, limit=4
    $region2: #{tpu_custom_call.1} parent=1 // loop_pre_header
      _
    $region3: #{tpu_custom_call.1} parent=1 // loop_header
      %s31 = sphi 0, %s35
      %p32 = scmp.ge.s32.totalorder %s31, 4
      %s41 = sphi 0, %s43
      %s44 = sphi 0, %s41
      %s45 = sphi 0, %s44
      %s61 = sphi 0, %s45
      %s65 = sphi 0, %s65
      %s67 = sphi 0, %s65
      %s68 = sphi 0, %s67
      %s82 = sphi 0, %s68
      %s86 = sphi 0, %s86
      %s88 = sphi 0, %s86
      %s89 = sphi 0, %s88
      %s103 = sphi 0, %s89
      %s107 = sphi 0, %s107
      %s109 = sphi 0, %s107
      %s110 = sphi 0, %s109
      %s124 = sphi 0, %s110
      %s128 = sphi 0, %s128
      %s130 = sphi 0, %s128
      %s131 = sphi 0, %s130
      %s145 = sphi 0, %s131
      %s149 = sphi 0, %s149
      %s151 = sphi 0, %s149
      %s152 = sphi 0, %s151
      %s166 = sphi 0, %s152
      %s170 = sphi 0, %s170
      %s172 = sphi 0, %s170
      %s173 = sphi 0, %s172
      %s187 = sphi 0, %s173
      %s191 = sphi 0, %s191
      %s193 = sphi 0, %s191
      %s194 = sphi 0, %s193
      %s208 = sphi 0, %s194
      %s212 = sphi 0, %s212
      %s214 = sphi 0, %s212
      %s215 = sphi 0, %s214
      %s229 = sphi 0, %s215
      %s233 = sphi 0, %s233
      %s235 = sphi 0, %s233
      %s236 = sphi 0, %s235
      %s250 = sphi 0, %s236
      %s254 = sphi 0, %s254
      %s256 = sphi 0, %s254
      %s257 = sphi 0, %s256
      %s271 = sphi 0, %s257
      %s275 = sphi 0, %s275
      %s277 = sphi 0, %s275
      %s278 = sphi 0, %s277
      %s292 = sphi 0, %s278
      %s296 = sphi 0, %s296
      %s298 = sphi 0, %s296
      %s299 = sphi 0, %s298
      %s313 = sphi 0, %s299
      %s319 = sphi 0, %s321
      %s322 = sphi 0, %s319
      %s323 = sphi 0, %s322
      %s339 = sphi 0, %s323
    $region4: #{tpu_custom_call.1} parent=1 // loop_header_branch
      %34 = sbr.rel (%p32) target = $region8
    $region5: #{tpu_custom_call.1} parent=1 // loop_body
      %s36 = ssub.s32 %s31, 1
      %s37 = ssub.s32 %s31, 2
      %s38 = sadd.s32 %s31, 1
      %s39 = ssub.s32 %s31, %s38
      %p40 = scmp.eq.s32.totalorder %s39, 0
      %s42 = sadd.s32 %s41, 1
      %s43 = scalar_select %p40, %s41, %s42
      %p46 = pneg %p40
      %p47 = scmp.eq.s32.totalorder %s31, 1
      %p48 = por %p46, %p47
      %p49 = scmp.ne.s32.totalorder %s41, %s44
      %p50 = scmp.eq.s32.totalorder %s31, 0
      %p51 = por %p49, %p50
      %p52 = scmp.ne.s32.totalorder %s41, %s44
      %p53 = scmp.eq.s32.totalorder %s36, 1
      %p54 = por %p52, %p53
      %p55 = scmp.ne.s32.totalorder %s44, %s45
      %p56 = scmp.eq.s32.totalorder %s36, 0
      %p57 = por %p55, %p56
      %p58 = scmp.ne.s32.totalorder %s44, %s45
      %p59 = scmp.eq.s32.totalorder %s37, 1
      %p60 = por %p58, %p59
      %p62 = scmp.ne.s32.totalorder %s45, %s61
      %p63 = scmp.eq.s32.totalorder %s37, 0
      %p64 = por %p62, %p63
      %s66 = sadd.s32 %s65, 1
      %p69 = scmp.eq.s32.totalorder %s31, 1
      %p70 = scmp.ne.s32.totalorder %s65, %s67
      %p71 = scmp.eq.s32.totalorder %s31, 0
      %p72 = por %p70, %p71
      %p73 = scmp.ne.s32.totalorder %s65, %s67
      %p74 = scmp.eq.s32.totalorder %s36, 1
      %p75 = por %p73, %p74
      %p76 = scmp.ne.s32.totalorder %s67, %s68
      %p77 = scmp.eq.s32.totalorder %s36, 0
      %p78 = por %p76, %p77
      %p79 = scmp.ne.s32.totalorder %s67, %s68
      %p80 = scmp.eq.s32.totalorder %s37, 1
      %p81 = por %p79, %p80
      %p83 = scmp.ne.s32.totalorder %s68, %s82
      %p84 = scmp.eq.s32.totalorder %s37, 0
      %p85 = por %p83, %p84
      %s87 = sadd.s32 %s86, 1
      %p90 = scmp.eq.s32.totalorder %s31, 1
      %p91 = scmp.ne.s32.totalorder %s86, %s88
      %p92 = scmp.eq.s32.totalorder %s31, 0
      %p93 = por %p91, %p92
      %p94 = scmp.ne.s32.totalorder %s86, %s88
      %p95 = scmp.eq.s32.totalorder %s36, 1
      %p96 = por %p94, %p95
      %p97 = scmp.ne.s32.totalorder %s88, %s89
      %p98 = scmp.eq.s32.totalorder %s36, 0
      %p99 = por %p97, %p98
      %p100 = scmp.ne.s32.totalorder %s88, %s89
      %p101 = scmp.eq.s32.totalorder %s37, 1
      %p102 = por %p100, %p101
      %p104 = scmp.ne.s32.totalorder %s89, %s103
      %p105 = scmp.eq.s32.totalorder %s37, 0
      %p106 = por %p104, %p105
      %s108 = sadd.s32 %s107, 1
      %p111 = scmp.eq.s32.totalorder %s31, 1
      %p112 = scmp.ne.s32.totalorder %s107, %s109
      %p113 = scmp.eq.s32.totalorder %s31, 0
      %p114 = por %p112, %p113
      %p115 = scmp.ne.s32.totalorder %s107, %s109
      %p116 = scmp.eq.s32.totalorder %s36, 1
      %p117 = por %p115, %p116
      %p118 = scmp.ne.s32.totalorder %s109, %s110
      %p119 = scmp.eq.s32.totalorder %s36, 0
      %p120 = por %p118, %p119
      %p121 = scmp.ne.s32.totalorder %s109, %s110
      %p122 = scmp.eq.s32.totalorder %s37, 1
      %p123 = por %p121, %p122
      %p125 = scmp.ne.s32.totalorder %s110, %s124
      %p126 = scmp.eq.s32.totalorder %s37, 0
      %p127 = por %p125, %p126
      %s129 = sadd.s32 %s128, 1
      %p132 = scmp.eq.s32.totalorder %s31, 1
      %p133 = scmp.ne.s32.totalorder %s128, %s130
      %p134 = scmp.eq.s32.totalorder %s31, 0
      %p135 = por %p133, %p134
      %p136 = scmp.ne.s32.totalorder %s128, %s130
      %p137 = scmp.eq.s32.totalorder %s36, 1
      %p138 = por %p136, %p137
      %p139 = scmp.ne.s32.totalorder %s130, %s131
      %p140 = scmp.eq.s32.totalorder %s36, 0
      %p141 = por %p139, %p140
      %p142 = scmp.ne.s32.totalorder %s130, %s131
      %p143 = scmp.eq.s32.totalorder %s37, 1
      %p144 = por %p142, %p143
      %p146 = scmp.ne.s32.totalorder %s131, %s145
      %p147 = scmp.eq.s32.totalorder %s37, 0
      %p148 = por %p146, %p147
      %s150 = sadd.s32 %s149, 1
      %p153 = scmp.eq.s32.totalorder %s31, 1
      %p154 = scmp.ne.s32.totalorder %s149, %s151
      %p155 = scmp.eq.s32.totalorder %s31, 0
      %p156 = por %p154, %p155
      %p157 = scmp.ne.s32.totalorder %s149, %s151
      %p158 = scmp.eq.s32.totalorder %s36, 1
      %p159 = por %p157, %p158
      %p160 = scmp.ne.s32.totalorder %s151, %s152
      %p161 = scmp.eq.s32.totalorder %s36, 0
      %p162 = por %p160, %p161
      %p163 = scmp.ne.s32.totalorder %s151, %s152
      %p164 = scmp.eq.s32.totalorder %s37, 1
      %p165 = por %p163, %p164
      %p167 = scmp.ne.s32.totalorder %s152, %s166
      %p168 = scmp.eq.s32.totalorder %s37, 0
      %p169 = por %p167, %p168
      %s171 = sadd.s32 %s170, 1
      %p174 = scmp.eq.s32.totalorder %s31, 1
      %p175 = scmp.ne.s32.totalorder %s170, %s172
      %p176 = scmp.eq.s32.totalorder %s31, 0
      %p177 = por %p175, %p176
      %p178 = scmp.ne.s32.totalorder %s170, %s172
      %p179 = scmp.eq.s32.totalorder %s36, 1
      %p180 = por %p178, %p179
      %p181 = scmp.ne.s32.totalorder %s172, %s173
      %p182 = scmp.eq.s32.totalorder %s36, 0
      %p183 = por %p181, %p182
      %p184 = scmp.ne.s32.totalorder %s172, %s173
      %p185 = scmp.eq.s32.totalorder %s37, 1
      %p186 = por %p184, %p185
      %p188 = scmp.ne.s32.totalorder %s173, %s187
      %p189 = scmp.eq.s32.totalorder %s37, 0
      %p190 = por %p188, %p189
      %s192 = sadd.s32 %s191, 1
      %p195 = scmp.eq.s32.totalorder %s31, 1
      %p196 = scmp.ne.s32.totalorder %s191, %s193
      %p197 = scmp.eq.s32.totalorder %s31, 0
      %p198 = por %p196, %p197
      %p199 = scmp.ne.s32.totalorder %s191, %s193
      %p200 = scmp.eq.s32.totalorder %s36, 1
      %p201 = por %p199, %p200
      %p202 = scmp.ne.s32.totalorder %s193, %s194
      %p203 = scmp.eq.s32.totalorder %s36, 0
      %p204 = por %p202, %p203
      %p205 = scmp.ne.s32.totalorder %s193, %s194
      %p206 = scmp.eq.s32.totalorder %s37, 1
      %p207 = por %p205, %p206
      %p209 = scmp.ne.s32.totalorder %s194, %s208
      %p210 = scmp.eq.s32.totalorder %s37, 0
      %p211 = por %p209, %p210
      %s213 = sadd.s32 %s212, 1
      %p216 = scmp.eq.s32.totalorder %s31, 1
      %p217 = scmp.ne.s32.totalorder %s212, %s214
      %p218 = scmp.eq.s32.totalorder %s31, 0
      %p219 = por %p217, %p218
      %p220 = scmp.ne.s32.totalorder %s212, %s214
      %p221 = scmp.eq.s32.totalorder %s36, 1
      %p222 = por %p220, %p221
      %p223 = scmp.ne.s32.totalorder %s214, %s215
      %p224 = scmp.eq.s32.totalorder %s36, 0
      %p225 = por %p223, %p224
      %p226 = scmp.ne.s32.totalorder %s214, %s215
      %p227 = scmp.eq.s32.totalorder %s37, 1
      %p228 = por %p226, %p227
      %p230 = scmp.ne.s32.totalorder %s215, %s229
      %p231 = scmp.eq.s32.totalorder %s37, 0
      %p232 = por %p230, %p231
      %s234 = sadd.s32 %s233, 1
      %p237 = scmp.eq.s32.totalorder %s31, 1
      %p238 = scmp.ne.s32.totalorder %s233, %s235
      %p239 = scmp.eq.s32.totalorder %s31, 0
      %p240 = por %p238, %p239
      %p241 = scmp.ne.s32.totalorder %s233, %s235
      %p242 = scmp.eq.s32.totalorder %s36, 1
      %p243 = por %p241, %p242
      %p244 = scmp.ne.s32.totalorder %s235, %s236
      %p245 = scmp.eq.s32.totalorder %s36, 0
      %p246 = por %p244, %p245
      %p247 = scmp.ne.s32.totalorder %s235, %s236
      %p248 = scmp.eq.s32.totalorder %s37, 1
      %p249 = por %p247, %p248
      %p251 = scmp.ne.s32.totalorder %s236, %s250
      %p252 = scmp.eq.s32.totalorder %s37, 0
      %p253 = por %p251, %p252
      %s255 = sadd.s32 %s254, 1
      %p258 = scmp.eq.s32.totalorder %s31, 1
      %p259 = scmp.ne.s32.totalorder %s254, %s256
      %p260 = scmp.eq.s32.totalorder %s31, 0
      %p261 = por %p259, %p260
      %p262 = scmp.ne.s32.totalorder %s254, %s256
      %p263 = scmp.eq.s32.totalorder %s36, 1
      %p264 = por %p262, %p263
      %p265 = scmp.ne.s32.totalorder %s256, %s257
      %p266 = scmp.eq.s32.totalorder %s36, 0
      %p267 = por %p265, %p266
      %p268 = scmp.ne.s32.totalorder %s256, %s257
      %p269 = scmp.eq.s32.totalorder %s37, 1
      %p270 = por %p268, %p269
      %p272 = scmp.ne.s32.totalorder %s257, %s271
      %p273 = scmp.eq.s32.totalorder %s37, 0
      %p274 = por %p272, %p273
      %s276 = sadd.s32 %s275, 1
      %p279 = scmp.eq.s32.totalorder %s31, 1
      %p280 = scmp.ne.s32.totalorder %s275, %s277
      %p281 = scmp.eq.s32.totalorder %s31, 0
      %p282 = por %p280, %p281
      %p283 = scmp.ne.s32.totalorder %s275, %s277
      %p284 = scmp.eq.s32.totalorder %s36, 1
      %p285 = por %p283, %p284
      %p286 = scmp.ne.s32.totalorder %s277, %s278
      %p287 = scmp.eq.s32.totalorder %s36, 0
      %p288 = por %p286, %p287
      %p289 = scmp.ne.s32.totalorder %s277, %s278
      %p290 = scmp.eq.s32.totalorder %s37, 1
      %p291 = por %p289, %p290
      %p293 = scmp.ne.s32.totalorder %s278, %s292
      %p294 = scmp.eq.s32.totalorder %s37, 0
      %p295 = por %p293, %p294
      %s297 = sadd.s32 %s296, 1
      %p300 = scmp.eq.s32.totalorder %s31, 1
      %p301 = scmp.ne.s32.totalorder %s296, %s298
      %p302 = scmp.eq.s32.totalorder %s31, 0
      %p303 = por %p301, %p302
      %p304 = scmp.ne.s32.totalorder %s296, %s298
      %p305 = scmp.eq.s32.totalorder %s36, 1
      %p306 = por %p304, %p305
      %p307 = scmp.ne.s32.totalorder %s298, %s299
      %p308 = scmp.eq.s32.totalorder %s36, 0
      %p309 = por %p307, %p308
      %p310 = scmp.ne.s32.totalorder %s298, %s299
      %p311 = scmp.eq.s32.totalorder %s37, 1
      %p312 = por %p310, %p311
      %p314 = scmp.ne.s32.totalorder %s299, %s313
      %p315 = scmp.eq.s32.totalorder %s37, 0
      %p316 = por %p314, %p315
      %s317 = ssub.s32 %s31, %s38
      %p318 = scmp.eq.s32.totalorder %s317, 0
      %s320 = sadd.s32 %s319, 1
      %s321 = scalar_select %p318, %s319, %s320
      %p324 = pneg %p318
      %p325 = scmp.eq.s32.totalorder %s31, 1
      %p326 = por %p324, %p325
      %p327 = scmp.ne.s32.totalorder %s319, %s322
      %p328 = scmp.eq.s32.totalorder %s31, 0
      %p329 = por %p327, %p328
      %p330 = scmp.ne.s32.totalorder %s319, %s322
      %p331 = scmp.eq.s32.totalorder %s36, 1
      %p332 = por %p330, %p331
      %p333 = scmp.ne.s32.totalorder %s322, %s323
      %p334 = scmp.eq.s32.totalorder %s36, 0
      %p335 = por %p333, %p334
      %p336 = scmp.ne.s32.totalorder %s322, %s323
      %p337 = scmp.eq.s32.totalorder %s37, 1
      %p338 = por %p336, %p337
      %p340 = scmp.ne.s32.totalorder %s323, %s339
      %p341 = scmp.eq.s32.totalorder %s37, 0
      %p342 = por %p340, %p341
      %p343 = scmp.le.s32.totalorder 1, %s31
      %p344 = scmp.lt.s32.totalorder %s31, 3
      %p345 = pnand %p343, %p344
      %p346 = pneg %p345
      // Predicated region
      $region9: #{tpu_custom_call.1} parent=5 // pred_check
        _
      $region10: #{tpu_custom_call.1} parent=5 // pred_check_branch
        %348 = sbr.rel (%p345) target = $region12
      $region11: #{tpu_custom_call.1} parent=5 // pred_region
        %s349 = ssub.s32 %s31, 1
        // Predicated region
        $region13: #{tpu_custom_call.1} parent=11 // pred_check
          %p350 = pneg %p78
        $region14: #{tpu_custom_call.1} parent=11 // pred_check_branch
          %352 = sbr.rel (%p350) target = $region16
        $region15: #{tpu_custom_call.1} parent=11 // pred_region
          _
        $region16: #{tpu_custom_call.1} parent=11 // pred_fallthru
          _
        // Predicated region
        $region17: #{tpu_custom_call.1} parent=11 // pred_check
          %p353 = pneg %p99
        $region18: #{tpu_custom_call.1} parent=11 // pred_check_branch
          %355 = sbr.rel (%p353) target = $region20
        $region19: #{tpu_custom_call.1} parent=11 // pred_region
          _
        $region20: #{tpu_custom_call.1} parent=11 // pred_fallthru
          _
        // Predicated region
        $region21: #{tpu_custom_call.1} parent=11 // pred_check
          %p356 = pneg %p120
        $region22: #{tpu_custom_call.1} parent=11 // pred_check_branch
          %358 = sbr.rel (%p356) target = $region24
        $region23: #{tpu_custom_call.1} parent=11 // pred_region
          _
        $region24: #{tpu_custom_call.1} parent=11 // pred_fallthru
          _
        // Predicated region
        $region25: #{tpu_custom_call.1} parent=11 // pred_check
          %p359 = pneg %p141
        $region26: #{tpu_custom_call.1} parent=11 // pred_check_branch
          %361 = sbr.rel (%p359) target = $region28
        $region27: #{tpu_custom_call.1} parent=11 // pred_region
          _
        $region28: #{tpu_custom_call.1} parent=11 // pred_fallthru
          _
        // Predicated region
        $region29: #{tpu_custom_call.1} parent=11 // pred_check
          %p362 = pneg %p162
        $region30: #{tpu_custom_call.1} parent=11 // pred_check_branch
          %364 = sbr.rel (%p362) target = $region32
        $region31: #{tpu_custom_call.1} parent=11 // pred_region
          _
        $region32: #{tpu_custom_call.1} parent=11 // pred_fallthru
          _
        // Predicated region
        $region33: #{tpu_custom_call.1} parent=11 // pred_check
          %p365 = pneg %p183
        $region34: #{tpu_custom_call.1} parent=11 // pred_check_branch
          %367 = sbr.rel (%p365) target = $region36
        $region35: #{tpu_custom_call.1} parent=11 // pred_region
          _
        $region36: #{tpu_custom_call.1} parent=11 // pred_fallthru
          _
        // Predicated region
        $region37: #{tpu_custom_call.1} parent=11 // pred_check
          %p368 = pneg %p204
        $region38: #{tpu_custom_call.1} parent=11 // pred_check_branch
          %370 = sbr.rel (%p368) target = $region40
        $region39: #{tpu_custom_call.1} parent=11 // pred_region
          _
        $region40: #{tpu_custom_call.1} parent=11 // pred_fallthru
          _
        // Predicated region
        $region41: #{tpu_custom_call.1} parent=11 // pred_check
          %p371 = pneg %p225
        $region42: #{tpu_custom_call.1} parent=11 // pred_check_branch
          %373 = sbr.rel (%p371) target = $region44
        $region43: #{tpu_custom_call.1} parent=11 // pred_region
          _
        $region44: #{tpu_custom_call.1} parent=11 // pred_fallthru
          _
        // Predicated region
        $region45: #{tpu_custom_call.1} parent=11 // pred_check
          %p374 = pneg %p246
        $region46: #{tpu_custom_call.1} parent=11 // pred_check_branch
          %376 = sbr.rel (%p374) target = $region48
        $region47: #{tpu_custom_call.1} parent=11 // pred_region
          _
        $region48: #{tpu_custom_call.1} parent=11 // pred_fallthru
          _
        // Predicated region
        $region49: #{tpu_custom_call.1} parent=11 // pred_check
          %p377 = pneg %p267
        $region50: #{tpu_custom_call.1} parent=11 // pred_check_branch
          %379 = sbr.rel (%p377) target = $region52
        $region51: #{tpu_custom_call.1} parent=11 // pred_region
          _
        $region52: #{tpu_custom_call.1} parent=11 // pred_fallthru
          _
        // Predicated region
        $region53: #{tpu_custom_call.1} parent=11 // pred_check
          %p380 = pneg %p288
        $region54: #{tpu_custom_call.1} parent=11 // pred_check_branch
          %382 = sbr.rel (%p380) target = $region56
        $region55: #{tpu_custom_call.1} parent=11 // pred_region
          _
        $region56: #{tpu_custom_call.1} parent=11 // pred_fallthru
          _
        // Predicated region
        $region57: #{tpu_custom_call.1} parent=11 // pred_check
          %p383 = pneg %p309
        $region58: #{tpu_custom_call.1} parent=11 // pred_check_branch
          %385 = sbr.rel (%p383) target = $region60
        $region59: #{tpu_custom_call.1} parent=11 // pred_region
          _
        $region60: #{tpu_custom_call.1} parent=11 // pred_fallthru
          _
      $region12: #{tpu_custom_call.1} parent=5 // pred_fallthru
        _
      %p386 = scmp.lt.s32.totalorder %s31, 2
      // Predicated region
      $region61: #{tpu_custom_call.1} parent=5 // pred_check
        %p387 = pneg %p386
      $region62: #{tpu_custom_call.1} parent=5 // pred_check_branch
        %389 = sbr.rel (%p387) target = $region64
      $region63: #{tpu_custom_call.1} parent=5 // pred_region
        // Predicated region
        $region65: #{tpu_custom_call.1} parent=63 // pred_check
          %p390 = pneg %p51
        $region66: #{tpu_custom_call.1} parent=63 // pred_check_branch
          %392 = sbr.rel (%p390) target = $region68
        $region67: #{tpu_custom_call.1} parent=63 // pred_region
          %p393 = scmp.lt.s32.totalorder %s31, 1
          %s394 = scalar_select %p393, %s31, 1
          %s395 = smul.addr %s394, 4
          %s396 = scalar_lea.vmem %s1, %s395
        $region68: #{tpu_custom_call.1} parent=63 // pred_fallthru
          _
      $region64: #{tpu_custom_call.1} parent=5 // pred_fallthru
        _
      %p397 = scmp.le.s32.totalorder 1, %s31
      %p398 = scmp.lt.s32.totalorder %s31, 3
      %p399 = pnand %p397, %p398
      %p400 = pneg %p399
      // Predicated region
      $region69: #{tpu_custom_call.1} parent=5 // pred_check
        _
      $region70: #{tpu_custom_call.1} parent=5 // pred_check_branch
        %402 = sbr.rel (%p399) target = $region72
      $region71: #{tpu_custom_call.1} parent=5 // pred_region
        %s403 = ssub.s32 %s31, 1
        %p404 = scmp.lt.s32.totalorder %s36, 1
        %s405 = scalar_select %p404, %s36, 1
        %s406 = smul.addr %s405, 4
        %s407 = scalar_lea.vmem %s1, %s406
        %p408 = pneg %p57
        %p409 = pneg %p54
        %p410 = pneg %p78
        %p411 = pneg %p75
        %p412 = pneg %p99
        %p413 = pneg %p96
        %p414 = pneg %p120
        %p415 = pneg %p117
        %p416 = pneg %p141
        %p417 = pneg %p138
        %p418 = pneg %p162
        %p419 = pneg %p159
        %p420 = pneg %p183
        %p421 = pneg %p180
        %p422 = pneg %p204
        %p423 = pneg %p201
        %p424 = pneg %p225
        %p425 = pneg %p222
        %p426 = pneg %p246
        %p427 = pneg %p243
        %p428 = pneg %p267
        %p429 = pneg %p264
        %p430 = pneg %p288
        %p431 = pneg %p285
        %p432 = pneg %p309
        %p433 = pneg %p306
        %p434 = pneg %p335
        %p435 = pneg %p332
        %s436 = sand.u32 %s322, 1
        %s437 = scalar_lea.sflag [#allocation5], %s436
        %s438 = sand.u32 %s322, 1
        %s439 = smul.addr %s438, 4
        %s440 = scalar_lea.vmem [#allocation4], %s439
        %p441 = scmp.lt.s32.totalorder %s36, 1
        %s442 = scalar_select %p441, %s36, 1
        %s443 = smul.addr %s442, 4
        %s444 = scalar_lea.vmem %s1, %s443
        %v446 = vld [vmem:[%s444] sm:$0xf]
        %v447 = vld [vmem:[%s2] sm:$0xf]
        %v448 = vld [vmem:[%s2 + $0x4] sm:$0xf]
        %v449 = vld [vmem:[%s2 + $0x8] sm:$0xf]
        %v450 = vld [vmem:[%s2 + $0xc] sm:$0xf]
        %v455 = vunpack.c.l.b16 %v447
        %v456 = vunpack.c.l.b16 %v448
        %v457 = vunpack.c.l.b16 %v449
        %v458 = vunpack.c.l.b16 %v450
        %v459 = vpack.c.b16 %v456, %v455
        %v460 = vpack.c.b16 %v458, %v457
        %vm463 = vcmask 261120
        %v465 = vsel %vm463, %v446, 0
        %467 = vmatpush.bf16.msra.mxu0 0
        %468 = vmatpush.bf16.msra.mxu0 0
        %469 = vmatpush.bf16.msra.mxu0 0
        %470 = vmatpush.bf16.msra.mxu0 0
        %471 = vmatpush.bf16.msra.mxu0 0
        %472 = vmatpush.bf16.msra.mxu0 0
        %473 = vmatpush.bf16.msra.mxu0 %v460
        %474 = vmatpush.bf16.msra.mxu0 %v459
        %475 = vmatmul.bf16.gmra.mxu0 %v465
        %v476 = vpop.f32.mrf.mxu0
        %v477 = vadd.f32 0.0, %v476
        %v478 = vpop.f32.mrf.mxu0
        %479 = vdwg.mxu0
        %v480 = vmul.f32 %v477, 0.35355338
        %482 = vrot.lane.b32.xlu0 %v480, 120
        %v483 = vpop.permute.xlu0 %482
        %485 = vrot.lane.b32.xlu0 %v480, 112
        %v486 = vpop.permute.xlu0 %485
        %488 = vrot.lane.b32.xlu0 %v480, 104
        %v489 = vpop.permute.xlu0 %488
        %v491 = vpack.c.bf16 %v480, %v480
        %v492 = vpack.c.bf16 %v483, %v483
        %v493 = vpack.c.bf16 %v486, %v486
        %v494 = vpack.c.bf16 %v489, %v489
        %496 = vrot.lane.b32.xlu0 %v477, 120
        %v497 = vpop.permute.xlu0 %496
        %499 = vrot.lane.b32.xlu0 %v477, 112
        %v500 = vpop.permute.xlu0 %499
        %502 = vrot.lane.b32.xlu0 %v477, 104
        %v503 = vpop.permute.xlu0 %502
        %v505 = vpack.c.bf16 %v477, %v477
        %v506 = vpack.c.bf16 %v497, %v497
        %v507 = vpack.c.bf16 %v500, %v500
        %v508 = vpack.c.bf16 %v503, %v503
        %v509 = vld [vmem:[%s4] sm:$0xf]
        %v510 = vld [vmem:[%s4 + $0x4] sm:$0x1]
        %v515 = vunpack.c.l.b16 %v491
        %v516 = vunpack.c.l.b16 %v492
        %v517 = vunpack.c.l.b16 %v493
        %v518 = vunpack.c.l.b16 %v494
        %v519 = vpack.c.b16 %v516, %v515
        %v520 = vpack.c.b16 %v518, %v517
        %v523 = vunpack.c.l.b16 %v509
        %v524 = vunpack.c.l.b16 %v510
        %v525 = vpack.c.b16 %v524, %v523
        %vm526 = vcmask 64512
        %v528 = vsel %vm526, %v519, 0
        %v531 = vsel %vm526, %v520, 0
        %v534 = vsel %vm526, %v525, 0
        %536 = vmatpush.bf16.xpose.msra.mxu0 0
        %537 = vmatpush.bf16.xpose.msra.mxu0 0
        %538 = vmatpush.bf16.xpose.msra.mxu0 0
        %539 = vmatpush.bf16.xpose.msra.mxu0 0
        %540 = vmatpush.bf16.xpose.msra.mxu0 0
        %541 = vmatpush.bf16.xpose.msra.mxu0 0
        %542 = vmatpush.bf16.xpose.msra.mxu0 0
        %543 = vmatpush.bf16.xpose.msra.mxu0 %v534
        %544 = vmatmul.bf16.gmra.mxu0 %v528
        %v545 = vpop.f32.mrf.mxu0
        %v546 = vadd.f32 0.0, %v545
        %v547 = vpop.f32.mrf.mxu0
        %v548 = vadd.f32 0.0, %v547
        %549 = vmatmul.bf16.gmra.mxu0 %v531
        %v550 = vpop.f32.mrf.mxu0
        %v551 = vadd.f32 0.0, %v550
        %v552 = vpop.f32.mrf.mxu0
        %v553 = vadd.f32 0.0, %v552
        %554 = vdwg.mxu0
        %v555 = vlaneseq
        %v556 = vshrl.u32 %v555, 7
        %v557 = vlaneseq
        %v558 = vand.u32 %v557, 127
        %v559 = vsub.s32 %v558, %v556
        %vm560 = vcmp.eq.s32.totalorder %v559, 3
        %v561 = vsel %vm560, 1, 0
        %vm562 = vcmp.eq.s32.totalorder %v561, 1
        %564 = vset.pattern.permute.xlu0 7
        %565 = vperm.xlu0 %564, %v546
        %v566 = vpop.permute.xlu0 %565
        %569 = vset.pattern.permute.xlu0 7
        %570 = vperm.xlu0 %569, %v548
        %v571 = vpop.permute.xlu0 %570
        %574 = vset.pattern.permute.xlu0 7
        %575 = vperm.xlu0 %574, %v551
        %v576 = vpop.permute.xlu0 %575
        %579 = vset.pattern.permute.xlu0 7
        %580 = vperm.xlu0 %579, %v553
        %v581 = vpop.permute.xlu0 %580
        %583 = vset.pattern.permute.xlu0 8
        %584 = vperm.xlu0 %583, %v546
        %v585 = vpop.permute.xlu0 %584
        %587 = vset.pattern.permute.xlu0 8
        %588 = vperm.xlu0 %587, %v548
        %v589 = vpop.permute.xlu0 %588
        %591 = vset.pattern.permute.xlu0 8
        %592 = vperm.xlu0 %591, %v551
        %v593 = vpop.permute.xlu0 %592
        %595 = vset.pattern.permute.xlu0 8
        %596 = vperm.xlu0 %595, %v553
        %v597 = vpop.permute.xlu0 %596
        %v599 = vsel %vm562, %v566, %v585
        %v600 = vsel %vm562, %v571, %v589
        %v601 = vsel %vm562, %v576, %v593
        %v602 = vsel %vm562, %v581, %v597
        %vm603 = vcmp.eq.s32.totalorder %v559, 2
        %v604 = vsel %vm603, 1, 0
        %vm605 = vcmp.eq.s32.totalorder %v604, 1
        %606 = vset.pattern.permute.xlu0 6
        %607 = vperm.xlu0 %606, %v546
        %v608 = vpop.permute.xlu0 %607
        %610 = vset.pattern.permute.xlu0 6
        %611 = vperm.xlu0 %610, %v548
        %v612 = vpop.permute.xlu0 %611
        %614 = vset.pattern.permute.xlu0 6
        %615 = vperm.xlu0 %614, %v551
        %v616 = vpop.permute.xlu0 %615
        %618 = vset.pattern.permute.xlu0 6
        %619 = vperm.xlu0 %618, %v553
        %v620 = vpop.permute.xlu0 %619
        %v622 = vsel %vm605, %v608, %v599
        %v623 = vsel %vm605, %v612, %v600
        %v624 = vsel %vm605, %v616, %v601
        %v625 = vsel %vm605, %v620, %v602
        %vm626 = vcmp.eq.s32.totalorder %v559, 1
        %v627 = vsel %vm626, 1, 0
        %vm628 = vcmp.eq.s32.totalorder %v627, 1
        %629 = vset.pattern.permute.xlu0 5
        %630 = vperm.xlu0 %629, %v546
        %v631 = vpop.permute.xlu0 %630
        %633 = vset.pattern.permute.xlu0 5
        %634 = vperm.xlu0 %633, %v548
        %v635 = vpop.permute.xlu0 %634
        %637 = vset.pattern.permute.xlu0 5
        %638 = vperm.xlu0 %637, %v551
        %v639 = vpop.permute.xlu0 %638
        %641 = vset.pattern.permute.xlu0 5
        %642 = vperm.xlu0 %641, %v553
        %v643 = vpop.permute.xlu0 %642
        %v645 = vsel %vm628, %v631, %v622
        %v646 = vsel %vm628, %v635, %v623
        %v647 = vsel %vm628, %v639, %v624
        %v648 = vsel %vm628, %v643, %v625
        %vm649 = vcmp.eq.s32.totalorder %v559, 0
        %v650 = vsel %vm649, 1, 0
        %vm651 = vcmp.eq.s32.totalorder %v650, 1
        %652 = vset.pattern.permute.xlu0 4
        %653 = vperm.xlu0 %652, %v546
        %v654 = vpop.permute.xlu0 %653
        %656 = vset.pattern.permute.xlu0 4
        %657 = vperm.xlu0 %656, %v548
        %v658 = vpop.permute.xlu0 %657
        %660 = vset.pattern.permute.xlu0 4
        %661 = vperm.xlu0 %660, %v551
        %v662 = vpop.permute.xlu0 %661
        %664 = vset.pattern.permute.xlu0 4
        %665 = vperm.xlu0 %664, %v553
        %v666 = vpop.permute.xlu0 %665
        %v668 = vsel %vm651, %v654, %v645
        %v669 = vsel %vm651, %v658, %v646
        %v670 = vsel %vm651, %v662, %v647
        %v671 = vsel %vm651, %v666, %v648
        %vm672 = vcmp.eq.s32.totalorder %v559, 4294967295
        %v673 = vsel %vm672, 1, 0
        %vm674 = vcmp.eq.s32.totalorder %v673, 1
        %675 = vset.pattern.permute.xlu0 3
        %676 = vperm.xlu0 %675, %v546
        %v677 = vpop.permute.xlu0 %676
        %679 = vset.pattern.permute.xlu0 3
        %680 = vperm.xlu0 %679, %v548
        %v681 = vpop.permute.xlu0 %680
        %683 = vset.pattern.permute.xlu0 3
        %684 = vperm.xlu0 %683, %v551
        %v685 = vpop.permute.xlu0 %684
        %687 = vset.pattern.permute.xlu0 3
        %688 = vperm.xlu0 %687, %v553
        %v689 = vpop.permute.xlu0 %688
        %v691 = vsel %vm674, %v677, %v668
        %v692 = vsel %vm674, %v681, %v669
        %v693 = vsel %vm674, %v685, %v670
        %v694 = vsel %vm674, %v689, %v671
        %vm695 = vcmp.eq.s32.totalorder %v559, 4294967294
        %v696 = vsel %vm695, 1, 0
        %vm697 = vcmp.eq.s32.totalorder %v696, 1
        %698 = vset.pattern.permute.xlu0 2
        %699 = vperm.xlu0 %698, %v546
        %v700 = vpop.permute.xlu0 %699
        %702 = vset.pattern.permute.xlu0 2
        %703 = vperm.xlu0 %702, %v548
        %v704 = vpop.permute.xlu0 %703
        %706 = vset.pattern.permute.xlu0 2
        %707 = vperm.xlu0 %706, %v551
        %v708 = vpop.permute.xlu0 %707
        %710 = vset.pattern.permute.xlu0 2
        %711 = vperm.xlu0 %710, %v553
        %v712 = vpop.permute.xlu0 %711
        %v714 = vsel %vm697, %v700, %v691
        %v715 = vsel %vm697, %v704, %v692
        %v716 = vsel %vm697, %v708, %v693
        %v717 = vsel %vm697, %v712, %v694
        %vm718 = vcmp.eq.s32.totalorder %v559, 4294967293
        %v719 = vsel %vm718, 1, 0
        %vm720 = vcmp.eq.s32.totalorder %v719, 1
        %721 = vset.pattern.permute.xlu0 1
        %722 = vperm.xlu0 %721, %v546
        %v723 = vpop.permute.xlu0 %722
        %725 = vset.pattern.permute.xlu0 1
        %726 = vperm.xlu0 %725, %v548
        %v727 = vpop.permute.xlu0 %726
        %729 = vset.pattern.permute.xlu0 1
        %730 = vperm.xlu0 %729, %v551
        %v731 = vpop.permute.xlu0 %730
        %733 = vset.pattern.permute.xlu0 1
        %734 = vperm.xlu0 %733, %v553
        %v735 = vpop.permute.xlu0 %734
        %v737 = vsel %vm720, %v723, %v714
        %v738 = vsel %vm720, %v727, %v715
        %v739 = vsel %vm720, %v731, %v716
        %v740 = vsel %vm720, %v735, %v717
        %vm741 = vcmp.le.s32.totalorder %v559, 4294967292
        %v742 = vsel %vm741, 1, 0
        %vm743 = vcmp.eq.s32.totalorder %v742, 1
        %744 = vset.pattern.permute.xlu0 0
        %745 = vperm.xlu0 %744, %v546
        %v746 = vpop.permute.xlu0 %745
        %748 = vset.pattern.permute.xlu0 0
        %749 = vperm.xlu0 %748, %v548
        %v750 = vpop.permute.xlu0 %749
        %752 = vset.pattern.permute.xlu0 0
        %753 = vperm.xlu0 %752, %v551
        %v754 = vpop.permute.xlu0 %753
        %756 = vset.pattern.permute.xlu0 0
        %757 = vperm.xlu0 %756, %v553
        %v758 = vpop.permute.xlu0 %757
        %v760 = vsel %vm743, %v746, %v737
        %v761 = vsel %vm743, %v750, %v738
        %v762 = vsel %vm743, %v754, %v739
        %v763 = vsel %vm743, %v758, %v740
        %v765 = vunpack.c.l.b16 %v505
        %v766 = vpack.c.b16 %v765, %v765
        %767 = vrot.lane.b32.xlu0 %v766, 96
        %v768 = vpop.permute.xlu0 %767
        %v770 = vsel %vm526, %v491, 0
        %v773 = vsel %vm526, %v768, 0
        %775 = vmatpush.bf16.xpose.msra.mxu0 0
        %776 = vmatpush.bf16.xpose.msra.mxu0 0
        %777 = vmatpush.bf16.xpose.msra.mxu0 0
        %778 = vmatpush.bf16.xpose.msra.mxu0 0
        %779 = vmatpush.bf16.xpose.msra.mxu0 0
        %780 = vmatpush.bf16.xpose.msra.mxu0 0
        %781 = vmatpush.bf16.xpose.msra.mxu0 0
        %782 = vmatpush.bf16.xpose.msra.mxu0 %v773
        %783 = vmatmul.bf16.gmra.mxu0 %v770
        %v784 = vpop.f32.mrf.mxu0
        %v785 = vadd.f32 %v760, %v784
        %v786 = vpop.f32.mrf.mxu0
        %787 = vdwg.mxu0
        %v789 = vunpack.c.l.b16 %v506
        %v790 = vpack.c.b16 %v789, %v789
        %791 = vrot.lane.b32.xlu0 %v790, 96
        %v792 = vpop.permute.xlu0 %791
        %v794 = vsel %vm526, %v492, 0
        %v797 = vsel %vm526, %v792, 0
        %799 = vmatpush.bf16.xpose.msra.mxu0 0
        %800 = vmatpush.bf16.xpose.msra.mxu0 0
        %801 = vmatpush.bf16.xpose.msra.mxu0 0
        %802 = vmatpush.bf16.xpose.msra.mxu0 0
        %803 = vmatpush.bf16.xpose.msra.mxu0 0
        %804 = vmatpush.bf16.xpose.msra.mxu0 0
        %805 = vmatpush.bf16.xpose.msra.mxu0 0
        %806 = vmatpush.bf16.xpose.msra.mxu0 %v797
        %807 = vmatmul.bf16.gmra.mxu0 %v794
        %v808 = vpop.f32.mrf.mxu0
        %v809 = vadd.f32 %v761, %v808
        %v810 = vpop.f32.mrf.mxu0
        %811 = vdwg.mxu0
        %v813 = vunpack.c.l.b16 %v507
        %v814 = vpack.c.b16 %v813, %v813
        %815 = vrot.lane.b32.xlu0 %v814, 96
        %v816 = vpop.permute.xlu0 %815
        %v818 = vsel %vm526, %v493, 0
        %v821 = vsel %vm526, %v816, 0
        %823 = vmatpush.bf16.xpose.msra.mxu0 0
        %824 = vmatpush.bf16.xpose.msra.mxu0 0
        %825 = vmatpush.bf16.xpose.msra.mxu0 0
        %826 = vmatpush.bf16.xpose.msra.mxu0 0
        %827 = vmatpush.bf16.xpose.msra.mxu0 0
        %828 = vmatpush.bf16.xpose.msra.mxu0 0
        %829 = vmatpush.bf16.xpose.msra.mxu0 0
        %830 = vmatpush.bf16.xpose.msra.mxu0 %v821
        %831 = vmatmul.bf16.gmra.mxu0 %v818
        %v832 = vpop.f32.mrf.mxu0
        %v833 = vadd.f32 %v762, %v832
        %v834 = vpop.f32.mrf.mxu0
        %835 = vdwg.mxu0
        %v837 = vunpack.c.l.b16 %v508
        %v838 = vpack.c.b16 %v837, %v837
        %839 = vrot.lane.b32.xlu0 %v838, 96
        %v840 = vpop.permute.xlu0 %839
        %v842 = vsel %vm526, %v494, 0
        %v845 = vsel %vm526, %v840, 0
        %847 = vmatpush.bf16.xpose.msra.mxu0 0
        %848 = vmatpush.bf16.xpose.msra.mxu0 0
        %849 = vmatpush.bf16.xpose.msra.mxu0 0
        %850 = vmatpush.bf16.xpose.msra.mxu0 0
        %851 = vmatpush.bf16.xpose.msra.mxu0 0
        %852 = vmatpush.bf16.xpose.msra.mxu0 0
        %853 = vmatpush.bf16.xpose.msra.mxu0 0
        %854 = vmatpush.bf16.xpose.msra.mxu0 %v845
        %855 = vmatmul.bf16.gmra.mxu0 %v842
        %v856 = vpop.f32.mrf.mxu0
        %v857 = vadd.f32 %v763, %v856
        %v858 = vpop.f32.mrf.mxu0
        %859 = vdwg.mxu0
        %s860 = sld [smem:[#allocation3 + %s36]]
        %v861 = vstv %s860
        %vm862 = vcmp.lt.s32.totalorder %v558, %v861
        %v863 = vsel %vm862, 1, 0
        %vm864 = vcmp.eq.s32.totalorder %v863, 1
        %v865 = vsel %vm864, %v785, -1000000.0
        %v866 = vsel %vm864, %v809, -1000000.0
        %v867 = vsel %vm864, %v833, -1000000.0
        %v868 = vsel %vm864, %v857, -1000000.0
        %v869 = vsel %vm526, %v865, -inf
        %870 = vmax.xlane.f32.xlu0 %v869
        %v871 = vpop.xlane.xlu0 %870
        %v872 = vsel %vm526, %v866, -inf
        %873 = vmax.xlane.f32.xlu0 %v872
        %v874 = vpop.xlane.xlu0 %873
        %v875 = vsel %vm526, %v867, -inf
        %876 = vmax.xlane.f32.xlu0 %v875
        %v877 = vpop.xlane.xlu0 %876
        %v878 = vsel %vm526, %v868, -inf
        %879 = vmax.xlane.f32.xlu0 %v878
        %v880 = vpop.xlane.xlu0 %879
        %v881 = vsub.f32 %v865, %v871
        %v882 = vsub.f32 %v866, %v874
        %v883 = vsub.f32 %v867, %v877
        %v884 = vsub.f32 %v868, %v880
        %v885 = vmul.f32 %v881, 1.442695
        %v886 = vpow.pop %v885
        %v887 = vmul.f32 %v882, 1.442695
        %v888 = vpow.pop %v887
        %v889 = vmul.f32 %v883, 1.442695
        %v890 = vpow.pop %v889
        %v891 = vmul.f32 %v884, 1.442695
        %v892 = vpow.pop %v891
        %v893 = vsel %vm526, %v886, 0.0
        %894 = vadd.xlane.f32.xlu0 %v893
        %v895 = vpop.xlane.xlu0 %894
        %v896 = vsel %vm526, %v888, 0.0
        %897 = vadd.xlane.f32.xlu0 %v896
        %v898 = vpop.xlane.xlu0 %897
        %v899 = vsel %vm526, %v890, 0.0
        %900 = vadd.xlane.f32.xlu0 %v899
        %v901 = vpop.xlane.xlu0 %900
        %v902 = vsel %vm526, %v892, 0.0
        %903 = vadd.xlane.f32.xlu0 %v902
        %v904 = vpop.xlane.xlu0 %903
        %v905 = vpack.c.bf16 %v886, %v886
        %v906 = vpack.c.bf16 %v888, %v888
        %v907 = vpack.c.bf16 %v890, %v890
        %v908 = vpack.c.bf16 %v892, %v892
        %v909 = vsel %vm743, %v886, 0.0
        %v910 = vsel %vm743, %v888, 0.0
        %v911 = vsel %vm743, %v890, 0.0
        %v912 = vsel %vm743, %v892, 0.0
        %v913 = vsel %vm526, %v909, 0.0
        %914 = vadd.xlane.f32.xlu0 %v913
        %v915 = vpop.xlane.xlu0 %914
        %v916 = vsel %vm526, %v910, 0.0
        %917 = vadd.xlane.f32.xlu0 %v916
        %v918 = vpop.xlane.xlu0 %917
        %v919 = vsel %vm526, %v911, 0.0
        %920 = vadd.xlane.f32.xlu0 %v919
        %v921 = vpop.xlane.xlu0 %920
        %v922 = vsel %vm526, %v912, 0.0
        %923 = vadd.xlane.f32.xlu0 %v922
        %v924 = vpop.xlane.xlu0 %923
        %v925 = vsel %vm720, %v886, 0.0
        %v926 = vsel %vm720, %v888, 0.0
        %v927 = vsel %vm720, %v890, 0.0
        %v928 = vsel %vm720, %v892, 0.0
        %v929 = vsel %vm526, %v925, 0.0
        %930 = vadd.xlane.f32.xlu0 %v929
        %v931 = vpop.xlane.xlu0 %930
        %v932 = vsel %vm526, %v926, 0.0
        %933 = vadd.xlane.f32.xlu0 %v932
        %v934 = vpop.xlane.xlu0 %933
        %v935 = vsel %vm526, %v927, 0.0
        %936 = vadd.xlane.f32.xlu0 %v935
        %v937 = vpop.xlane.xlu0 %936
        %v938 = vsel %vm526, %v928, 0.0
        %939 = vadd.xlane.f32.xlu0 %v938
        %v940 = vpop.xlane.xlu0 %939
        %v941 = vadd.f32 %v915, %v931
        %v942 = vadd.f32 %v918, %v934
        %v943 = vadd.f32 %v921, %v937
        %v944 = vadd.f32 %v924, %v940
        %v945 = vsel %vm697, %v886, 0.0
        %v946 = vsel %vm697, %v888, 0.0
        %v947 = vsel %vm697, %v890, 0.0
        %v948 = vsel %vm697, %v892, 0.0
        %v949 = vsel %vm526, %v945, 0.0
        %950 = vadd.xlane.f32.xlu0 %v949
        %v951 = vpop.xlane.xlu0 %950
        %v952 = vsel %vm526, %v946, 0.0
        %953 = vadd.xlane.f32.xlu0 %v952
        %v954 = vpop.xlane.xlu0 %953
        %v955 = vsel %vm526, %v947, 0.0
        %956 = vadd.xlane.f32.xlu0 %v955
        %v957 = vpop.xlane.xlu0 %956
        %v958 = vsel %vm526, %v948, 0.0
        %959 = vadd.xlane.f32.xlu0 %v958
        %v960 = vpop.xlane.xlu0 %959
        %v961 = vadd.f32 %v941, %v951
        %v962 = vadd.f32 %v942, %v954
        %v963 = vadd.f32 %v943, %v957
        %v964 = vadd.f32 %v944, %v960
        %v965 = vsel %vm674, %v886, 0.0
        %v966 = vsel %vm674, %v888, 0.0
        %v967 = vsel %vm674, %v890, 0.0
        %v968 = vsel %vm674, %v892, 0.0
        %v969 = vsel %vm526, %v965, 0.0
        %970 = vadd.xlane.f32.xlu0 %v969
        %v971 = vpop.xlane.xlu0 %970
        %v972 = vsel %vm526, %v966, 0.0
        %973 = vadd.xlane.f32.xlu0 %v972
        %v974 = vpop.xlane.xlu0 %973
        %v975 = vsel %vm526, %v967, 0.0
        %976 = vadd.xlane.f32.xlu0 %v975
        %v977 = vpop.xlane.xlu0 %976
        %v978 = vsel %vm526, %v968, 0.0
        %979 = vadd.xlane.f32.xlu0 %v978
        %v980 = vpop.xlane.xlu0 %979
        %v981 = vadd.f32 %v961, %v971
        %v982 = vadd.f32 %v962, %v974
        %v983 = vadd.f32 %v963, %v977
        %v984 = vadd.f32 %v964, %v980
        %v985 = vsel %vm628, %v886, 0.0
        %v986 = vsel %vm628, %v888, 0.0
        %v987 = vsel %vm628, %v890, 0.0
        %v988 = vsel %vm628, %v892, 0.0
        %v989 = vsel %vm526, %v985, 0.0
        %990 = vadd.xlane.f32.xlu0 %v989
        %v991 = vpop.xlane.xlu0 %990
        %v992 = vsel %vm526, %v986, 0.0
        %993 = vadd.xlane.f32.xlu0 %v992
        %v994 = vpop.xlane.xlu0 %993
        %v995 = vsel %vm526, %v987, 0.0
        %996 = vadd.xlane.f32.xlu0 %v995
        %v997 = vpop.xlane.xlu0 %996
        %v998 = vsel %vm526, %v988, 0.0
        %999 = vadd.xlane.f32.xlu0 %v998
        %v1000 = vpop.xlane.xlu0 %999
        %v1001 = vadd.f32 %v981, %v991
        %v1002 = vadd.f32 %v982, %v994
        %v1003 = vadd.f32 %v983, %v997
        %v1004 = vadd.f32 %v984, %v1000
        %v1005 = vsel %vm605, %v886, 0.0
        %v1006 = vsel %vm605, %v888, 0.0
        %v1007 = vsel %vm605, %v890, 0.0
        %v1008 = vsel %vm605, %v892, 0.0
        %v1009 = vsel %vm526, %v1005, 0.0
        %1010 = vadd.xlane.f32.xlu0 %v1009
        %v1011 = vpop.xlane.xlu0 %1010
        %v1012 = vsel %vm526, %v1006, 0.0
        %1013 = vadd.xlane.f32.xlu0 %v1012
        %v1014 = vpop.xlane.xlu0 %1013
        %v1015 = vsel %vm526, %v1007, 0.0
        %1016 = vadd.xlane.f32.xlu0 %v1015
        %v1017 = vpop.xlane.xlu0 %1016
        %v1018 = vsel %vm526, %v1008, 0.0
        %1019 = vadd.xlane.f32.xlu0 %v1018
        %v1020 = vpop.xlane.xlu0 %1019
        %v1021 = vadd.f32 %v1001, %v1011
        %v1022 = vadd.f32 %v1002, %v1014
        %v1023 = vadd.f32 %v1003, %v1017
        %v1024 = vadd.f32 %v1004, %v1020
        %v1025 = vsel %vm562, %v886, 0.0
        %v1026 = vsel %vm562, %v888, 0.0
        %v1027 = vsel %vm562, %v890, 0.0
        %v1028 = vsel %vm562, %v892, 0.0
        %v1029 = vsel %vm526, %v1025, 0.0
        %1030 = vadd.xlane.f32.xlu0 %v1029
        %v1031 = vpop.xlane.xlu0 %1030
        %v1032 = vsel %vm526, %v1026, 0.0
        %1033 = vadd.xlane.f32.xlu0 %v1032
        %v1034 = vpop.xlane.xlu0 %1033
        %v1035 = vsel %vm526, %v1027, 0.0
        %1036 = vadd.xlane.f32.xlu0 %v1035
        %v1037 = vpop.xlane.xlu0 %1036
        %v1038 = vsel %vm526, %v1028, 0.0
        %1039 = vadd.xlane.f32.xlu0 %v1038
        %v1040 = vpop.xlane.xlu0 %1039
        %v1041 = vadd.f32 %v1021, %v1031
        %v1042 = vadd.f32 %v1022, %v1034
        %v1043 = vadd.f32 %v1023, %v1037
        %v1044 = vadd.f32 %v1024, %v1040
        %vm1045 = vcmp.ge.s32.totalorder %v559, 4
        %v1046 = vsel %vm1045, 1, 0
        %vm1047 = vcmp.eq.s32.totalorder %v1046, 1
        %v1048 = vsel %vm1047, %v886, 0.0
        %v1049 = vsel %vm1047, %v888, 0.0
        %v1050 = vsel %vm1047, %v890, 0.0
        %v1051 = vsel %vm1047, %v892, 0.0
        %v1052 = vsel %vm526, %v1048, 0.0
        %1053 = vadd.xlane.f32.xlu0 %v1052
        %v1054 = vpop.xlane.xlu0 %1053
        %v1055 = vsel %vm526, %v1049, 0.0
        %1056 = vadd.xlane.f32.xlu0 %v1055
        %v1057 = vpop.xlane.xlu0 %1056
        %v1058 = vsel %vm526, %v1050, 0.0
        %1059 = vadd.xlane.f32.xlu0 %v1058
        %v1060 = vpop.xlane.xlu0 %1059
        %v1061 = vsel %vm526, %v1051, 0.0
        %1062 = vadd.xlane.f32.xlu0 %v1061
        %v1063 = vpop.xlane.xlu0 %1062
        %v1064 = vadd.f32 %v1041, %v1054
        %v1065 = vadd.f32 %v1042, %v1057
        %v1066 = vadd.f32 %v1043, %v1060
        %v1067 = vadd.f32 %v1044, %v1063
        %v1068 = vsub.f32 %v895, %v1064
        %v1069 = vsub.f32 %v898, %v1065
        %v1070 = vsub.f32 %v901, %v1066
        %v1071 = vsub.f32 %v904, %v1067
        %vm1072 = vcmask 7168
        %v1073 = vsel %vm1072, %v915, %v931
        %v1074 = vsel %vm1072, %v918, %v934
        %v1075 = vsel %vm1072, %v921, %v937
        %v1076 = vsel %vm1072, %v924, %v940
        %vm1077 = vcmask 15360
        %v1078 = vsel %vm1077, %v1073, %v951
        %v1079 = vsel %vm1077, %v1074, %v954
        %v1080 = vsel %vm1077, %v1075, %v957
        %v1081 = vsel %vm1077, %v1076, %v960
        %vm1082 = vcmask 23552
        %v1083 = vsel %vm1082, %v1078, %v971
        %v1084 = vsel %vm1082, %v1079, %v974
        %v1085 = vsel %vm1082, %v1080, %v977
        %v1086 = vsel %vm1082, %v1081, %v980
        %vm1087 = vcmask 31744
        %v1088 = vsel %vm1087, %v1083, %v1068
        %v1089 = vsel %vm1087, %v1084, %v1069
        %v1090 = vsel %vm1087, %v1085, %v1070
        %v1091 = vsel %vm1087, %v1086, %v1071
        %vm1092 = vcmask 39936
        %v1093 = vsel %vm1092, %v1088, %v991
        %v1094 = vsel %vm1092, %v1089, %v994
        %v1095 = vsel %vm1092, %v1090, %v997
        %v1096 = vsel %vm1092, %v1091, %v1000
        %vm1097 = vcmask 48128
        %v1098 = vsel %vm1097, %v1093, %v1011
        %v1099 = vsel %vm1097, %v1094, %v1014
        %v1100 = vsel %vm1097, %v1095, %v1017
        %v1101 = vsel %vm1097, %v1096, %v1020
        %vm1102 = vcmask 56320
        %v1103 = vsel %vm1102, %v1098, %v1031
        %v1104 = vsel %vm1102, %v1099, %v1034
        %v1105 = vsel %vm1102, %v1100, %v1037
        %v1106 = vsel %vm1102, %v1101, %v1040
        %v1107 = vsel %vm526, %v1103, %v1054
        %v1108 = vsel %vm526, %v1104, %v1057
        %v1109 = vsel %vm526, %v1105, %v1060
        %v1110 = vsel %vm526, %v1106, %v1063
        %v1111 = vpack.c.bf16 %v1107, %v1107
        %v1112 = vpack.c.bf16 %v1108, %v1108
        %v1113 = vpack.c.bf16 %v1109, %v1109
        %v1114 = vpack.c.bf16 %v1110, %v1110
        %v1115 = vld [vmem:[%s5] sm:$0xf]
        %v1116 = vld [vmem:[%s5 + $0x4] sm:$0x1]
        %v1121 = vunpack.c.l.b16 %v1111
        %v1122 = vunpack.c.l.b16 %v1112
        %v1123 = vunpack.c.l.b16 %v1113
        %v1124 = vunpack.c.l.b16 %v1114
        %v1125 = vpack.c.b16 %v1122, %v1121
        %v1126 = vpack.c.b16 %v1124, %v1123
        %v1129 = vunpack.c.l.b16 %v1115
        %v1130 = vunpack.c.l.b16 %v1116
        %v1131 = vpack.c.b16 %v1130, %v1129
        %vm1132 = vcmask 72704
        %v1134 = vsel %vm1132, %v1125, 0
        %v1137 = vsel %vm1132, %v1126, 0
        %vm1139 = vcmask 1043456
        %vm1140 = vcmask 1044480
        %v1141 = vsel %vm1139, 4294967295, 65535
        %v1142 = vsel %vm1140, %v1141, 0
        %v1144 = vand.u32 %v1131, %v1142
        %1146 = vmatpush.bf16.msra.mxu0 0
        %1147 = vmatpush.bf16.msra.mxu0 0
        %1148 = vmatpush.bf16.msra.mxu0 0
        %1149 = vmatpush.bf16.msra.mxu0 0
        %1150 = vmatpush.bf16.msra.mxu0 0
        %1151 = vmatpush.bf16.msra.mxu0 0
        %1152 = vmatpush.bf16.msra.mxu0 0
        %1153 = vmatpush.bf16.msra.mxu0 %v1144
        %1154 = vmatmul.bf16.gmra.mxu0 %v1134
        %v1155 = vpop.f32.mrf.mxu0
        %v1156 = vadd.f32 0.0, %v1155
        %v1157 = vpop.f32.mrf.mxu0
        %v1158 = vadd.f32 0.0, %v1157
        %1159 = vmatmul.bf16.gmra.mxu0 %v1137
        %v1160 = vpop.f32.mrf.mxu0
        %v1161 = vadd.f32 0.0, %v1160
        %v1162 = vpop.f32.mrf.mxu0
        %v1163 = vadd.f32 0.0, %v1162
        %1164 = vdwg.mxu0
        %1165 = vrot.lane.b32.xlu0 %v766, 64
        %v1166 = vpop.permute.xlu0 %1165
        %v1168 = vsel %vm526, %v905, 0
        %v1171 = vsel %vm1139, %v1166, 0
        %1173 = vmatpush.bf16.msra.mxu0 0
        %1174 = vmatpush.bf16.msra.mxu0 0
        %1175 = vmatpush.bf16.msra.mxu0 0
        %1176 = vmatpush.bf16.msra.mxu0 0
        %1177 = vmatpush.bf16.msra.mxu0 0
        %1178 = vmatpush.bf16.msra.mxu0 0
        %1179 = vmatpush.bf16.msra.mxu0 0
        %1180 = vmatpush.bf16.msra.mxu0 %v1171
        %1181 = vmatmul.bf16.gmra.mxu0 %v1168
        %v1182 = vpop.f32.mrf.mxu0
        %v1183 = vadd.f32 %v1156, %v1182
        %v1184 = vpop.f32.mrf.mxu0
        %1185 = vdwg.mxu0
        %1186 = vrot.lane.b32.xlu0 %v790, 64
        %v1187 = vpop.permute.xlu0 %1186
        %v1189 = vsel %vm526, %v906, 0
        %v1192 = vsel %vm1139, %v1187, 0
        %1194 = vmatpush.bf16.msra.mxu0 0
        %1195 = vmatpush.bf16.msra.mxu0 0
        %1196 = vmatpush.bf16.msra.mxu0 0
        %1197 = vmatpush.bf16.msra.mxu0 0
        %1198 = vmatpush.bf16.msra.mxu0 0
        %1199 = vmatpush.bf16.msra.mxu0 0
        %1200 = vmatpush.bf16.msra.mxu0 0
        %1201 = vmatpush.bf16.msra.mxu0 %v1192
        %1202 = vmatmul.bf16.gmra.mxu0 %v1189
        %v1203 = vpop.f32.mrf.mxu0
        %v1204 = vadd.f32 %v1158, %v1203
        %v1205 = vpop.f32.mrf.mxu0
        %1206 = vdwg.mxu0
        %1207 = vrot.lane.b32.xlu0 %v814, 64
        %v1208 = vpop.permute.xlu0 %1207
        %v1210 = vsel %vm526, %v907, 0
        %v1213 = vsel %vm1139, %v1208, 0
        %1215 = vmatpush.bf16.msra.mxu0 0
        %1216 = vmatpush.bf16.msra.mxu0 0
        %1217 = vmatpush.bf16.msra.mxu0 0
        %1218 = vmatpush.bf16.msra.mxu0 0
        %1219 = vmatpush.bf16.msra.mxu0 0
        %1220 = vmatpush.bf16.msra.mxu0 0
        %1221 = vmatpush.bf16.msra.mxu0 0
        %1222 = vmatpush.bf16.msra.mxu0 %v1213
        %1223 = vmatmul.bf16.gmra.mxu0 %v1210
        %v1224 = vpop.f32.mrf.mxu0
        %v1225 = vadd.f32 %v1161, %v1224
        %v1226 = vpop.f32.mrf.mxu0
        %1227 = vdwg.mxu0
        %1228 = vrot.lane.b32.xlu0 %v838, 64
        %v1229 = vpop.permute.xlu0 %1228
        %v1231 = vsel %vm526, %v908, 0
        %v1234 = vsel %vm1139, %v1229, 0
        %1236 = vmatpush.bf16.msra.mxu0 0
        %1237 = vmatpush.bf16.msra.mxu0 0
        %1238 = vmatpush.bf16.msra.mxu0 0
        %1239 = vmatpush.bf16.msra.mxu0 0
        %1240 = vmatpush.bf16.msra.mxu0 0
        %1241 = vmatpush.bf16.msra.mxu0 0
        %1242 = vmatpush.bf16.msra.mxu0 0
        %1243 = vmatpush.bf16.msra.mxu0 %v1234
        %1244 = vmatmul.bf16.gmra.mxu0 %v1231
        %v1245 = vpop.f32.mrf.mxu0
        %v1246 = vadd.f32 %v1163, %v1245
        %v1247 = vpop.f32.mrf.mxu0
        %1248 = vdwg.mxu0
        %v1249 = vrcp.pop %v895
        %v1250 = vmul.f32 %v895, %v1249
        %v1251 = vsub.f32 1.0, %v1250
        %v1252 = vmul.f32 %v1249, %v1251
        %v1253 = vadd.f32 %v1249, %v1252
        %vm1254 = vweird.f32 %v895
        %vm1255 = vweird.f32 %v1249
        %vm1256 = vmor %vm1254, %vm1255
        %v1257 = vsel %vm1256, %v1249, %v1253
        %v1258 = vand.u32 2147483647, %v895
        %vm1259 = vcmp.eq.f32.partialorder %v1258, 8.507059e+37
        %v1260 = vand.u32 %v895, 2147483648
        %v1261 = vor.u32 1.1754944e-38, %v1260
        %v1262 = vsel %vm1259, %v1261, %v1257
        %v1263 = vmul.f32 1.0, %v1262
        %v1264 = vrcp.pop %v898
        %v1265 = vmul.f32 %v898, %v1264
        %v1266 = vsub.f32 1.0, %v1265
        %v1267 = vmul.f32 %v1264, %v1266
        %v1268 = vadd.f32 %v1264, %v1267
        %vm1269 = vweird.f32 %v898
        %vm1270 = vweird.f32 %v1264
        %vm1271 = vmor %vm1269, %vm1270
        %v1272 = vsel %vm1271, %v1264, %v1268
        %v1273 = vand.u32 2147483647, %v898
        %vm1274 = vcmp.eq.f32.partialorder %v1273, 8.507059e+37
        %v1275 = vand.u32 %v898, 2147483648
        %v1276 = vor.u32 1.1754944e-38, %v1275
        %v1277 = vsel %vm1274, %v1276, %v1272
        %v1278 = vmul.f32 1.0, %v1277
        %v1279 = vrcp.pop %v901
        %v1280 = vmul.f32 %v901, %v1279
        %v1281 = vsub.f32 1.0, %v1280
        %v1282 = vmul.f32 %v1279, %v1281
        %v1283 = vadd.f32 %v1279, %v1282
        %vm1284 = vweird.f32 %v901
        %vm1285 = vweird.f32 %v1279
        %vm1286 = vmor %vm1284, %vm1285
        %v1287 = vsel %vm1286, %v1279, %v1283
        %v1288 = vand.u32 2147483647, %v901
        %vm1289 = vcmp.eq.f32.partialorder %v1288, 8.507059e+37
        %v1290 = vand.u32 %v901, 2147483648
        %v1291 = vor.u32 1.1754944e-38, %v1290
        %v1292 = vsel %vm1289, %v1291, %v1287
        %v1293 = vmul.f32 1.0, %v1292
        %v1294 = vrcp.pop %v904
        %v1295 = vmul.f32 %v904, %v1294
        %v1296 = vsub.f32 1.0, %v1295
        %v1297 = vmul.f32 %v1294, %v1296
        %v1298 = vadd.f32 %v1294, %v1297
        %vm1299 = vweird.f32 %v904
        %vm1300 = vweird.f32 %v1294
        %vm1301 = vmor %vm1299, %vm1300
        %v1302 = vsel %vm1301, %v1294, %v1298
        %v1303 = vand.u32 2147483647, %v904
        %vm1304 = vcmp.eq.f32.partialorder %v1303, 8.507059e+37
        %v1305 = vand.u32 %v904, 2147483648
        %v1306 = vor.u32 1.1754944e-38, %v1305
        %v1307 = vsel %vm1304, %v1306, %v1302
        %v1308 = vmul.f32 1.0, %v1307
        %v1309 = vmul.f32 %v1183, %v1263
        %v1310 = vmul.f32 %v1204, %v1278
        %v1311 = vmul.f32 %v1225, %v1293
        %v1312 = vmul.f32 %v1246, %v1308
        %1314 = vrot.lane.b32.xlu0 %v1310, 8
        %v1315 = vpop.permute.xlu0 %1314
        %1318 = vrot.lane.b32.xlu0 %v1311, 16
        %v1319 = vpop.permute.xlu0 %1318
        %1322 = vrot.lane.b32.xlu0 %v1312, 24
        %v1323 = vpop.permute.xlu0 %1322
        %v1325 = vsel %vm526, %v1309, %v1315
        %vm1326 = vcmask 130048
        %v1327 = vsel %vm1326, %v1325, %v1319
        %vm1328 = vcmask 195584
        %v1329 = vsel %vm1328, %v1327, %v1323
        %v1330 = vpack.c.bf16 %v1329, %v1329
        %v1331 = vld [vmem:[%s3] sm:$0xf]
        %v1332 = vld [vmem:[%s3 + $0x4] sm:$0xf]
        %v1333 = vld [vmem:[%s3 + $0x8] sm:$0xf]
        %v1334 = vld [vmem:[%s3 + $0xc] sm:$0xf]
        %v1339 = vunpack.c.l.b16 %v1331
        %v1340 = vunpack.c.l.b16 %v1332
        %v1341 = vunpack.c.l.b16 %v1333
        %v1342 = vunpack.c.l.b16 %v1334
        %v1343 = vpack.c.b16 %v1340, %v1339
        %v1344 = vpack.c.b16 %v1342, %v1341
        %v1348 = vsel %vm463, %v1330, 0
        %1350 = vmatpush.bf16.msra.mxu0 0
        %1351 = vmatpush.bf16.msra.mxu0 0
        %1352 = vmatpush.bf16.msra.mxu0 0
        %1353 = vmatpush.bf16.msra.mxu0 0
        %1354 = vmatpush.bf16.msra.mxu0 0
        %1355 = vmatpush.bf16.msra.mxu0 0
        %1356 = vmatpush.bf16.msra.mxu0 %v1344
        %1357 = vmatpush.bf16.msra.mxu0 %v1343
        %1358 = vmatmul.bf16.gmra.mxu0 %v1348
        %v1359 = vpop.f32.mrf.mxu0
        %v1360 = vadd.f32 0.0, %v1359
        %v1361 = vpop.f32.mrf.mxu0
        %1362 = vdwg.mxu0
        %v1363 = vunpack.c.l.bf16 %v446
        %v1364 = vadd.f32 %v1363, %v1360
        %v1365 = vld [vmem:[%s6] sm:$0x1]
        %v1366 = vld [vmem:[%s7] sm:$0x1]
        %v1367 = vsel %vm463, %v1364, 0.0
        %1368 = vadd.xlane.f32.xlu0 %v1367
        %v1369 = vpop.xlane.xlu0 %1368
        %v1370 = vrcp.pop 32.0
        %v1371 = vmul.f32 32.0, %v1370
        %v1372 = vsub.f32 1.0, %v1371
        %v1373 = vmul.f32 %v1370, %v1372
        %v1374 = vadd.f32 %v1370, %v1373
        %vm1375 = vweird.f32 %v1370
        %v1376 = vsel %vm1375, %v1370, %v1374
        %v1377 = vmul.f32 %v1369, %v1376
        %v1378 = vsub.f32 %v1364, %v1377
        %v1379 = vmul.f32 %v1378, %v1378
        %v1380 = vsel %vm463, %v1379, 0.0
        %1381 = vadd.xlane.f32.xlu0 %v1380
        %v1382 = vpop.xlane.xlu0 %1381
        %v1383 = vmul.f32 %v1382, %v1376
        %v1384 = vadd.f32 %v1383, 1e-05
        %v1385 = vrsqrt.pop %v1384
        %v1386 = vmul.f32 %v1385, %v1384
        %v1387 = vmul.f32 %v1386, %v1385
        %v1388 = vmul.f32 0.5, %v1387
        %v1389 = vsub.f32 1.5, %v1388
        %v1390 = vmul.f32 %v1385, %v1389
        %vm1391 = vweird.f32 %v1384
        %vm1392 = vweird.f32 %v1385
        %vm1393 = vmor %vm1391, %vm1392
        %v1394 = vsel %vm1393, %v1385, %v1390
        %v1395 = vmul.f32 %v1378, %v1394
        %v1397 = vperm.slane %v1365, 0
        %v1399 = vmul.f32 %v1395, %v1397
        %v1401 = vperm.slane %v1366, 0
        %v1403 = vadd.f32 %v1399, %v1401
        %v1404 = vpack.c.bf16 %v1403, %v1403
        %v1405 = vld [vmem:[%s8] sm:$0xf]
        %v1406 = vld [vmem:[%s8 + $0x4] sm:$0xf]
        %v1407 = vld [vmem:[%s8 + $0x8] sm:$0xf]
        %v1408 = vld [vmem:[%s8 + $0xc] sm:$0xf]
        %v1409 = vld [vmem:[%s9] sm:$0x1]
        %v1411 = vperm.slane %v1409, 0
        %v1417 = vunpack.c.l.b16 %v1405
        %v1418 = vunpack.c.l.b16 %v1406
        %v1419 = vunpack.c.l.b16 %v1407
        %v1420 = vunpack.c.l.b16 %v1408
        %v1421 = vpack.c.b16 %v1418, %v1417
        %v1422 = vpack.c.b16 %v1420, %v1419
        %v1426 = vsel %vm463, %v1404, 0
        %1428 = vmatpush.bf16.msra.mxu0 0
        %1429 = vmatpush.bf16.msra.mxu0 0
        %1430 = vmatpush.bf16.msra.mxu0 0
        %1431 = vmatpush.bf16.msra.mxu0 0
        %1432 = vmatpush.bf16.msra.mxu0 0
        %1433 = vmatpush.bf16.msra.mxu0 0
        %1434 = vmatpush.bf16.msra.mxu0 %v1422
        %1435 = vmatpush.bf16.msra.mxu0 %v1421
        %1436 = vmatmul.bf16.gmra.mxu0 %v1426
        %v1437 = vpop.f32.mrf.mxu0
        %v1438 = vadd.f32 %v1411, %v1437
        %v1439 = vpop.f32.mrf.mxu0
        %1440 = vdwg.mxu0
        %v1441 = vmax.f32 %v1438, 0.0
        %v1442 = vpack.c.bf16 %v1441, %v1441
        %v1443 = vld [vmem:[%s10] sm:$0xf]
        %v1444 = vld [vmem:[%s10 + $0x4] sm:$0xf]
        %v1445 = vld [vmem:[%s10 + $0x8] sm:$0xf]
        %v1446 = vld [vmem:[%s10 + $0xc] sm:$0xf]
        %v1447 = vld [vmem:[%s10 + $0x10] sm:$0xf]
        %v1448 = vld [vmem:[%s10 + $0x14] sm:$0xf]
        %v1449 = vld [vmem:[%s10 + $0x18] sm:$0xf]
        %v1450 = vld [vmem:[%s10 + $0x1c] sm:$0xf]
        %v1451 = vld [vmem:[%s11] sm:$0x1]
        %v1453 = vperm.slane %v1451, 0
        %v1463 = vunpack.c.l.b16 %v1443
        %v1464 = vunpack.c.l.b16 %v1444
        %v1465 = vunpack.c.l.b16 %v1445
        %v1466 = vunpack.c.l.b16 %v1446
        %v1467 = vunpack.c.l.b16 %v1447
        %v1468 = vunpack.c.l.b16 %v1448
        %v1469 = vunpack.c.l.b16 %v1449
        %v1470 = vunpack.c.l.b16 %v1450
        %v1471 = vpack.c.b16 %v1464, %v1463
        %v1472 = vpack.c.b16 %v1466, %v1465
        %v1473 = vpack.c.b16 %v1468, %v1467
        %v1474 = vpack.c.b16 %v1470, %v1469
        %vm1479 = vcmask 523264
        %v1481 = vsel %vm1479, %v1442, 0
        %1483 = vmatpush.bf16.msra.mxu0 0
        %1484 = vmatpush.bf16.msra.mxu0 0
        %1485 = vmatpush.bf16.msra.mxu0 0
        %1486 = vmatpush.bf16.msra.mxu0 0
        %1487 = vmatpush.bf16.msra.mxu0 %v1474
        %1488 = vmatpush.bf16.msra.mxu0 %v1473
        %1489 = vmatpush.bf16.msra.mxu0 %v1472
        %1490 = vmatpush.bf16.msra.mxu0 %v1471
        %1491 = vmatmul.bf16.gmra.mxu0 %v1481
        %v1492 = vpop.f32.mrf.mxu0
        %v1493 = vadd.f32 %v1453, %v1492
        %v1494 = vpop.f32.mrf.mxu0
        %1495 = vdwg.mxu0
        %v1496 = vadd.f32 %v1403, %v1493
        %v1497 = vld [vmem:[%s12] sm:$0x1]
        %v1498 = vld [vmem:[%s13] sm:$0x1]
        %v1499 = vsel %vm463, %v1496, 0.0
        %1500 = vadd.xlane.f32.xlu0 %v1499
        %v1501 = vpop.xlane.xlu0 %1500
        %v1502 = vmul.f32 %v1501, %v1376
        %v1503 = vsub.f32 %v1496, %v1502
        %v1504 = vmul.f32 %v1503, %v1503
        %v1505 = vsel %vm463, %v1504, 0.0
        %1506 = vadd.xlane.f32.xlu0 %v1505
        %v1507 = vpop.xlane.xlu0 %1506
        %v1508 = vmul.f32 %v1507, %v1376
        %v1509 = vadd.f32 %v1508, 1e-05
        %v1510 = vrsqrt.pop %v1509
        %v1511 = vmul.f32 %v1510, %v1509
        %v1512 = vmul.f32 %v1511, %v1510
        %v1513 = vmul.f32 0.5, %v1512
        %v1514 = vsub.f32 1.5, %v1513
        %v1515 = vmul.f32 %v1510, %v1514
        %vm1516 = vweird.f32 %v1509
        %vm1517 = vweird.f32 %v1510
        %vm1518 = vmor %vm1516, %vm1517
        %v1519 = vsel %vm1518, %v1510, %v1515
        %v1520 = vmul.f32 %v1503, %v1519
        %v1522 = vperm.slane %v1497, 0
        %v1524 = vmul.f32 %v1520, %v1522
        %v1526 = vperm.slane %v1498, 0
        %v1528 = vadd.f32 %v1524, %v1526
        %v1529 = vpack.c.bf16 %v1528, %v1528
        %vm1530 = vcmask 257024
        %1531 = vst.msk [vmem:[%s440] sm:$0xf] %vm1530, %v1529
        %s1532 = sand.u32 %s322, 1
        %s1533 = scalar_lea.sflag [#allocation5], %s1532
        %s1534 = sand.u32 %s322, 1
        %s1535 = smul.addr %s1534, 4
        %s1536 = scalar_lea.vmem [#allocation4], %s1535
        // Predicated region
        $region73: #{tpu_custom_call.1} parent=71 // pred_check
          %p1537 = pneg %p332
        $region74: #{tpu_custom_call.1} parent=71 // pred_check_branch
          %1539 = sbr.rel (%p1537) target = $region76
        $region75: #{tpu_custom_call.1} parent=71 // pred_region
          %1541 = vsyncadd %s1533, 0
          %s1542 = smul.addr %s36, 4
          %s1543 = scalar_lea.hbm %s14, %s1542
          %s1545 = sshll.u32 %s1536, 4
          %s1546 = int_to_ptr.vmem [resolvable:$true] %s1545
          %s1547 = sshll.u32 %s1543, 4
          %s1548 = int_to_ptr.hbm [resolvable:$true] %s1547
          %1550 = dma.vmem_to_hbm [thread:$0]  %s1546, 64, %s1548, %s1533
        $region76: #{tpu_custom_call.1} parent=71 // pred_fallthru
          _
      $region72: #{tpu_custom_call.1} parent=5 // pred_fallthru
        _
      %p1551 = scmp.le.s32.totalorder 2, %s31
      // Predicated region
      $region77: #{tpu_custom_call.1} parent=5 // pred_check
        %p1552 = pneg %p1551
      $region78: #{tpu_custom_call.1} parent=5 // pred_check_branch
        %1554 = sbr.rel (%p1552) target = $region80
      $region79: #{tpu_custom_call.1} parent=5 // pred_region
        %s1555 = ssub.s32 %s31, 2
        // Predicated region
        $region81: #{tpu_custom_call.1} parent=79 // pred_check
          %p1556 = pneg %p338
        $region82: #{tpu_custom_call.1} parent=79 // pred_check_branch
          %1558 = sbr.rel (%p1556) target = $region84
        $region83: #{tpu_custom_call.1} parent=79 // pred_region
          %s1559 = sand.u32 %s323, 1
          %s1560 = scalar_lea.sflag [#allocation5], %s1559
          %s1561 = sand.u32 %s323, 1
          %s1562 = smul.addr %s1561, 4
          %s1563 = scalar_lea.vmem [#allocation4], %s1562
          %1565 = dma.done %s1560, 64
        $region84: #{tpu_custom_call.1} parent=79 // pred_fallthru
          _
      $region80: #{tpu_custom_call.1} parent=5 // pred_fallthru
        _
    $region6: #{tpu_custom_call.1} parent=1 // loop_footer
      %s35 = sadd.s32 1, %s31
    $region7: #{tpu_custom_call.1} parent=1 // loop_footer_branch
      %30 = sbr.rel target = $region3
    $region8: #{tpu_custom_call.1} parent=1 // loop_exit
      _
    %1566 = vsyncpa [#allocation5], 1
    %s1567 = scalar_lea.sflag [#allocation5], 1
    %1568 = vsyncpa %s1567, 1

// kernel: tpu_custom_call.1
$region0: #{tpu_custom_call.1}
  #allocation0 [shape = 'u32[]', space=smem, size = 0x4, offset = 0x4, fixed_abs, tag = 'smem constant byte address 0x4 - core index']
  #allocation1 [shape = 'u32[72,128]{1,0:T(1,128)}', space=vmem, size = 0x9000, scoped, tag = 'internal scratch']
  #allocation2 [shape = 's32[1]{0}', space=sflag, size = 0x4, scoped, tag = 'scoped memory for tpu_custom_call.1']
  #allocation3 [shape = 'u8[512]{0}', space=smem, size = 0x200, scoped, tag = 'prefetched SMEM operand 0']
  %s0 = inlined_call_operand.vmem [shape: s32[2], index: 0, kind: input, shape index: {}]
  %s1 = inlined_call_operand.vmem [shape: bf16[2,8,32], index: 1, kind: input, shape index: {}]
  %s2 = inlined_call_operand.vmem [shape: bf16[32,96], index: 2, kind: input, shape index: {}]
  %s3 = inlined_call_operand.vmem [shape: bf16[32,32], index: 3, kind: input, shape index: {}]
  %s4 = inlined_call_operand.vmem [shape: bf16[9,8], index: 4, kind: input, shape index: {}]
  %s5 = inlined_call_operand.vmem [shape: bf16[9,8], index: 5, kind: input, shape index: {}]
  %s6 = inlined_call_operand.vmem [shape: f32[1,32], index: 6, kind: input, shape index: {}]
  %s7 = inlined_call_operand.vmem [shape: f32[1,32], index: 7, kind: input, shape index: {}]
  %s8 = inlined_call_operand.vmem [shape: bf16[32,64], index: 8, kind: input, shape index: {}]
  %s9 = inlined_call_operand.vmem [shape: f32[1,64], index: 9, kind: input, shape index: {}]
  %s10 = inlined_call_operand.vmem [shape: bf16[64,32], index: 10, kind: input, shape index: {}]
  %s11 = inlined_call_operand.vmem [shape: f32[1,32], index: 11, kind: input, shape index: {}]
  %s12 = inlined_call_operand.vmem [shape: f32[1,32], index: 12, kind: input, shape index: {}]
  %s13 = inlined_call_operand.vmem [shape: f32[1,32], index: 13, kind: input, shape index: {}]
  %s14 = inlined_call_operand.hbm [shape: bf16[2,8,32], index: 14, kind: output, shape index: {}]
  %s15 = sld [smem:[#allocation0]]
  $region85: #{tpu_custom_call.1} parent=0
    _
  %s17 = ssub.s32 1, %s15
  %s18 = scalar_select 0, %s17, %s15
  %s20 = sshll.u32 %s0, 4
  %s21 = int_to_ptr.vmem [resolvable:$true] %s20
  %23 = dma.vmem_to_smem %s21, 16, [#allocation3], [#allocation2]
  %25 = dma.done [#allocation2], 16
  %26 = sfence
  $region1: #{tpu_custom_call.1} parent=0
    #allocation4 [shape = 'u8[4096]{0}', space=vmem, size = 0x1000, scoped, tag = 'output window, operand 0']
    #allocation5 [shape = 's32[2]{0}', space=sflag, size = 0x8, scoped, tag = 'scoped memory for tpu_custom_call.1']
    %27 = vsyncpa [#allocation5], 0
    %s28 = scalar_lea.sflag [#allocation5], 1
    %29 = vsyncpa %s28, 0
    loop: start=0, step=1, limit=4
    $region2: #{tpu_custom_call.1} parent=1 // loop_pre_header
      _
    $region3: #{tpu_custom_call.1} parent=1 // loop_header
      %s31 = sphi 0, %s35
      %p32 = scmp.ge.s32.totalorder %s31, 4
      %s41 = sphi 0, %s43
      %s44 = sphi 0, %s41
      %s45 = sphi 0, %s44
      %s61 = sphi 0, %s45
      %s65 = sphi 0, %s65
      %s67 = sphi 0, %s65
      %s68 = sphi 0, %s67
      %s82 = sphi 0, %s68
      %s86 = sphi 0, %s86
      %s88 = sphi 0, %s86
      %s89 = sphi 0, %s88
      %s103 = sphi 0, %s89
      %s107 = sphi 0, %s107
      %s109 = sphi 0, %s107
      %s110 = sphi 0, %s109
      %s124 = sphi 0, %s110
      %s128 = sphi 0, %s128
      %s130 = sphi 0, %s128
      %s131 = sphi 0, %s130
      %s145 = sphi 0, %s131
      %s149 = sphi 0, %s149
      %s151 = sphi 0, %s149
      %s152 = sphi 0, %s151
      %s166 = sphi 0, %s152
      %s170 = sphi 0, %s170
      %s172 = sphi 0, %s170
      %s173 = sphi 0, %s172
      %s187 = sphi 0, %s173
      %s191 = sphi 0, %s191
      %s193 = sphi 0, %s191
      %s194 = sphi 0, %s193
      %s208 = sphi 0, %s194
      %s212 = sphi 0, %s212
      %s214 = sphi 0, %s212
      %s215 = sphi 0, %s214
      %s229 = sphi 0, %s215
      %s233 = sphi 0, %s233
      %s235 = sphi 0, %s233
      %s236 = sphi 0, %s235
      %s250 = sphi 0, %s236
      %s254 = sphi 0, %s254
      %s256 = sphi 0, %s254
      %s257 = sphi 0, %s256
      %s271 = sphi 0, %s257
      %s275 = sphi 0, %s275
      %s277 = sphi 0, %s275
      %s278 = sphi 0, %s277
      %s292 = sphi 0, %s278
      %s296 = sphi 0, %s296
      %s298 = sphi 0, %s296
      %s299 = sphi 0, %s298
      %s313 = sphi 0, %s299
      %s319 = sphi 0, %s321
      %s322 = sphi 0, %s319
      %s323 = sphi 0, %s322
      %s339 = sphi 0, %s323
    $region4: #{tpu_custom_call.1} parent=1 // loop_header_branch
      %34 = sbr.rel (%p32) target = $region8
    $region5: #{tpu_custom_call.1} parent=1 // loop_body
      %s36 = ssub.s32 %s31, 1
      %s37 = ssub.s32 %s31, 2
      %s38 = sadd.s32 %s31, 1
      %s39 = ssub.s32 %s31, %s38
      %p40 = scmp.eq.s32.totalorder %s39, 0
      %s42 = sadd.s32 %s41, 1
      %s43 = scalar_select %p40, %s41, %s42
      %p46 = pneg %p40
      %p47 = scmp.eq.s32.totalorder %s31, 1
      %p48 = por %p46, %p47
      %p49 = scmp.ne.s32.totalorder %s41, %s44
      %p50 = scmp.eq.s32.totalorder %s31, 0
      %p51 = por %p49, %p50
      %p52 = scmp.ne.s32.totalorder %s41, %s44
      %p53 = scmp.eq.s32.totalorder %s36, 1
      %p54 = por %p52, %p53
      %p55 = scmp.ne.s32.totalorder %s44, %s45
      %p56 = scmp.eq.s32.totalorder %s36, 0
      %p57 = por %p55, %p56
      %p58 = scmp.ne.s32.totalorder %s44, %s45
      %p59 = scmp.eq.s32.totalorder %s37, 1
      %p60 = por %p58, %p59
      %p62 = scmp.ne.s32.totalorder %s45, %s61
      %p63 = scmp.eq.s32.totalorder %s37, 0
      %p64 = por %p62, %p63
      %s66 = sadd.s32 %s65, 1
      %p69 = scmp.eq.s32.totalorder %s31, 1
      %p70 = scmp.ne.s32.totalorder %s65, %s67
      %p71 = scmp.eq.s32.totalorder %s31, 0
      %p72 = por %p70, %p71
      %p73 = scmp.ne.s32.totalorder %s65, %s67
      %p74 = scmp.eq.s32.totalorder %s36, 1
      %p75 = por %p73, %p74
      %p76 = scmp.ne.s32.totalorder %s67, %s68
      %p77 = scmp.eq.s32.totalorder %s36, 0
      %p78 = por %p76, %p77
      %p79 = scmp.ne.s32.totalorder %s67, %s68
      %p80 = scmp.eq.s32.totalorder %s37, 1
      %p81 = por %p79, %p80
      %p83 = scmp.ne.s32.totalorder %s68, %s82
      %p84 = scmp.eq.s32.totalorder %s37, 0
      %p85 = por %p83, %p84
      %s87 = sadd.s32 %s86, 1
      %p90 = scmp.eq.s32.totalorder %s31, 1
      %p91 = scmp.ne.s32.totalorder %s86, %s88
      %p92 = scmp.eq.s32.totalorder %s31, 0
      %p93 = por %p91, %p92
      %p94 = scmp.ne.s32.totalorder %s86, %s88
      %p95 = scmp.eq.s32.totalorder %s36, 1
      %p96 = por %p94, %p95
      %p97 = scmp.ne.s32.totalorder %s88, %s89
      %p98 = scmp.eq.s32.totalorder %s36, 0
      %p99 = por %p97, %p98
      %p100 = scmp.ne.s32.totalorder %s88, %s89
      %p101 = scmp.eq.s32.totalorder %s37, 1
      %p102 = por %p100, %p101
      %p104 = scmp.ne.s32.totalorder %s89, %s103
      %p105 = scmp.eq.s32.totalorder %s37, 0
      %p106 = por %p104, %p105
      %s108 = sadd.s32 %s107, 1
      %p111 = scmp.eq.s32.totalorder %s31, 1
      %p112 = scmp.ne.s32.totalorder %s107, %s109
      %p113 = scmp.eq.s32.totalorder %s31, 0
      %p114 = por %p112, %p113
      %p115 = scmp.ne.s32.totalorder %s107, %s109
      %p116 = scmp.eq.s32.totalorder %s36, 1
      %p117 = por %p115, %p116
      %p118 = scmp.ne.s32.totalorder %s109, %s110
      %p119 = scmp.eq.s32.totalorder %s36, 0
      %p120 = por %p118, %p119
      %p121 = scmp.ne.s32.totalorder %s109, %s110
      %p122 = scmp.eq.s32.totalorder %s37, 1
      %p123 = por %p121, %p122
      %p125 = scmp.ne.s32.totalorder %s110, %s124
      %p126 = scmp.eq.s32.totalorder %s37, 0
      %p127 = por %p125, %p126
      %s129 = sadd.s32 %s128, 1
      %p132 = scmp.eq.s32.totalorder %s31, 1
      %p133 = scmp.ne.s32.totalorder %s128, %s130
      %p134 = scmp.eq.s32.totalorder %s31, 0
      %p135 = por %p133, %p134
      %p136 = scmp.ne.s32.totalorder %s128, %s130
      %p137 = scmp.eq.s32.totalorder %s36, 1
      %p138 = por %p136, %p137
      %p139 = scmp.ne.s32.totalorder %s130, %s131
      %p140 = scmp.eq.s32.totalorder %s36, 0
      %p141 = por %p139, %p140
      %p142 = scmp.ne.s32.totalorder %s130, %s131
      %p143 = scmp.eq.s32.totalorder %s37, 1
      %p144 = por %p142, %p143
      %p146 = scmp.ne.s32.totalorder %s131, %s145
      %p147 = scmp.eq.s32.totalorder %s37, 0
      %p148 = por %p146, %p147
      %s150 = sadd.s32 %s149, 1
      %p153 = scmp.eq.s32.totalorder %s31, 1
      %p154 = scmp.ne.s32.totalorder %s149, %s151
      %p155 = scmp.eq.s32.totalorder %s31, 0
      %p156 = por %p154, %p155
      %p157 = scmp.ne.s32.totalorder %s149, %s151
      %p158 = scmp.eq.s32.totalorder %s36, 1
      %p159 = por %p157, %p158
      %p160 = scmp.ne.s32.totalorder %s151, %s152
      %p161 = scmp.eq.s32.totalorder %s36, 0
      %p162 = por %p160, %p161
      %p163 = scmp.ne.s32.totalorder %s151, %s152
      %p164 = scmp.eq.s32.totalorder %s37, 1
      %p165 = por %p163, %p164
      %p167 = scmp.ne.s32.totalorder %s152, %s166
      %p168 = scmp.eq.s32.totalorder %s37, 0
      %p169 = por %p167, %p168
      %s171 = sadd.s32 %s170, 1
      %p174 = scmp.eq.s32.totalorder %s31, 1
      %p175 = scmp.ne.s32.totalorder %s170, %s172
      %p176 = scmp.eq.s32.totalorder %s31, 0
      %p177 = por %p175, %p176
      %p178 = scmp.ne.s32.totalorder %s170, %s172
      %p179 = scmp.eq.s32.totalorder %s36, 1
      %p180 = por %p178, %p179
      %p181 = scmp.ne.s32.totalorder %s172, %s173
      %p182 = scmp.eq.s32.totalorder %s36, 0
      %p183 = por %p181, %p182
      %p184 = scmp.ne.s32.totalorder %s172, %s173
      %p185 = scmp.eq.s32.totalorder %s37, 1
      %p186 = por %p184, %p185
      %p188 = scmp.ne.s32.totalorder %s173, %s187
      %p189 = scmp.eq.s32.totalorder %s37, 0
      %p190 = por %p188, %p189
      %s192 = sadd.s32 %s191, 1
      %p195 = scmp.eq.s32.totalorder %s31, 1
      %p196 = scmp.ne.s32.totalorder %s191, %s193
      %p197 = scmp.eq.s32.totalorder %s31, 0
      %p198 = por %p196, %p197
      %p199 = scmp.ne.s32.totalorder %s191, %s193
      %p200 = scmp.eq.s32.totalorder %s36, 1
      %p201 = por %p199, %p200
      %p202 = scmp.ne.s32.totalorder %s193, %s194
      %p203 = scmp.eq.s32.totalorder %s36, 0
      %p204 = por %p202, %p203
      %p205 = scmp.ne.s32.totalorder %s193, %s194
      %p206 = scmp.eq.s32.totalorder %s37, 1
      %p207 = por %p205, %p206
      %p209 = scmp.ne.s32.totalorder %s194, %s208
      %p210 = scmp.eq.s32.totalorder %s37, 0
      %p211 = por %p209, %p210
      %s213 = sadd.s32 %s212, 1
      %p216 = scmp.eq.s32.totalorder %s31, 1
      %p217 = scmp.ne.s32.totalorder %s212, %s214
      %p218 = scmp.eq.s32.totalorder %s31, 0
      %p219 = por %p217, %p218
      %p220 = scmp.ne.s32.totalorder %s212, %s214
      %p221 = scmp.eq.s32.totalorder %s36, 1
      %p222 = por %p220, %p221
      %p223 = scmp.ne.s32.totalorder %s214, %s215
      %p224 = scmp.eq.s32.totalorder %s36, 0
      %p225 = por %p223, %p224
      %p226 = scmp.ne.s32.totalorder %s214, %s215
      %p227 = scmp.eq.s32.totalorder %s37, 1
      %p228 = por %p226, %p227
      %p230 = scmp.ne.s32.totalorder %s215, %s229
      %p231 = scmp.eq.s32.totalorder %s37, 0
      %p232 = por %p230, %p231
      %s234 = sadd.s32 %s233, 1
      %p237 = scmp.eq.s32.totalorder %s31, 1
      %p238 = scmp.ne.s32.totalorder %s233, %s235
      %p239 = scmp.eq.s32.totalorder %s31, 0
      %p240 = por %p238, %p239
      %p241 = scmp.ne.s32.totalorder %s233, %s235
      %p242 = scmp.eq.s32.totalorder %s36, 1
      %p243 = por %p241, %p242
      %p244 = scmp.ne.s32.totalorder %s235, %s236
      %p245 = scmp.eq.s32.totalorder %s36, 0
      %p246 = por %p244, %p245
      %p247 = scmp.ne.s32.totalorder %s235, %s236
      %p248 = scmp.eq.s32.totalorder %s37, 1
      %p249 = por %p247, %p248
      %p251 = scmp.ne.s32.totalorder %s236, %s250
      %p252 = scmp.eq.s32.totalorder %s37, 0
      %p253 = por %p251, %p252
      %s255 = sadd.s32 %s254, 1
      %p258 = scmp.eq.s32.totalorder %s31, 1
      %p259 = scmp.ne.s32.totalorder %s254, %s256
      %p260 = scmp.eq.s32.totalorder %s31, 0
      %p261 = por %p259, %p260
      %p262 = scmp.ne.s32.totalorder %s254, %s256
      %p263 = scmp.eq.s32.totalorder %s36, 1
      %p264 = por %p262, %p263
      %p265 = scmp.ne.s32.totalorder %s256, %s257
      %p266 = scmp.eq.s32.totalorder %s36, 0
      %p267 = por %p265, %p266
      %p268 = scmp.ne.s32.totalorder %s256, %s257
      %p269 = scmp.eq.s32.totalorder %s37, 1
      %p270 = por %p268, %p269
      %p272 = scmp.ne.s32.totalorder %s257, %s271
      %p273 = scmp.eq.s32.totalorder %s37, 0
      %p274 = por %p272, %p273
      %s276 = sadd.s32 %s275, 1
      %p279 = scmp.eq.s32.totalorder %s31, 1
      %p280 = scmp.ne.s32.totalorder %s275, %s277
      %p281 = scmp.eq.s32.totalorder %s31, 0
      %p282 = por %p280, %p281
      %p283 = scmp.ne.s32.totalorder %s275, %s277
      %p284 = scmp.eq.s32.totalorder %s36, 1
      %p285 = por %p283, %p284
      %p286 = scmp.ne.s32.totalorder %s277, %s278
      %p287 = scmp.eq.s32.totalorder %s36, 0
      %p288 = por %p286, %p287
      %p289 = scmp.ne.s32.totalorder %s277, %s278
      %p290 = scmp.eq.s32.totalorder %s37, 1
      %p291 = por %p289, %p290
      %p293 = scmp.ne.s32.totalorder %s278, %s292
      %p294 = scmp.eq.s32.totalorder %s37, 0
      %p295 = por %p293, %p294
      %s297 = sadd.s32 %s296, 1
      %p300 = scmp.eq.s32.totalorder %s31, 1
      %p301 = scmp.ne.s32.totalorder %s296, %s298
      %p302 = scmp.eq.s32.totalorder %s31, 0
      %p303 = por %p301, %p302
      %p304 = scmp.ne.s32.totalorder %s296, %s298
      %p305 = scmp.eq.s32.totalorder %s36, 1
      %p306 = por %p304, %p305
      %p307 = scmp.ne.s32.totalorder %s298, %s299
      %p308 = scmp.eq.s32.totalorder %s36, 0
      %p309 = por %p307, %p308
      %p310 = scmp.ne.s32.totalorder %s298, %s299
      %p311 = scmp.eq.s32.totalorder %s37, 1
      %p312 = por %p310, %p311
      %p314 = scmp.ne.s32.totalorder %s299, %s313
      %p315 = scmp.eq.s32.totalorder %s37, 0
      %p316 = por %p314, %p315
      %s317 = ssub.s32 %s31, %s38
      %p318 = scmp.eq.s32.totalorder %s317, 0
      %s320 = sadd.s32 %s319, 1
      %s321 = scalar_select %p318, %s319, %s320
      %p324 = pneg %p318
      %p325 = scmp.eq.s32.totalorder %s31, 1
      %p326 = por %p324, %p325
      %p327 = scmp.ne.s32.totalorder %s319, %s322
      %p328 = scmp.eq.s32.totalorder %s31, 0
      %p329 = por %p327, %p328
      %p330 = scmp.ne.s32.totalorder %s319, %s322
      %p331 = scmp.eq.s32.totalorder %s36, 1
      %p332 = por %p330, %p331
      %p333 = scmp.ne.s32.totalorder %s322, %s323
      %p334 = scmp.eq.s32.totalorder %s36, 0
      %p335 = por %p333, %p334
      %p336 = scmp.ne.s32.totalorder %s322, %s323
      %p337 = scmp.eq.s32.totalorder %s37, 1
      %p338 = por %p336, %p337
      %p340 = scmp.ne.s32.totalorder %s323, %s339
      %p341 = scmp.eq.s32.totalorder %s37, 0
      %p342 = por %p340, %p341
      %p343 = scmp.le.s32.totalorder 1, %s31
      %p344 = scmp.lt.s32.totalorder %s31, 3
      %p345 = pnand %p343, %p344
      %p346 = pneg %p345
      // Predicated region
      $region9: #{tpu_custom_call.1} parent=5 // pred_check
        _
      $region10: #{tpu_custom_call.1} parent=5 // pred_check_branch
        %348 = sbr.rel (%p345) target = $region12
      $region11: #{tpu_custom_call.1} parent=5 // pred_region
        %s349 = ssub.s32 %s31, 1
        // Predicated region
        $region13: #{tpu_custom_call.1} parent=11 // pred_check
          %p350 = pneg %p78
        $region14: #{tpu_custom_call.1} parent=11 // pred_check_branch
          %352 = sbr.rel (%p350) target = $region16
        $region15: #{tpu_custom_call.1} parent=11 // pred_region
          _
        $region16: #{tpu_custom_call.1} parent=11 // pred_fallthru
          _
        // Predicated region
        $region17: #{tpu_custom_call.1} parent=11 // pred_check
          %p353 = pneg %p99
        $region18: #{tpu_custom_call.1} parent=11 // pred_check_branch
          %355 = sbr.rel (%p353) target = $region20
        $region19: #{tpu_custom_call.1} parent=11 // pred_region
          _
        $region20: #{tpu_custom_call.1} parent=11 // pred_fallthru
          _
        // Predicated region
        $region21: #{tpu_custom_call.1} parent=11 // pred_check
          %p356 = pneg %p120
        $region22: #{tpu_custom_call.1} parent=11 // pred_check_branch
          %358 = sbr.rel (%p356) target = $region24
        $region23: #{tpu_custom_call.1} parent=11 // pred_region
          _
        $region24: #{tpu_custom_call.1} parent=11 // pred_fallthru
          _
        // Predicated region
        $region25: #{tpu_custom_call.1} parent=11 // pred_check
          %p359 = pneg %p141
        $region26: #{tpu_custom_call.1} parent=11 // pred_check_branch
          %361 = sbr.rel (%p359) target = $region28
        $region27: #{tpu_custom_call.1} parent=11 // pred_region
          _
        $region28: #{tpu_custom_call.1} parent=11 // pred_fallthru
          _
        // Predicated region
        $region29: #{tpu_custom_call.1} parent=11 // pred_check
          %p362 = pneg %p162
        $region30: #{tpu_custom_call.1} parent=11 // pred_check_branch
          %364 = sbr.rel (%p362) target = $region32
        $region31: #{tpu_custom_call.1} parent=11 // pred_region
          _
        $region32: #{tpu_custom_call.1} parent=11 // pred_fallthru
          _
        // Predicated region
        $region33: #{tpu_custom_call.1} parent=11 // pred_check
          %p365 = pneg %p183
        $region34: #{tpu_custom_call.1} parent=11 // pred_check_branch
          %367 = sbr.rel (%p365) target = $region36
        $region35: #{tpu_custom_call.1} parent=11 // pred_region
          _
        $region36: #{tpu_custom_call.1} parent=11 // pred_fallthru
          _
        // Predicated region
        $region37: #{tpu_custom_call.1} parent=11 // pred_check
          %p368 = pneg %p204
        $region38: #{tpu_custom_call.1} parent=11 // pred_check_branch
          %370 = sbr.rel (%p368) target = $region40
        $region39: #{tpu_custom_call.1} parent=11 // pred_region
          _
        $region40: #{tpu_custom_call.1} parent=11 // pred_fallthru
          _
        // Predicated region
        $region41: #{tpu_custom_call.1} parent=11 // pred_check
          %p371 = pneg %p225
        $region42: #{tpu_custom_call.1} parent=11 // pred_check_branch
          %373 = sbr.rel (%p371) target = $region44
        $region43: #{tpu_custom_call.1} parent=11 // pred_region
          _
        $region44: #{tpu_custom_call.1} parent=11 // pred_fallthru
          _
        // Predicated region
        $region45: #{tpu_custom_call.1} parent=11 // pred_check
          %p374 = pneg %p246
        $region46: #{tpu_custom_call.1} parent=11 // pred_check_branch
          %376 = sbr.rel (%p374) target = $region48
        $region47: #{tpu_custom_call.1} parent=11 // pred_region
          _
        $region48: #{tpu_custom_call.1} parent=11 // pred_fallthru
          _
        // Predicated region
        $region49: #{tpu_custom_call.1} parent=11 // pred_check
          %p377 = pneg %p267
        $region50: #{tpu_custom_call.1} parent=11 // pred_check_branch
          %379 = sbr.rel (%p377) target = $region52
        $region51: #{tpu_custom_call.1} parent=11 // pred_region
          _
        $region52: #{tpu_custom_call.1} parent=11 // pred_fallthru
          _
        // Predicated region
        $region53: #{tpu_custom_call.1} parent=11 // pred_check
          %p380 = pneg %p288
        $region54: #{tpu_custom_call.1} parent=11 // pred_check_branch
          %382 = sbr.rel (%p380) target = $region56
        $region55: #{tpu_custom_call.1} parent=11 // pred_region
          _
        $region56: #{tpu_custom_call.1} parent=11 // pred_fallthru
          _
        // Predicated region
        $region57: #{tpu_custom_call.1} parent=11 // pred_check
          %p383 = pneg %p309
        $region58: #{tpu_custom_call.1} parent=11 // pred_check_branch
          %385 = sbr.rel (%p383) target = $region60
        $region59: #{tpu_custom_call.1} parent=11 // pred_region
          _
        $region60: #{tpu_custom_call.1} parent=11 // pred_fallthru
          _
      $region12: #{tpu_custom_call.1} parent=5 // pred_fallthru
        _
      %p386 = scmp.lt.s32.totalorder %s31, 2
      // Predicated region
      $region61: #{tpu_custom_call.1} parent=5 // pred_check
        %p387 = pneg %p386
      $region62: #{tpu_custom_call.1} parent=5 // pred_check_branch
        %389 = sbr.rel (%p387) target = $region64
      $region63: #{tpu_custom_call.1} parent=5 // pred_region
        // Predicated region
        $region65: #{tpu_custom_call.1} parent=63 // pred_check
          %p390 = pneg %p51
        $region66: #{tpu_custom_call.1} parent=63 // pred_check_branch
          %392 = sbr.rel (%p390) target = $region68
        $region67: #{tpu_custom_call.1} parent=63 // pred_region
          %p393 = scmp.lt.s32.totalorder %s31, 1
          %s394 = scalar_select %p393, %s31, 1
          %s395 = smul.addr %s394, 4
          %s396 = scalar_lea.vmem %s1, %s395
        $region68: #{tpu_custom_call.1} parent=63 // pred_fallthru
          _
      $region64: #{tpu_custom_call.1} parent=5 // pred_fallthru
        _
      %p397 = scmp.le.s32.totalorder 1, %s31
      %p398 = scmp.lt.s32.totalorder %s31, 3
      %p399 = pnand %p397, %p398
      %p400 = pneg %p399
      // Predicated region
      $region69: #{tpu_custom_call.1} parent=5 // pred_check
        _
      $region70: #{tpu_custom_call.1} parent=5 // pred_check_branch
        %402 = sbr.rel (%p399) target = $region72
      $region71: #{tpu_custom_call.1} parent=5 // pred_region
        %s403 = ssub.s32 %s31, 1
        %p404 = scmp.lt.s32.totalorder %s36, 1
        %s405 = scalar_select %p404, %s36, 1
        %s406 = smul.addr %s405, 4
        %s407 = scalar_lea.vmem %s1, %s406
        %p408 = pneg %p57
        %p409 = pneg %p54
        %p410 = pneg %p78
        %p411 = pneg %p75
        %p412 = pneg %p99
        %p413 = pneg %p96
        %p414 = pneg %p120
        %p415 = pneg %p117
        %p416 = pneg %p141
        %p417 = pneg %p138
        %p418 = pneg %p162
        %p419 = pneg %p159
        %p420 = pneg %p183
        %p421 = pneg %p180
        %p422 = pneg %p204
        %p423 = pneg %p201
        %p424 = pneg %p225
        %p425 = pneg %p222
        %p426 = pneg %p246
        %p427 = pneg %p243
        %p428 = pneg %p267
        %p429 = pneg %p264
        %p430 = pneg %p288
        %p431 = pneg %p285
        %p432 = pneg %p309
        %p433 = pneg %p306
        %p434 = pneg %p335
        %p435 = pneg %p332
        %s436 = sand.u32 %s322, 1
        %s437 = scalar_lea.sflag [#allocation5], %s436
        %s438 = sand.u32 %s322, 1
        %s439 = smul.addr %s438, 4
        %s440 = scalar_lea.vmem [#allocation4], %s439
        %p441 = scmp.lt.s32.totalorder %s36, 1
        %s442 = scalar_select %p441, %s36, 1
        %s443 = smul.addr %s442, 4
        %s444 = scalar_lea.vmem %s1, %s443
        %v446 = vld [vmem:[%s444] sm:$0xf]
        %v447 = vld [vmem:[%s2] sm:$0xf]
        %v448 = vld [vmem:[%s2 + $0x4] sm:$0xf]
        %v449 = vld [vmem:[%s2 + $0x8] sm:$0xf]
        %v450 = vld [vmem:[%s2 + $0xc] sm:$0xf]
        %v455 = vunpack.c.l.b16 %v447
        %v456 = vunpack.c.l.b16 %v448
        %v457 = vunpack.c.l.b16 %v449
        %v458 = vunpack.c.l.b16 %v450
        %v459 = vpack.c.b16 %v456, %v455
        %v460 = vpack.c.b16 %v458, %v457
        %vm463 = vcmask 261120
        %v465 = vsel %vm463, %v446, 0
        %467 = vmatpush.bf16.msra.mxu0 0
        %468 = vmatpush.bf16.msra.mxu0 0
        %469 = vmatpush.bf16.msra.mxu0 0
        %470 = vmatpush.bf16.msra.mxu0 0
        %471 = vmatpush.bf16.msra.mxu0 0
        %472 = vmatpush.bf16.msra.mxu0 0
        %473 = vmatpush.bf16.msra.mxu0 %v460
        %474 = vmatpush.bf16.msra.mxu0 %v459
        %475 = vmatmul.bf16.gmra.mxu0 %v465
        %v476 = vpop.f32.mrf.mxu0
        %v477 = vadd.f32 0.0, %v476
        %v478 = vpop.f32.mrf.mxu0
        %479 = vdwg.mxu0
        %v480 = vmul.f32 %v477, 0.35355338
        %482 = vrot.lane.b32.xlu0 %v480, 120
        %v483 = vpop.permute.xlu0 %482
        %485 = vrot.lane.b32.xlu0 %v480, 112
        %v486 = vpop.permute.xlu0 %485
        %488 = vrot.lane.b32.xlu0 %v480, 104
        %v489 = vpop.permute.xlu0 %488
        %v491 = vpack.c.bf16 %v480, %v480
        %v492 = vpack.c.bf16 %v483, %v483
        %v493 = vpack.c.bf16 %v486, %v486
        %v494 = vpack.c.bf16 %v489, %v489
        %496 = vrot.lane.b32.xlu0 %v477, 120
        %v497 = vpop.permute.xlu0 %496
        %499 = vrot.lane.b32.xlu0 %v477, 112
        %v500 = vpop.permute.xlu0 %499
        %502 = vrot.lane.b32.xlu0 %v477, 104
        %v503 = vpop.permute.xlu0 %502
        %v505 = vpack.c.bf16 %v477, %v477
        %v506 = vpack.c.bf16 %v497, %v497
        %v507 = vpack.c.bf16 %v500, %v500
        %v508 = vpack.c.bf16 %v503, %v503
        %v509 = vld [vmem:[%s4] sm:$0xf]
        %v510 = vld [vmem:[%s4 + $0x4] sm:$0x1]
        %v515 = vunpack.c.l.b16 %v491
        %v516 = vunpack.c.l.b16 %v492
        %v517 = vunpack.c.l.b16 %v493
        %v518 = vunpack.c.l.b16 %v494
        %v519 = vpack.c.b16 %v516, %v515
        %v520 = vpack.c.b16 %v518, %v517
        %v523 = vunpack.c.l.b16 %v509
        %v524 = vunpack.c.l.b16 %v510
        %v525 = vpack.c.b16 %v524, %v523
        %vm526 = vcmask 64512
        %v528 = vsel %vm526, %v519, 0
        %v531 = vsel %vm526, %v520, 0
        %v534 = vsel %vm526, %v525, 0
        %536 = vmatpush.bf16.xpose.msra.mxu0 0
        %537 = vmatpush.bf16.xpose.msra.mxu0 0
        %538 = vmatpush.bf16.xpose.msra.mxu0 0
        %539 = vmatpush.bf16.xpose.msra.mxu0 0
        %540 = vmatpush.bf16.xpose.msra.mxu0 0
        %541 = vmatpush.bf16.xpose.msra.mxu0 0
        %542 = vmatpush.bf16.xpose.msra.mxu0 0
        %543 = vmatpush.bf16.xpose.msra.mxu0 %v534
        %544 = vmatmul.bf16.gmra.mxu0 %v528
        %v545 = vpop.f32.mrf.mxu0
        %v546 = vadd.f32 0.0, %v545
        %v547 = vpop.f32.mrf.mxu0
        %v548 = vadd.f32 0.0, %v547
        %549 = vmatmul.bf16.gmra.mxu0 %v531
        %v550 = vpop.f32.mrf.mxu0
        %v551 = vadd.f32 0.0, %v550
        %v552 = vpop.f32.mrf.mxu0
        %v553 = vadd.f32 0.0, %v552
        %554 = vdwg.mxu0
        %v555 = vlaneseq
        %v556 = vshrl.u32 %v555, 7
        %v557 = vlaneseq
        %v558 = vand.u32 %v557, 127
        %v559 = vsub.s32 %v558, %v556
        %vm560 = vcmp.eq.s32.totalorder %v559, 3
        %v561 = vsel %vm560, 1, 0
        %vm562 = vcmp.eq.s32.totalorder %v561, 1
        %564 = vset.pattern.permute.xlu0 7
        %565 = vperm.xlu0 %564, %v546
        %v566 = vpop.permute.xlu0 %565
        %569 = vset.pattern.permute.xlu0 7
        %570 = vperm.xlu0 %569, %v548
        %v571 = vpop.permute.xlu0 %570
        %574 = vset.pattern.permute.xlu0 7
        %575 = vperm.xlu0 %574, %v551
        %v576 = vpop.permute.xlu0 %575
        %579 = vset.pattern.permute.xlu0 7
        %580 = vperm.xlu0 %579, %v553
        %v581 = vpop.permute.xlu0 %580
        %583 = vset.pattern.permute.xlu0 8
        %584 = vperm.xlu0 %583, %v546
        %v585 = vpop.permute.xlu0 %584
        %587 = vset.pattern.permute.xlu0 8
        %588 = vperm.xlu0 %587, %v548
        %v589 = vpop.permute.xlu0 %588
        %591 = vset.pattern.permute.xlu0 8
        %592 = vperm.xlu0 %591, %v551
        %v593 = vpop.permute.xlu0 %592
        %595 = vset.pattern.permute.xlu0 8
        %596 = vperm.xlu0 %595, %v553
        %v597 = vpop.permute.xlu0 %596
        %v599 = vsel %vm562, %v566, %v585
        %v600 = vsel %vm562, %v571, %v589
        %v601 = vsel %vm562, %v576, %v593
        %v602 = vsel %vm562, %v581, %v597
        %vm603 = vcmp.eq.s32.totalorder %v559, 2
        %v604 = vsel %vm603, 1, 0
        %vm605 = vcmp.eq.s32.totalorder %v604, 1
        %606 = vset.pattern.permute.xlu0 6
        %607 = vperm.xlu0 %606, %v546
        %v608 = vpop.permute.xlu0 %607
        %610 = vset.pattern.permute.xlu0 6
        %611 = vperm.xlu0 %610, %v548
        %v612 = vpop.permute.xlu0 %611
        %614 = vset.pattern.permute.xlu0 6
        %615 = vperm.xlu0 %614, %v551
        %v616 = vpop.permute.xlu0 %615
        %618 = vset.pattern.permute.xlu0 6
        %619 = vperm.xlu0 %618, %v553
        %v620 = vpop.permute.xlu0 %619
        %v622 = vsel %vm605, %v608, %v599
        %v623 = vsel %vm605, %v612, %v600
        %v624 = vsel %vm605, %v616, %v601
        %v625 = vsel %vm605, %v620, %v602
        %vm626 = vcmp.eq.s32.totalorder %v559, 1
        %v627 = vsel %vm626, 1, 0
        %vm628 = vcmp.eq.s32.totalorder %v627, 1
        %629 = vset.pattern.permute.xlu0 5
        %630 = vperm.xlu0 %629, %v546
        %v631 = vpop.permute.xlu0 %630
        %633 = vset.pattern.permute.xlu0 5
        %634 = vperm.xlu0 %633, %v548
        %v635 = vpop.permute.xlu0 %634
        %637 = vset.pattern.permute.xlu0 5
        %638 = vperm.xlu0 %637, %v551
        %v639 = vpop.permute.xlu0 %638
        %641 = vset.pattern.permute.xlu0 5
        %642 = vperm.xlu0 %641, %v553
        %v643 = vpop.permute.xlu0 %642
        %v645 = vsel %vm628, %v631, %v622
        %v646 = vsel %vm628, %v635, %v623
        %v647 = vsel %vm628, %v639, %v624
        %v648 = vsel %vm628, %v643, %v625
        %vm649 = vcmp.eq.s32.totalorder %v559, 0
        %v650 = vsel %vm649, 1, 0
        %vm651 = vcmp.eq.s32.totalorder %v650, 1
        %652 = vset.pattern.permute.xlu0 4
        %653 = vperm.xlu0 %652, %v546
        %v654 = vpop.permute.xlu0 %653
        %656 = vset.pattern.permute.xlu0 4
        %657 = vperm.xlu0 %656, %v548
        %v658 = vpop.permute.xlu0 %657
        %660 = vset.pattern.permute.xlu0 4
        %661 = vperm.xlu0 %660, %v551
        %v662 = vpop.permute.xlu0 %661
        %664 = vset.pattern.permute.xlu0 4
        %665 = vperm.xlu0 %664, %v553
        %v666 = vpop.permute.xlu0 %665
        %v668 = vsel %vm651, %v654, %v645
        %v669 = vsel %vm651, %v658, %v646
        %v670 = vsel %vm651, %v662, %v647
        %v671 = vsel %vm651, %v666, %v648
        %vm672 = vcmp.eq.s32.totalorder %v559, 4294967295
        %v673 = vsel %vm672, 1, 0
        %vm674 = vcmp.eq.s32.totalorder %v673, 1
        %675 = vset.pattern.permute.xlu0 3
        %676 = vperm.xlu0 %675, %v546
        %v677 = vpop.permute.xlu0 %676
        %679 = vset.pattern.permute.xlu0 3
        %680 = vperm.xlu0 %679, %v548
        %v681 = vpop.permute.xlu0 %680
        %683 = vset.pattern.permute.xlu0 3
        %684 = vperm.xlu0 %683, %v551
        %v685 = vpop.permute.xlu0 %684
        %687 = vset.pattern.permute.xlu0 3
        %688 = vperm.xlu0 %687, %v553
        %v689 = vpop.permute.xlu0 %688
        %v691 = vsel %vm674, %v677, %v668
        %v692 = vsel %vm674, %v681, %v669
        %v693 = vsel %vm674, %v685, %v670
        %v694 = vsel %vm674, %v689, %v671
        %vm695 = vcmp.eq.s32.totalorder %v559, 4294967294
        %v696 = vsel %vm695, 1, 0
        %vm697 = vcmp.eq.s32.totalorder %v696, 1
        %698 = vset.pattern.permute.xlu0 2
        %699 = vperm.xlu0 %698, %v546
        %v700 = vpop.permute.xlu0 %699
        %702 = vset.pattern.permute.xlu0 2
        %703 = vperm.xlu0 %702, %v548
        %v704 = vpop.permute.xlu0 %703
        %706 = vset.pattern.permute.xlu0 2
        %707 = vperm.xlu0 %706, %v551
        %v708 = vpop.permute.xlu0 %707
        %710 = vset.pattern.permute.xlu0 2
        %711 = vperm.xlu0 %710, %v553
        %v712 = vpop.permute.xlu0 %711
        %v714 = vsel %vm697, %v700, %v691
        %v715 = vsel %vm697, %v704, %v692
        %v716 = vsel %vm697, %v708, %v693
        %v717 = vsel %vm697, %v712, %v694
        %vm718 = vcmp.eq.s32.totalorder %v559, 4294967293
        %v719 = vsel %vm718, 1, 0
        %vm720 = vcmp.eq.s32.totalorder %v719, 1
        %721 = vset.pattern.permute.xlu0 1
        %722 = vperm.xlu0 %721, %v546
        %v723 = vpop.permute.xlu0 %722
        %725 = vset.pattern.permute.xlu0 1
        %726 = vperm.xlu0 %725, %v548
        %v727 = vpop.permute.xlu0 %726
        %729 = vset.pattern.permute.xlu0 1
        %730 = vperm.xlu0 %729, %v551
        %v731 = vpop.permute.xlu0 %730
        %733 = vset.pattern.permute.xlu0 1
        %734 = vperm.xlu0 %733, %v553
        %v735 = vpop.permute.xlu0 %734
        %v737 = vsel %vm720, %v723, %v714
        %v738 = vsel %vm720, %v727, %v715
        %v739 = vsel %vm720, %v731, %v716
        %v740 = vsel %vm720, %v735, %v717
        %vm741 = vcmp.le.s32.totalorder %v559, 4294967292
        %v742 = vsel %vm741, 1, 0
        %vm743 = vcmp.eq.s32.totalorder %v742, 1
        %744 = vset.pattern.permute.xlu0 0
        %745 = vperm.xlu0 %744, %v546
        %v746 = vpop.permute.xlu0 %745
        %748 = vset.pattern.permute.xlu0 0
        %749 = vperm.xlu0 %748, %v548
        %v750 = vpop.permute.xlu0 %749
        %752 = vset.pattern.permute.xlu0 0
        %753 = vperm.xlu0 %752, %v551
        %v754 = vpop.permute.xlu0 %753
        %756 = vset.pattern.permute.xlu0 0
        %757 = vperm.xlu0 %756, %v553
        %v758 = vpop.permute.xlu0 %757
        %v760 = vsel %vm743, %v746, %v737
        %v761 = vsel %vm743, %v750, %v738
        %v762 = vsel %vm743, %v754, %v739
        %v763 = vsel %vm743, %v758, %v740
        %v765 = vunpack.c.l.b16 %v505
        %v766 = vpack.c.b16 %v765, %v765
        %767 = vrot.lane.b32.xlu0 %v766, 96
        %v768 = vpop.permute.xlu0 %767
        %v770 = vsel %vm526, %v491, 0
        %v773 = vsel %vm526, %v768, 0
        %775 = vmatpush.bf16.xpose.msra.mxu0 0
        %776 = vmatpush.bf16.xpose.msra.mxu0 0
        %777 = vmatpush.bf16.xpose.msra.mxu0 0
        %778 = vmatpush.bf16.xpose.msra.mxu0 0
        %779 = vmatpush.bf16.xpose.msra.mxu0 0
        %780 = vmatpush.bf16.xpose.msra.mxu0 0
        %781 = vmatpush.bf16.xpose.msra.mxu0 0
        %782 = vmatpush.bf16.xpose.msra.mxu0 %v773
        %783 = vmatmul.bf16.gmra.mxu0 %v770
        %v784 = vpop.f32.mrf.mxu0
        %v785 = vadd.f32 %v760, %v784
        %v786 = vpop.f32.mrf.mxu0
        %787 = vdwg.mxu0
        %v789 = vunpack.c.l.b16 %v506
        %v790 = vpack.c.b16 %v789, %v789
        %791 = vrot.lane.b32.xlu0 %v790, 96
        %v792 = vpop.permute.xlu0 %791
        %v794 = vsel %vm526, %v492, 0
        %v797 = vsel %vm526, %v792, 0
        %799 = vmatpush.bf16.xpose.msra.mxu0 0
        %800 = vmatpush.bf16.xpose.msra.mxu0 0
        %801 = vmatpush.bf16.xpose.msra.mxu0 0
        %802 = vmatpush.bf16.xpose.msra.mxu0 0
        %803 = vmatpush.bf16.xpose.msra.mxu0 0
        %804 = vmatpush.bf16.xpose.msra.mxu0 0
        %805 = vmatpush.bf16.xpose.msra.mxu0 0
        %806 = vmatpush.bf16.xpose.msra.mxu0 %v797
        %807 = vmatmul.bf16.gmra.mxu0 %v794
        %v808 = vpop.f32.mrf.mxu0
        %v809 = vadd.f32 %v761, %v808
        %v810 = vpop.f32.mrf.mxu0
        %811 = vdwg.mxu0
        %v813 = vunpack.c.l.b16 %v507
        %v814 = vpack.c.b16 %v813, %v813
        %815 = vrot.lane.b32.xlu0 %v814, 96
        %v816 = vpop.permute.xlu0 %815
        %v818 = vsel %vm526, %v493, 0
        %v821 = vsel %vm526, %v816, 0
        %823 = vmatpush.bf16.xpose.msra.mxu0 0
        %824 = vmatpush.bf16.xpose.msra.mxu0 0
        %825 = vmatpush.bf16.xpose.msra.mxu0 0
        %826 = vmatpush.bf16.xpose.msra.mxu0 0
        %827 = vmatpush.bf16.xpose.msra.mxu0 0
        %828 = vmatpush.bf16.xpose.msra.mxu0 0
        %829 = vmatpush.bf16.xpose.msra.mxu0 0
        %830 = vmatpush.bf16.xpose.msra.mxu0 %v821
        %831 = vmatmul.bf16.gmra.mxu0 %v818
        %v832 = vpop.f32.mrf.mxu0
        %v833 = vadd.f32 %v762, %v832
        %v834 = vpop.f32.mrf.mxu0
        %835 = vdwg.mxu0
        %v837 = vunpack.c.l.b16 %v508
        %v838 = vpack.c.b16 %v837, %v837
        %839 = vrot.lane.b32.xlu0 %v838, 96
        %v840 = vpop.permute.xlu0 %839
        %v842 = vsel %vm526, %v494, 0
        %v845 = vsel %vm526, %v840, 0
        %847 = vmatpush.bf16.xpose.msra.mxu0 0
        %848 = vmatpush.bf16.xpose.msra.mxu0 0
        %849 = vmatpush.bf16.xpose.msra.mxu0 0
        %850 = vmatpush.bf16.xpose.msra.mxu0 0
        %851 = vmatpush.bf16.xpose.msra.mxu0 0
        %852 = vmatpush.bf16.xpose.msra.mxu0 0
        %853 = vmatpush.bf16.xpose.msra.mxu0 0
        %854 = vmatpush.bf16.xpose.msra.mxu0 %v845
        %855 = vmatmul.bf16.gmra.mxu0 %v842
        %v856 = vpop.f32.mrf.mxu0
        %v857 = vadd.f32 %v763, %v856
        %v858 = vpop.f32.mrf.mxu0
        %859 = vdwg.mxu0
        %s860 = sld [smem:[#allocation3 + %s36]]
        %v861 = vstv %s860
        %vm862 = vcmp.lt.s32.totalorder %v558, %v861
        %v863 = vsel %vm862, 1, 0
        %vm864 = vcmp.eq.s32.totalorder %v863, 1
        %v865 = vsel %vm864, %v785, -1000000.0
        %v866 = vsel %vm864, %v809, -1000000.0
        %v867 = vsel %vm864, %v833, -1000000.0
        %v868 = vsel %vm864, %v857, -1000000.0
        %v869 = vsel %vm526, %v865, -inf
        %870 = vmax.xlane.f32.xlu0 %v869
        %v871 = vpop.xlane.xlu0 %870
        %v872 = vsel %vm526, %v866, -inf
        %873 = vmax.xlane.f32.xlu0 %v872
        %v874 = vpop.xlane.xlu0 %873
        %v875 = vsel %vm526, %v867, -inf
        %876 = vmax.xlane.f32.xlu0 %v875
        %v877 = vpop.xlane.xlu0 %876
        %v878 = vsel %vm526, %v868, -inf
        %879 = vmax.xlane.f32.xlu0 %v878
        %v880 = vpop.xlane.xlu0 %879
        %v881 = vsub.f32 %v865, %v871
        %v882 = vsub.f32 %v866, %v874
        %v883 = vsub.f32 %v867, %v877
        %v884 = vsub.f32 %v868, %v880
        %v885 = vmul.f32 %v881, 1.442695
        %v886 = vpow.pop %v885
        %v887 = vmul.f32 %v882, 1.442695
        %v888 = vpow.pop %v887
        %v889 = vmul.f32 %v883, 1.442695
        %v890 = vpow.pop %v889
        %v891 = vmul.f32 %v884, 1.442695
        %v892 = vpow.pop %v891
        %v893 = vsel %vm526, %v886, 0.0
        %894 = vadd.xlane.f32.xlu0 %v893
        %v895 = vpop.xlane.xlu0 %894
        %v896 = vsel %vm526, %v888, 0.0
        %897 = vadd.xlane.f32.xlu0 %v896
        %v898 = vpop.xlane.xlu0 %897
        %v899 = vsel %vm526, %v890, 0.0
        %900 = vadd.xlane.f32.xlu0 %v899
        %v901 = vpop.xlane.xlu0 %900
        %v902 = vsel %vm526, %v892, 0.0
        %903 = vadd.xlane.f32.xlu0 %v902
        %v904 = vpop.xlane.xlu0 %903
        %v905 = vpack.c.bf16 %v886, %v886
        %v906 = vpack.c.bf16 %v888, %v888
        %v907 = vpack.c.bf16 %v890, %v890
        %v908 = vpack.c.bf16 %v892, %v892
        %v909 = vsel %vm743, %v886, 0.0
        %v910 = vsel %vm743, %v888, 0.0
        %v911 = vsel %vm743, %v890, 0.0
        %v912 = vsel %vm743, %v892, 0.0
        %v913 = vsel %vm526, %v909, 0.0
        %914 = vadd.xlane.f32.xlu0 %v913
        %v915 = vpop.xlane.xlu0 %914
        %v916 = vsel %vm526, %v910, 0.0
        %917 = vadd.xlane.f32.xlu0 %v916
        %v918 = vpop.xlane.xlu0 %917
        %v919 = vsel %vm526, %v911, 0.0
        %920 = vadd.xlane.f32.xlu0 %v919
        %v921 = vpop.xlane.xlu0 %920
        %v922 = vsel %vm526, %v912, 0.0
        %923 = vadd.xlane.f32.xlu0 %v922
        %v924 = vpop.xlane.xlu0 %923
        %v925 = vsel %vm720, %v886, 0.0
        %v926 = vsel %vm720, %v888, 0.0
        %v927 = vsel %vm720, %v890, 0.0
        %v928 = vsel %vm720, %v892, 0.0
        %v929 = vsel %vm526, %v925, 0.0
        %930 = vadd.xlane.f32.xlu0 %v929
        %v931 = vpop.xlane.xlu0 %930
        %v932 = vsel %vm526, %v926, 0.0
        %933 = vadd.xlane.f32.xlu0 %v932
        %v934 = vpop.xlane.xlu0 %933
        %v935 = vsel %vm526, %v927, 0.0
        %936 = vadd.xlane.f32.xlu0 %v935
        %v937 = vpop.xlane.xlu0 %936
        %v938 = vsel %vm526, %v928, 0.0
        %939 = vadd.xlane.f32.xlu0 %v938
        %v940 = vpop.xlane.xlu0 %939
        %v941 = vadd.f32 %v915, %v931
        %v942 = vadd.f32 %v918, %v934
        %v943 = vadd.f32 %v921, %v937
        %v944 = vadd.f32 %v924, %v940
        %v945 = vsel %vm697, %v886, 0.0
        %v946 = vsel %vm697, %v888, 0.0
        %v947 = vsel %vm697, %v890, 0.0
        %v948 = vsel %vm697, %v892, 0.0
        %v949 = vsel %vm526, %v945, 0.0
        %950 = vadd.xlane.f32.xlu0 %v949
        %v951 = vpop.xlane.xlu0 %950
        %v952 = vsel %vm526, %v946, 0.0
        %953 = vadd.xlane.f32.xlu0 %v952
        %v954 = vpop.xlane.xlu0 %953
        %v955 = vsel %vm526, %v947, 0.0
        %956 = vadd.xlane.f32.xlu0 %v955
        %v957 = vpop.xlane.xlu0 %956
        %v958 = vsel %vm526, %v948, 0.0
        %959 = vadd.xlane.f32.xlu0 %v958
        %v960 = vpop.xlane.xlu0 %959
        %v961 = vadd.f32 %v941, %v951
        %v962 = vadd.f32 %v942, %v954
        %v963 = vadd.f32 %v943, %v957
        %v964 = vadd.f32 %v944, %v960
        %v965 = vsel %vm674, %v886, 0.0
        %v966 = vsel %vm674, %v888, 0.0
        %v967 = vsel %vm674, %v890, 0.0
        %v968 = vsel %vm674, %v892, 0.0
        %v969 = vsel %vm526, %v965, 0.0
        %970 = vadd.xlane.f32.xlu0 %v969
        %v971 = vpop.xlane.xlu0 %970
        %v972 = vsel %vm526, %v966, 0.0
        %973 = vadd.xlane.f32.xlu0 %v972
        %v974 = vpop.xlane.xlu0 %973
        %v975 = vsel %vm526, %v967, 0.0
        %976 = vadd.xlane.f32.xlu0 %v975
        %v977 = vpop.xlane.xlu0 %976
        %v978 = vsel %vm526, %v968, 0.0
        %979 = vadd.xlane.f32.xlu0 %v978
        %v980 = vpop.xlane.xlu0 %979
        %v981 = vadd.f32 %v961, %v971
        %v982 = vadd.f32 %v962, %v974
        %v983 = vadd.f32 %v963, %v977
        %v984 = vadd.f32 %v964, %v980
        %v985 = vsel %vm628, %v886, 0.0
        %v986 = vsel %vm628, %v888, 0.0
        %v987 = vsel %vm628, %v890, 0.0
        %v988 = vsel %vm628, %v892, 0.0
        %v989 = vsel %vm526, %v985, 0.0
        %990 = vadd.xlane.f32.xlu0 %v989
        %v991 = vpop.xlane.xlu0 %990
        %v992 = vsel %vm526, %v986, 0.0
        %993 = vadd.xlane.f32.xlu0 %v992
        %v994 = vpop.xlane.xlu0 %993
        %v995 = vsel %vm526, %v987, 0.0
        %996 = vadd.xlane.f32.xlu0 %v995
        %v997 = vpop.xlane.xlu0 %996
        %v998 = vsel %vm526, %v988, 0.0
        %999 = vadd.xlane.f32.xlu0 %v998
        %v1000 = vpop.xlane.xlu0 %999
        %v1001 = vadd.f32 %v981, %v991
        %v1002 = vadd.f32 %v982, %v994
        %v1003 = vadd.f32 %v983, %v997
        %v1004 = vadd.f32 %v984, %v1000
        %v1005 = vsel %vm605, %v886, 0.0
        %v1006 = vsel %vm605, %v888, 0.0
        %v1007 = vsel %vm605, %v890, 0.0
        %v1008 = vsel %vm605, %v892, 0.0
        %v1009 = vsel %vm526, %v1005, 0.0
        %1010 = vadd.xlane.f32.xlu0 %v1009
        %v1011 = vpop.xlane.xlu0 %1010
        %v1012 = vsel %vm526, %v1006, 0.0
        %1013 = vadd.xlane.f32.xlu0 %v1012
        %v1014 = vpop.xlane.xlu0 %1013
        %v1015 = vsel %vm526, %v1007, 0.0
        %1016 = vadd.xlane.f32.xlu0 %v1015
        %v1017 = vpop.xlane.xlu0 %1016
        %v1018 = vsel %vm526, %v1008, 0.0
        %1019 = vadd.xlane.f32.xlu0 %v1018
        %v1020 = vpop.xlane.xlu0 %1019
        %v1021 = vadd.f32 %v1001, %v1011
        %v1022 = vadd.f32 %v1002, %v1014
        %v1023 = vadd.f32 %v1003, %v1017
        %v1024 = vadd.f32 %v1004, %v1020
        %v1025 = vsel %vm562, %v886, 0.0
        %v1026 = vsel %vm562, %v888, 0.0
        %v1027 = vsel %vm562, %v890, 0.0
        %v1028 = vsel %vm562, %v892, 0.0
        %v1029 = vsel %vm526, %v1025, 0.0
        %1030 = vadd.xlane.f32.xlu0 %v1029
        %v1031 = vpop.xlane.xlu0 %1030
        %v1032 = vsel %vm526, %v1026, 0.0
        %1033 = vadd.xlane.f32.xlu0 %v1032
        %v1034 = vpop.xlane.xlu0 %1033
        %v1035 = vsel %vm526, %v1027, 0.0
        %1036 = vadd.xlane.f32.xlu0 %v1035
        %v1037 = vpop.xlane.xlu0 %1036
        %v1038 = vsel %vm526, %v1028, 0.0
        %1039 = vadd.xlane.f32.xlu0 %v1038
        %v1040 = vpop.xlane.xlu0 %1039
        %v1041 = vadd.f32 %v1021, %v1031
        %v1042 = vadd.f32 %v1022, %v1034
        %v1043 = vadd.f32 %v1023, %v1037
        %v1044 = vadd.f32 %v1024, %v1040
        %vm1045 = vcmp.ge.s32.totalorder %v559, 4
        %v1046 = vsel %vm1045, 1, 0
        %vm1047 = vcmp.eq.s32.totalorder %v1046, 1
        %v1048 = vsel %vm1047, %v886, 0.0
        %v1049 = vsel %vm1047, %v888, 0.0
        %v1050 = vsel %vm1047, %v890, 0.0
        %v1051 = vsel %vm1047, %v892, 0.0
        %v1052 = vsel %vm526, %v1048, 0.0
        %1053 = vadd.xlane.f32.xlu0 %v1052
        %v1054 = vpop.xlane.xlu0 %1053
        %v1055 = vsel %vm526, %v1049, 0.0
        %1056 = vadd.xlane.f32.xlu0 %v1055
        %v1057 = vpop.xlane.xlu0 %1056
        %v1058 = vsel %vm526, %v1050, 0.0
        %1059 = vadd.xlane.f32.xlu0 %v1058
        %v1060 = vpop.xlane.xlu0 %1059
        %v1061 = vsel %vm526, %v1051, 0.0
        %1062 = vadd.xlane.f32.xlu0 %v1061
        %v1063 = vpop.xlane.xlu0 %1062
        %v1064 = vadd.f32 %v1041, %v1054
        %v1065 = vadd.f32 %v1042, %v1057
        %v1066 = vadd.f32 %v1043, %v1060
        %v1067 = vadd.f32 %v1044, %v1063
        %v1068 = vsub.f32 %v895, %v1064
        %v1069 = vsub.f32 %v898, %v1065
        %v1070 = vsub.f32 %v901, %v1066
        %v1071 = vsub.f32 %v904, %v1067
        %vm1072 = vcmask 7168
        %v1073 = vsel %vm1072, %v915, %v931
        %v1074 = vsel %vm1072, %v918, %v934
        %v1075 = vsel %vm1072, %v921, %v937
        %v1076 = vsel %vm1072, %v924, %v940
        %vm1077 = vcmask 15360
        %v1078 = vsel %vm1077, %v1073, %v951
        %v1079 = vsel %vm1077, %v1074, %v954
        %v1080 = vsel %vm1077, %v1075, %v957
        %v1081 = vsel %vm1077, %v1076, %v960
        %vm1082 = vcmask 23552
        %v1083 = vsel %vm1082, %v1078, %v971
        %v1084 = vsel %vm1082, %v1079, %v974
        %v1085 = vsel %vm1082, %v1080, %v977
        %v1086 = vsel %vm1082, %v1081, %v980
        %vm1087 = vcmask 31744
        %v1088 = vsel %vm1087, %v1083, %v1068
        %v1089 = vsel %vm1087, %v1084, %v1069
        %v1090 = vsel %vm1087, %v1085, %v1070
        %v1091 = vsel %vm1087, %v1086, %v1071
        %vm1092 = vcmask 39936
        %v1093 = vsel %vm1092, %v1088, %v991
        %v1094 = vsel %vm1092, %v1089, %v994
        %v1095 = vsel %vm1092, %v1090, %v997
        %v1096 = vsel %vm1092, %v1091, %v1000
        %vm1097 = vcmask 48128
        %v1098 = vsel %vm1097, %v1093, %v1011
        %v1099 = vsel %vm1097, %v1094, %v1014
        %v1100 = vsel %vm1097, %v1095, %v1017
        %v1101 = vsel %vm1097, %v1096, %v1020
        %vm1102 = vcmask 56320
        %v1103 = vsel %vm1102, %v1098, %v1031
        %v1104 = vsel %vm1102, %v1099, %v1034
        %v1105 = vsel %vm1102, %v1100, %v1037
        %v1106 = vsel %vm1102, %v1101, %v1040
        %v1107 = vsel %vm526, %v1103, %v1054
        %v1108 = vsel %vm526, %v1104, %v1057
        %v1109 = vsel %vm526, %v1105, %v1060
        %v1110 = vsel %vm526, %v1106, %v1063
        %v1111 = vpack.c.bf16 %v1107, %v1107
        %v1112 = vpack.c.bf16 %v1108, %v1108
        %v1113 = vpack.c.bf16 %v1109, %v1109
        %v1114 = vpack.c.bf16 %v1110, %v1110
        %v1115 = vld [vmem:[%s5] sm:$0xf]
        %v1116 = vld [vmem:[%s5 + $0x4] sm:$0x1]
        %v1121 = vunpack.c.l.b16 %v1111
        %v1122 = vunpack.c.l.b16 %v1112
        %v1123 = vunpack.c.l.b16 %v1113
        %v1124 = vunpack.c.l.b16 %v1114
        %v1125 = vpack.c.b16 %v1122, %v1121
        %v1126 = vpack.c.b16 %v1124, %v1123
        %v1129 = vunpack.c.l.b16 %v1115
        %v1130 = vunpack.c.l.b16 %v1116
        %v1131 = vpack.c.b16 %v1130, %v1129
        %vm1132 = vcmask 72704
        %v1134 = vsel %vm1132, %v1125, 0
        %v1137 = vsel %vm1132, %v1126, 0
        %vm1139 = vcmask 1043456
        %vm1140 = vcmask 1044480
        %v1141 = vsel %vm1139, 4294967295, 65535
        %v1142 = vsel %vm1140, %v1141, 0
        %v1144 = vand.u32 %v1131, %v1142
        %1146 = vmatpush.bf16.msra.mxu0 0
        %1147 = vmatpush.bf16.msra.mxu0 0
        %1148 = vmatpush.bf16.msra.mxu0 0
        %1149 = vmatpush.bf16.msra.mxu0 0
        %1150 = vmatpush.bf16.msra.mxu0 0
        %1151 = vmatpush.bf16.msra.mxu0 0
        %1152 = vmatpush.bf16.msra.mxu0 0
        %1153 = vmatpush.bf16.msra.mxu0 %v1144
        %1154 = vmatmul.bf16.gmra.mxu0 %v1134
        %v1155 = vpop.f32.mrf.mxu0
        %v1156 = vadd.f32 0.0, %v1155
        %v1157 = vpop.f32.mrf.mxu0
        %v1158 = vadd.f32 0.0, %v1157
        %1159 = vmatmul.bf16.gmra.mxu0 %v1137
        %v1160 = vpop.f32.mrf.mxu0
        %v1161 = vadd.f32 0.0, %v1160
        %v1162 = vpop.f32.mrf.mxu0
        %v1163 = vadd.f32 0.0, %v1162
        %1164 = vdwg.mxu0
        %1165 = vrot.lane.b32.xlu0 %v766, 64
        %v1166 = vpop.permute.xlu0 %1165
        %v1168 = vsel %vm526, %v905, 0
        %v1171 = vsel %vm1139, %v1166, 0
        %1173 = vmatpush.bf16.msra.mxu0 0
        %1174 = vmatpush.bf16.msra.mxu0 0
        %1175 = vmatpush.bf16.msra.mxu0 0
        %1176 = vmatpush.bf16.msra.mxu0 0
        %1177 = vmatpush.bf16.msra.mxu0 0
        %1178 = vmatpush.bf16.msra.mxu0 0
        %1179 = vmatpush.bf16.msra.mxu0 0
        %1180 = vmatpush.bf16.msra.mxu0 %v1171
        %1181 = vmatmul.bf16.gmra.mxu0 %v1168
        %v1182 = vpop.f32.mrf.mxu0
        %v1183 = vadd.f32 %v1156, %v1182
        %v1184 = vpop.f32.mrf.mxu0
        %1185 = vdwg.mxu0
        %1186 = vrot.lane.b32.xlu0 %v790, 64
        %v1187 = vpop.permute.xlu0 %1186
        %v1189 = vsel %vm526, %v906, 0
        %v1192 = vsel %vm1139, %v1187, 0
        %1194 = vmatpush.bf16.msra.mxu0 0
        %1195 = vmatpush.bf16.msra.mxu0 0
        %1196 = vmatpush.bf16.msra.mxu0 0
        %1197 = vmatpush.bf16.msra.mxu0 0
        %1198 = vmatpush.bf16.msra.mxu0 0
        %1199 = vmatpush.bf16.msra.mxu0 0
        %1200 = vmatpush.bf16.msra.mxu0 0
        %1201 = vmatpush.bf16.msra.mxu0 %v1192
        %1202 = vmatmul.bf16.gmra.mxu0 %v1189
        %v1203 = vpop.f32.mrf.mxu0
        %v1204 = vadd.f32 %v1158, %v1203
        %v1205 = vpop.f32.mrf.mxu0
        %1206 = vdwg.mxu0
        %1207 = vrot.lane.b32.xlu0 %v814, 64
        %v1208 = vpop.permute.xlu0 %1207
        %v1210 = vsel %vm526, %v907, 0
        %v1213 = vsel %vm1139, %v1208, 0
        %1215 = vmatpush.bf16.msra.mxu0 0
        %1216 = vmatpush.bf16.msra.mxu0 0
        %1217 = vmatpush.bf16.msra.mxu0 0
        %1218 = vmatpush.bf16.msra.mxu0 0
        %1219 = vmatpush.bf16.msra.mxu0 0
        %1220 = vmatpush.bf16.msra.mxu0 0
        %1221 = vmatpush.bf16.msra.mxu0 0
        %1222 = vmatpush.bf16.msra.mxu0 %v1213
        %1223 = vmatmul.bf16.gmra.mxu0 %v1210
        %v1224 = vpop.f32.mrf.mxu0
        %v1225 = vadd.f32 %v1161, %v1224
        %v1226 = vpop.f32.mrf.mxu0
        %1227 = vdwg.mxu0
        %1228 = vrot.lane.b32.xlu0 %v838, 64
        %v1229 = vpop.permute.xlu0 %1228
        %v1231 = vsel %vm526, %v908, 0
        %v1234 = vsel %vm1139, %v1229, 0
        %1236 = vmatpush.bf16.msra.mxu0 0
        %1237 = vmatpush.bf16.msra.mxu0 0
        %1238 = vmatpush.bf16.msra.mxu0 0
        %1239 = vmatpush.bf16.msra.mxu0 0
        %1240 = vmatpush.bf16.msra.mxu0 0
        %1241 = vmatpush.bf16.msra.mxu0 0
        %1242 = vmatpush.bf16.msra.mxu0 0
        %1243 = vmatpush.bf16.msra.mxu0 %v1234
        %1244 = vmatmul.bf16.gmra.mxu0 %v1231
        %v1245 = vpop.f32.mrf.mxu0
        %v1246 = vadd.f32 %v1163, %v1245
        %v1247 = vpop.f32.mrf.mxu0
        %1248 = vdwg.mxu0
        %v1249 = vrcp.pop %v895
        %v1250 = vmul.f32 %v895, %v1249
        %v1251 = vsub.f32 1.0, %v1250
        %v1252 = vmul.f32 %v1249, %v1251
        %v1253 = vadd.f32 %v1249, %v1252
        %vm1254 = vweird.f32 %v895
        %vm1255 = vweird.f32 %v1249
        %vm1256 = vmor %vm1254, %vm1255
        %v1257 = vsel %vm1256, %v1249, %v1253
        %v1258 = vand.u32 2147483647, %v895
        %vm1259 = vcmp.eq.f32.partialorder %v1258, 8.507059e+37
        %v1260 = vand.u32 %v895, 2147483648
        %v1261 = vor.u32 1.1754944e-38, %v1260
        %v1262 = vsel %vm1259, %v1261, %v1257
        %v1263 = vmul.f32 1.0, %v1262
        %v1264 = vrcp.pop %v898
        %v1265 = vmul.f32 %v898, %v1264
        %v1266 = vsub.f32 1.0, %v1265
        %v1267 = vmul.f32 %v1264, %v1266
        %v1268 = vadd.f32 %v1264, %v1267
        %vm1269 = vweird.f32 %v898
        %vm1270 = vweird.f32 %v1264
        %vm1271 = vmor %vm1269, %vm1270
        %v1272 = vsel %vm1271, %v1264, %v1268
        %v1273 = vand.u32 2147483647, %v898
        %vm1274 = vcmp.eq.f32.partialorder %v1273, 8.507059e+37
        %v1275 = vand.u32 %v898, 2147483648
        %v1276 = vor.u32 1.1754944e-38, %v1275
        %v1277 = vsel %vm1274, %v1276, %v1272
        %v1278 = vmul.f32 1.0, %v1277
        %v1279 = vrcp.pop %v901
        %v1280 = vmul.f32 %v901, %v1279
        %v1281 = vsub.f32 1.0, %v1280
        %v1282 = vmul.f32 %v1279, %v1281
        %v1283 = vadd.f32 %v1279, %v1282
        %vm1284 = vweird.f32 %v901
        %vm1285 = vweird.f32 %v1279
        %vm1286 = vmor %vm1284, %vm1285
        %v1287 = vsel %vm1286, %v1279, %v1283
        %v1288 = vand.u32 2147483647, %v901
        %vm1289 = vcmp.eq.f32.partialorder %v1288, 8.507059e+37
        %v1290 = vand.u32 %v901, 2147483648
        %v1291 = vor.u32 1.1754944e-38, %v1290
        %v1292 = vsel %vm1289, %v1291, %v1287
        %v1293 = vmul.f32 1.0, %v1292
        %v1294 = vrcp.pop %v904
        %v1295 = vmul.f32 %v904, %v1294
        %v1296 = vsub.f32 1.0, %v1295
        %v1297 = vmul.f32 %v1294, %v1296
        %v1298 = vadd.f32 %v1294, %v1297
        %vm1299 = vweird.f32 %v904
        %vm1300 = vweird.f32 %v1294
        %vm1301 = vmor %vm1299, %vm1300
        %v1302 = vsel %vm1301, %v1294, %v1298
        %v1303 = vand.u32 2147483647, %v904
        %vm1304 = vcmp.eq.f32.partialorder %v1303, 8.507059e+37
        %v1305 = vand.u32 %v904, 2147483648
        %v1306 = vor.u32 1.1754944e-38, %v1305
        %v1307 = vsel %vm1304, %v1306, %v1302
        %v1308 = vmul.f32 1.0, %v1307
        %v1309 = vmul.f32 %v1183, %v1263
        %v1310 = vmul.f32 %v1204, %v1278
        %v1311 = vmul.f32 %v1225, %v1293
        %v1312 = vmul.f32 %v1246, %v1308
        %1314 = vrot.lane.b32.xlu0 %v1310, 8
        %v1315 = vpop.permute.xlu0 %1314
        %1318 = vrot.lane.b32.xlu0 %v1311, 16
        %v1319 = vpop.permute.xlu0 %1318
        %1322 = vrot.lane.b32.xlu0 %v1312, 24
        %v1323 = vpop.permute.xlu0 %1322
        %v1325 = vsel %vm526, %v1309, %v1315
        %vm1326 = vcmask 130048
        %v1327 = vsel %vm1326, %v1325, %v1319
        %vm1328 = vcmask 195584
        %v1329 = vsel %vm1328, %v1327, %v1323
        %v1330 = vpack.c.bf16 %v1329, %v1329
        %v1331 = vld [vmem:[%s3] sm:$0xf]
        %v1332 = vld [vmem:[%s3 + $0x4] sm:$0xf]
        %v1333 = vld [vmem:[%s3 + $0x8] sm:$0xf]
        %v1334 = vld [vmem:[%s3 + $0xc] sm:$0xf]
        %v1339 = vunpack.c.l.b16 %v1331
        %v1340 = vunpack.c.l.b16 %v1332
        %v1341 = vunpack.c.l.b16 %v1333
        %v1342 = vunpack.c.l.b16 %v1334
        %v1343 = vpack.c.b16 %v1340, %v1339
        %v1344 = vpack.c.b16 %v1342, %v1341
        %v1348 = vsel %vm463, %v1330, 0
        %1350 = vmatpush.bf16.msra.mxu0 0
        %1351 = vmatpush.bf16.msra.mxu0 0
        %1352 = vmatpush.bf16.msra.mxu0 0
        %1353 = vmatpush.bf16.msra.mxu0 0
        %1354 = vmatpush.bf16.msra.mxu0 0
        %1355 = vmatpush.bf16.msra.mxu0 0
        %1356 = vmatpush.bf16.msra.mxu0 %v1344
        %1357 = vmatpush.bf16.msra.mxu0 %v1343
        %1358 = vmatmul.bf16.gmra.mxu0 %v1348
        %v1359 = vpop.f32.mrf.mxu0
        %v1360 = vadd.f32 0.0, %v1359
        %v1361 = vpop.f32.mrf.mxu0
        %1362 = vdwg.mxu0
        %v1363 = vunpack.c.l.bf16 %v446
        %v1364 = vadd.f32 %v1363, %v1360
        %v1365 = vld [vmem:[%s6] sm:$0x1]
        %v1366 = vld [vmem:[%s7] sm:$0x1]
        %v1367 = vsel %vm463, %v1364, 0.0
        %1368 = vadd.xlane.f32.xlu0 %v1367
        %v1369 = vpop.xlane.xlu0 %1368
        %v1370 = vrcp.pop 32.0
        %v1371 = vmul.f32 32.0, %v1370
        %v1372 = vsub.f32 1.0, %v1371
        %v1373 = vmul.f32 %v1370, %v1372
        %v1374 = vadd.f32 %v1370, %v1373
        %vm1375 = vweird.f32 %v1370
        %v1376 = vsel %vm1375, %v1370, %v1374
        %v1377 = vmul.f32 %v1369, %v1376
        %v1378 = vsub.f32 %v1364, %v1377
        %v1379 = vmul.f32 %v1378, %v1378
        %v1380 = vsel %vm463, %v1379, 0.0
        %1381 = vadd.xlane.f32.xlu0 %v1380
        %v1382 = vpop.xlane.xlu0 %1381
        %v1383 = vmul.f32 %v1382, %v1376
        %v1384 = vadd.f32 %v1383, 1e-05
        %v1385 = vrsqrt.pop %v1384
        %v1386 = vmul.f32 %v1385, %v1384
        %v1387 = vmul.f32 %v1386, %v1385
        %v1388 = vmul.f32 0.5, %v1387
        %v1389 = vsub.f32 1.5, %v1388
        %v1390 = vmul.f32 %v1385, %v1389
        %vm1391 = vweird.f32 %v1384
        %vm1392 = vweird.f32 %v1385
        %vm1393 = vmor %vm1391, %vm1392
        %v1394 = vsel %vm1393, %v1385, %v1390
        %v1395 = vmul.f32 %v1378, %v1394
        %v1397 = vperm.slane %v1365, 0
        %v1399 = vmul.f32 %v1395, %v1397
        %v1401 = vperm.slane %v1366, 0
        %v1403 = vadd.f32 %v1399, %v1401
        %v1404 = vpack.c.bf16 %v1403, %v1403
        %v1405 = vld [vmem:[%s8] sm:$0xf]
        %v1406 = vld [vmem:[%s8 + $0x4] sm:$0xf]
        %v1407 = vld [vmem:[%s8 + $0x8] sm:$0xf]
        %v1408 = vld [vmem:[%s8 + $0xc] sm:$0xf]
        %v1409 = vld [vmem:[%s9] sm:$0x1]
        %v1411 = vperm.slane %v1409, 0
        %v1417 = vunpack.c.l.b16 %v1405
        %v1418 = vunpack.c.l.b16 %v1406
        %v1419 = vunpack.c.l.b16 %v1407
        %v1420 = vunpack.c.l.b16 %v1408
        %v1421 = vpack.c.b16 %v1418, %v1417
        %v1422 = vpack.c.b16 %v1420, %v1419
        %v1426 = vsel %vm463, %v1404, 0
        %1428 = vmatpush.bf16.msra.mxu0 0
        %1429 = vmatpush.bf16.msra.mxu0 0
        %1430 = vmatpush.bf16.msra.mxu0 0
        %1431 = vmatpush.bf16.msra.mxu0 0
        %1432 = vmatpush.bf16.msra.mxu0 0
        %1433 = vmatpush.bf16.msra.mxu0 0
        %1434 = vmatpush.bf16.msra.mxu0 %v1422
        %1435 = vmatpush.bf16.msra.mxu0 %v1421
        %1436 = vmatmul.bf16.gmra.mxu0 %v1426
        %v1437 = vpop.f32.mrf.mxu0
        %v1438 = vadd.f32 %v1411, %v1437
        %v1439 = vpop.f32.mrf.mxu0
        %1440 = vdwg.mxu0
        %v1441 = vmax.f32 %v1438, 0.0
        %v1442 = vpack.c.bf16 %v1441, %v1441
        %v1443 = vld [vmem:[%s10] sm:$0xf]
        %v1444 = vld [vmem:[%s10 + $0x4] sm:$0xf]
        %v1445 = vld [vmem:[%s10 + $0x8] sm:$0xf]
        %v1446 = vld [vmem:[%s10 + $0xc] sm:$0xf]
        %v1447 = vld [vmem:[%s10 + $0x10] sm:$0xf]
        %v1448 = vld [vmem:[%s10 + $0x14] sm:$0xf]
        %v1449 = vld [vmem:[%s10 + $0x18] sm:$0xf]
        %v1450 = vld [vmem:[%s10 + $0x1c] sm:$0xf]
        %v1451 = vld [vmem:[%s11] sm:$0x1]
        %v1453 = vperm.slane %v1451, 0
        %v1463 = vunpack.c.l.b16 %v1443
        %v1464 = vunpack.c.l.b16 %v1444
        %v1465 = vunpack.c.l.b16 %v1445
        %v1466 = vunpack.c.l.b16 %v1446
        %v1467 = vunpack.c.l.b16 %v1447
        %v1468 = vunpack.c.l.b16 %v1448
        %v1469 = vunpack.c.l.b16 %v1449
        %v1470 = vunpack.c.l.b16 %v1450
        %v1471 = vpack.c.b16 %v1464, %v1463
        %v1472 = vpack.c.b16 %v1466, %v1465
        %v1473 = vpack.c.b16 %v1468, %v1467
        %v1474 = vpack.c.b16 %v1470, %v1469
        %vm1479 = vcmask 523264
        %v1481 = vsel %vm1479, %v1442, 0
        %1483 = vmatpush.bf16.msra.mxu0 0
        %1484 = vmatpush.bf16.msra.mxu0 0
        %1485 = vmatpush.bf16.msra.mxu0 0
        %1486 = vmatpush.bf16.msra.mxu0 0
        %1487 = vmatpush.bf16.msra.mxu0 %v1474
        %1488 = vmatpush.bf16.msra.mxu0 %v1473
        %1489 = vmatpush.bf16.msra.mxu0 %v1472
        %1490 = vmatpush.bf16.msra.mxu0 %v1471
        %1491 = vmatmul.bf16.gmra.mxu0 %v1481
        %v1492 = vpop.f32.mrf.mxu0
        %v1493 = vadd.f32 %v1453, %v1492
        %v1494 = vpop.f32.mrf.mxu0
        %1495 = vdwg.mxu0
        %v1496 = vadd.f32 %v1403, %v1493
        %v1497 = vld [vmem:[%s12] sm:$0x1]
        %v1498 = vld [vmem:[%s13] sm:$0x1]
        %v1499 = vsel %vm463, %v1496, 0.0
        %1500 = vadd.xlane.f32.xlu0 %v1499
        %v1501 = vpop.xlane.xlu0 %1500
        %v1502 = vmul.f32 %v1501, %v1376
        %v1503 = vsub.f32 %v1496, %v1502
        %v1504 = vmul.f32 %v1503, %v1503
        %v1505 = vsel %vm463, %v1504, 0.0
        %1506 = vadd.xlane.f32.xlu0 %v1505
        %v1507 = vpop.xlane.xlu0 %1506
        %v1508 = vmul.f32 %v1507, %v1376
        %v1509 = vadd.f32 %v1508, 1e-05
        %v1510 = vrsqrt.pop %v1509
        %v1511 = vmul.f32 %v1510, %v1509
        %v1512 = vmul.f32 %v1511, %v1510
        %v1513 = vmul.f32 0.5, %v1512
        %v1514 = vsub.f32 1.5, %v1513
        %v1515 = vmul.f32 %v1510, %v1514
        %vm1516 = vweird.f32 %v1509
        %vm1517 = vweird.f32 %v1510
        %vm1518 = vmor %vm1516, %vm1517
        %v1519 = vsel %vm1518, %v1510, %v1515
        %v1520 = vmul.f32 %v1503, %v1519
        %v1522 = vperm.slane %v1497, 0
        %v1524 = vmul.f32 %v1520, %v1522
        %v1526 = vperm.slane %v1498, 0
        %v1528 = vadd.f32 %v1524, %v1526
        %v1529 = vpack.c.bf16 %v1528, %v1528
        %vm1530 = vcmask 257024
        %1531 = vst.msk [vmem:[%s440] sm:$0xf] %vm1530, %v1529
        %s1532 = sand.u32 %s322, 1
        %s1533 = scalar_lea.sflag [#allocation5], %s1532
        %s1534 = sand.u32 %s322, 1
        %s1535 = smul.addr %s1534, 4
        %s1536 = scalar_lea.vmem [#allocation4], %s1535
        // Predicated region
        $region73: #{tpu_custom_call.1} parent=71 // pred_check
          %p1537 = pneg %p332
        $region74: #{tpu_custom_call.1} parent=71 // pred_check_branch
          %1539 = sbr.rel (%p1537) target = $region76
        $region75: #{tpu_custom_call.1} parent=71 // pred_region
          %1541 = vsyncadd %s1533, 0
          %s1542 = smul.addr %s36, 4
          %s1543 = scalar_lea.hbm %s14, %s1542
          %s1545 = sshll.u32 %s1536, 4
          %s1546 = int_to_ptr.vmem [resolvable:$true] %s1545
          %s1547 = sshll.u32 %s1543, 4
          %s1548 = int_to_ptr.hbm [resolvable:$true] %s1547
          %1550 = dma.vmem_to_hbm [thread:$0]  %s1546, 64, %s1548, %s1533
        $region76: #{tpu_custom_call.1} parent=71 // pred_fallthru
          _
      $region72: #{tpu_custom_call.1} parent=5 // pred_fallthru
        _
      %p1551 = scmp.le.s32.totalorder 2, %s31
      // Predicated region
      $region77: #{tpu_custom_call.1} parent=5 // pred_check
        %p1552 = pneg %p1551
      $region78: #{tpu_custom_call.1} parent=5 // pred_check_branch
        %1554 = sbr.rel (%p1552) target = $region80
      $region79: #{tpu_custom_call.1} parent=5 // pred_region
        %s1555 = ssub.s32 %s31, 2
        // Predicated region
        $region81: #{tpu_custom_call.1} parent=79 // pred_check
          %p1556 = pneg %p338
        $region82: #{tpu_custom_call.1} parent=79 // pred_check_branch
          %1558 = sbr.rel (%p1556) target = $region84
        $region83: #{tpu_custom_call.1} parent=79 // pred_region
          %s1559 = sand.u32 %s323, 1
          %s1560 = scalar_lea.sflag [#allocation5], %s1559
          %s1561 = sand.u32 %s323, 1
          %s1562 = smul.addr %s1561, 4
          %s1563 = scalar_lea.vmem [#allocation4], %s1562
          %1565 = dma.done %s1560, 64
        $region84: #{tpu_custom_call.1} parent=79 // pred_fallthru
          _
      $region80: #{tpu_custom_call.1} parent=5 // pred_fallthru
        _
    $region6: #{tpu_custom_call.1} parent=1 // loop_footer
      %s35 = sadd.s32 1, %s31
    $region7: #{tpu_custom_call.1} parent=1 // loop_footer_branch
      %30 = sbr.rel target = $region3
    $region8: #{tpu_custom_call.1} parent=1 // loop_exit
      _
    %1566 = vsyncpa [#allocation5], 1
    %s1567 = scalar_lea.sflag [#allocation5], 1
    %1568 = vsyncpa %s1567, 1

</llo_original>
